<compile_context>
chip_gen: v6e
topology: v6e:2x2x1
jax: 0.10.0
libtpu: 0.0.40
codegen_flags: <defaults>
</compile_context>

<pallas_src>
from functools import partial

import jax
import jax.numpy as jnp
import numpy as np
from jax.experimental import pallas as pl
from jax.experimental.pallas import tpu as pltpu


def _layer_norm(v, eps=1e-5):
    # nn.LayerNorm with default (untrained) gamma=1, beta=0, over the last axis.
    mu = jnp.mean(v, axis=-1, keepdims=True)
    var = jnp.mean((v - mu) ** 2, axis=-1, keepdims=True)
    return (v - mu) * jax.lax.rsqrt(var + eps)


def lstm_kernel(num_layers, pred_len, seq_len, tb_size, hidden_size,
                pre_ref, *refs):
    """One grid step == (one batch block) x (one block of tb_size timesteps).

    pre_ref : (Tb, Bb, 4, H)  hoisted layer-0 ih projection + layer-0 biases
    refs    : whh0 (Bb,H,4H), [w_l (Bb,H,4H), b_l (Bb,4,H)] for l=1..L-1,
              fc_w (Bb,H,Opad), fc_b (Bb,1,Opad),
              out_ref (Bb,pred_len,Opad),
              h_sc (Bb,H), c_sc (Bb,H), hist_sc (pred_len,Bb,H)
    Weights are (B, H_in, 4H): contraction on H_in, gate axis lane-dense, so
    every gate projection is a batched MXU matmul with f32 accumulation.
    """
    H = hidden_size
    n_w = 1 + 2 * (num_layers - 1)
    w_refs = refs[:n_w]
    fcw_ref, fcb_ref, out_ref, h_sc, c_sc, hist_sc = refs[n_w:]

    tb = pl.program_id(1)          # time-block index (sequential carry axis)
    bb = h_sc.shape[0]             # batch-block size

    @pl.when(tb == 0)
    def _init():
        h_sc[...] = jnp.zeros_like(h_sc)
        c_sc[...] = jnp.zeros_like(c_sc)

    # Hoisted, loop-invariant weight/bias loads: one VMEM sweep per grid step,
    # NOT one per unrolled timestep.
    whh0 = w_refs[0][...]
    layer_wb = [(w_refs[2 * l - 1][...], w_refs[2 * l][...])
                for l in range(1, num_layers)]

    def gate_matmul(h, w):
        # (Bb, 1, H) x (Bb, H, 4H) -> (Bb, 1, 4H) on the MXU, f32 accumulation.
        g = jax.lax.dot_general(
            h[:, None, :].astype(w.dtype), w,
            dimension_numbers=(((2,), (1,)), ((0,), (0,))),
            preferred_element_type=jnp.float32)
        return g.reshape(bb, 4, H)

    def step(t, carry):
        h, c = carry
        for l in range(num_layers):
            if l == 0:
                # ih projection (+ both biases) was hoisted into the wrapper.
                g = gate_matmul(h, whh0) + pre_ref[t]
            else:
                # Module shares hidden[0] across layers => cell input == hx, so
                # W_ih·x + W_hh·h == (W_ih + W_hh)·h (weights pre-summed).
                w, b = layer_wb[l - 1]
                g = gate_matmul(h, w) + b
            gn = _layer_norm(g)                       # fused per-gate LN over H
            ig = jax.nn.sigmoid(gn[:, 0, :])
            fg = jax.nn.sigmoid(gn[:, 1, :])
            gg = jnp.tanh(gn[:, 2, :])
            og = jax.nn.sigmoid(gn[:, 3, :])
            c = fg * c + ig * gg
            h = og * jnp.tanh(_layer_norm(c))

        # Record hidden state only for the last pred_len timesteps.
        t_global = tb * tb_size + t
        p = t_global - (seq_len - pred_len)

        @pl.when(p >= 0)
        def _store():
            hist_sc[p] = h

        return (h, c)

    h_fin, c_fin = jax.lax.fori_loop(0, tb_size, step, (h_sc[...], c_sc[...]),
                                     unroll=True)
    # One scratch writeback per grid step (not per timestep).
    h_sc[...] = h_fin
    c_sc[...] = c_fin

    # fc head: once, at sequence end, batched on the MXU.  Output is lane-padded
    # to a multiple of 128 -> unmasked, lane-dense final store.
    @pl.when(tb == pl.num_programs(1) - 1)
    def _finalize():
        out = jax.lax.dot_general(
            hist_sc[...],                    # (pred_len, Bb, H)
            fcw_ref[...],                    # (Bb, H, Opad)
            dimension_numbers=(((2,), (1,)), ((1,), (0,))),
            preferred_element_type=jnp.float32,
        )                                    # (Bb, pred_len, Opad)
        out_ref[...] = (out + fcb_ref[...]).astype(out_ref.dtype)


def lstm_with_generated_weights(x, weights, *, hidden_size, num_layers, pred_len,
                                time_block=None, batch_block=None,
                                weight_dtype=jnp.float32,
                                vmem_limit_bytes=None):
    B, T, I = x.shape
    H = hidden_size
    O = weights["fc_weight"].shape[-1]
    f32 = jnp.float32

    Tb = T if time_block is None else min(time_block, T)
    Bb = B if batch_block is None else min(batch_block, B)
    assert T % Tb == 0, "time_block must divide seq_len"
    assert B % Bb == 0, "batch_block must divide batch"
    assert 1 <= pred_len <= T
    n_tb, n_b = T // Tb, B // Bb

    LANE = 128
    Opad = ((O + LANE - 1) // LANE) * LANE   # lane-dense fc output

    # --- Hoisted layer-0 input projection (+ layer-0 biases): one batched XLA
    # matmul at DEFAULT precision, emitted directly as (T, B, 4, H).
    w0 = weights["weight_ih_l0"].astype(f32).reshape(B, 4 * H, I)
    b0 = (weights["bias_ih_l0"] + weights["bias_hh_l0"]).astype(f32).reshape(B, 4 * H)
    pre0 = jnp.einsum("bti,bgi->tbg", x.astype(f32), w0) + b0[None, :, :]
    pre0 = pre0.reshape(T, B, 4, H).astype(weight_dtype)

    def to_mxu_layout(w_b4h_h):
        # (B, 4H, H_in) -> (B, H_in, 4H): contraction on H_in, gates lane-dense.
        return jnp.transpose(w_b4h_h.astype(f32).reshape(B, 4 * H, -1),
                             (0, 2, 1)).astype(weight_dtype)

    # Grid-invariant inputs are fetched once -> single-buffer them (halves their
    # resident VMEM footprint; essential under v7x's 64 MiB, frees room for
    # bigger time blocks on v5e/v6e).
    invariant = dict(pipeline_mode=pl.Buffered(1))

    args = [pre0]
    in_specs = [pl.BlockSpec((Tb, Bb, 4, H), lambda b, t: (t, b, 0, 0))]

    whh0 = to_mxu_layout(weights["weight_hh_l0"])
    args.append(whh0)
    in_specs.append(pl.BlockSpec((Bb, H, 4 * H), lambda b, t: (b, 0, 0), **invariant))

    for l in range(1, num_layers):
        # hidden[0] is shared across layers in the module, so the cell input and
        # hx coincide for l >= 1 -> fold W_ih + W_hh into a single weight.
        w = to_mxu_layout(weights[f"weight_ih_l{l}"].astype(f32)
                          + weights[f"weight_hh_l{l}"].astype(f32))
        b = (weights[f"bias_ih_l{l}"] + weights[f"bias_hh_l{l}"]).astype(f32)
        b = b.reshape(B, 4, H)
        args += [w, b]
        in_specs += [
            pl.BlockSpec((Bb, H, 4 * H), lambda b_, t: (b_, 0, 0), **invariant),
            pl.BlockSpec((Bb, 4, H), lambda b_, t: (b_, 0, 0), **invariant),
        ]

    # fc weights, zero-padded on the output axis up to a multiple of 128.
    fcw = jnp.zeros((B, H, Opad), f32).at[:, :, :O].set(weights["fc_weight"].astype(f32))
    fcb = jnp.zeros((B, 1, Opad), f32).at[:, 0, :O].set(weights["fc_bias"].astype(f32))
    args += [fcw, fcb]
    in_specs += [
        pl.BlockSpec((Bb, H, Opad), lambda b, t: (b, 0, 0), **invariant),
        pl.BlockSpec((Bb, 1, Opad), lambda b, t: (b, 0, 0), **invariant),
    ]

    if vmem_limit_bytes is None:
        # ~3/4 of physical VMEM, capped at 100 MiB:
        # ~96 MiB on v5e/v6e (128 MiB physical), ~48 MiB on v7x (64 MiB physical).
        try:
            phys = int(pltpu.get_tpu_info().vmem_capacity_bytes)
        except Exception:
            phys = 64 * 1024 * 1024
        vmem_limit_bytes = min(phys * 3 // 4, 100 * 1024 * 1024)

    out = pl.pallas_call(
        partial(lstm_kernel, num_layers, pred_len, T, Tb, H),
        out_shape=jax.ShapeDtypeStruct((B, pred_len, Opad), jnp.float32),
        grid_spec=pltpu.PrefetchScalarGridSpec(
            num_scalar_prefetch=0,
            grid=(n_b, n_tb),                  # batch (parallel), time (sequential)
            in_specs=in_specs,
            # Output block is resident across the time axis; written once at end.
            out_specs=pl.BlockSpec((Bb, pred_len, Opad), lambda b, t: (b, 0, 0)),
            scratch_shapes=[
                pltpu.VMEM((Bb, H), jnp.float32),             # h carry
                pltpu.VMEM((Bb, H), jnp.float32),             # c carry
                pltpu.VMEM((pred_len, Bb, H), jnp.float32),   # last pred_len hiddens
            ],
        ),
        compiler_params=pltpu.CompilerParams(
            dimension_semantics=("parallel", "arbitrary"),
            vmem_limit_bytes=vmem_limit_bytes,
        ),
    )(*args)
    return out[:, :, :O]


def reference(x, weights, *, hidden_size, num_layers, pred_len):
    """Pure-JAX mirror of the PyTorch forward pass (f32, highest precision)."""
    B, T, _ = x.shape
    H = hidden_size
    h = jnp.zeros((B, H), jnp.float32)
    c = jnp.zeros((B, H), jnp.float32)
    outs = []
    for t in range(T):
        xt = x[:, t, :]
        for l in range(num_layers):
            wih = weights[f"weight_ih_l{l}"].reshape(B, 4 * H, -1)
            whh = weights[f"weight_hh_l{l}"].reshape(B, 4 * H, -1)
            bih = weights[f"bias_ih_l{l}"].reshape(B, 4 * H)
            bhh = weights[f"bias_hh_l{l}"].reshape(B, 4 * H)
            gates = (
                jnp.einsum("bgi,bi->bg", wih, xt, precision="highest")
                + jnp.einsum("bgh,bh->bg", whh, h, precision="highest")
                + bih
                + bhh
            )
            ig = jax.nn.sigmoid(_layer_norm(gates[:, 0 * H:1 * H]))
            fg = jax.nn.sigmoid(_layer_norm(gates[:, 1 * H:2 * H]))
            gg = jnp.tanh(_layer_norm(gates[:, 2 * H:3 * H]))
            og = jax.nn.sigmoid(_layer_norm(gates[:, 3 * H:4 * H]))
            c = fg * c + ig * gg
            h = og * jnp.tanh(_layer_norm(c))
            xt = h
        outs.append(xt)
    lstm_out = jnp.stack(outs, axis=1)
    out = jnp.einsum("bth,bho->bto", lstm_out, weights["fc_weight"],
                     precision="highest") + weights["fc_bias"][:, None, :]
    return out[:, -pred_len:, :]


if __name__ == "__main__":
    # Small, forward-consistent shapes.  T=16 with Tb=4 exercises multi-block
    # time tiling; pred_len=6 spans a block boundary for the history scratch.
    B, T, I, H, O, L, PRED = 2, 16, 32, 32, 16, 2, 6

    key = jax.random.PRNGKey(0)
    keys = jax.random.split(key, 4 * L + 3)

    weights = {}
    ki = 0
    for l in range(L):
        in_l = I if l == 0 else H
        weights[f"weight_ih_l{l}"] = 0.1 * jax.random.normal(keys[ki], (B, 4 * H, in_l), jnp.float32); ki += 1
        weights[f"weight_hh_l{l}"] = 0.1 * jax.random.normal(keys[ki], (B, 4 * H, H), jnp.float32); ki += 1
        weights[f"bias_ih_l{l}"] = 0.1 * jax.random.normal(keys[ki], (B, 4 * H), jnp.float32); ki += 1
        weights[f"bias_hh_l{l}"] = 0.1 * jax.random.normal(keys[ki], (B, 4 * H), jnp.float32); ki += 1
    weights["fc_weight"] = 0.1 * jax.random.normal(keys[ki], (B, H, O), jnp.float32); ki += 1
    weights["fc_bias"] = 0.1 * jax.random.normal(keys[ki], (B, O), jnp.float32); ki += 1
    x = jax.random.normal(keys[ki], (B, T, I), jnp.float32)

    out = lstm_with_generated_weights(
        x, weights, hidden_size=H, num_layers=L, pred_len=PRED, time_block=4
    )
    out = jax.block_until_ready(out)

    ref = reference(x, weights, hidden_size=H, num_layers=L, pred_len=PRED)
    assert out.shape == (B, PRED, O), out.shape
    # Gate projections + fc run on the MXU at default precision (bf16-class
    # input passes, f32 accumulation); the error compounds through a 16-step,
    # 2-layer recurrence, so allow 1e-2 (structural bugs produce O(0.1) errors).
    # Tighter accuracy: pass precision explicitly / weight_dtype=f32 + HIGHEST.
    np.testing.assert_allclose(np.asarray(out), np.asarray(ref), rtol=1e-2, atol=1e-2)

    print("KERNEL_OK")
</pallas_src>

<mosaic_0001>
module attributes {stable_mosaic.version = 11 : i64} {
  func.func @lstm_kernel(%arg0: i32, %arg1: i32, %arg2: memref<4x2x4x32xf32, #tpu.memory_space<vmem>>, %arg3: memref<2x32x128xf32, #tpu.memory_space<vmem>>, %arg4: memref<2x32x128xf32, #tpu.memory_space<vmem>>, %arg5: memref<2x4x32xf32, #tpu.memory_space<vmem>>, %arg6: memref<2x32x128xf32, #tpu.memory_space<vmem>>, %arg7: memref<2x1x128xf32, #tpu.memory_space<vmem>>, %arg8: memref<2x6x128xf32, #tpu.memory_space<vmem>>, %arg9: memref<2x32xf32, #tpu.memory_space<vmem>>, %arg10: memref<2x32xf32, #tpu.memory_space<vmem>>, %arg11: memref<6x2x32xf32, #tpu.memory_space<vmem>>) attributes {dimension_semantics = [#tpu.dimension_semantics<parallel>, #tpu.dimension_semantics<arbitrary>], iteration_bounds = array<i64: 1, 4>, scalar_prefetch = 0 : i64, scratch_operands = 3 : i64, tpu.core_type = #tpu.core_type<tc>, window_params = [{transform_indices = @transform_0, window_bounds = array<i64: 4, 2, 4, 32>}, {pipeline_mode = #tpu.pipeline_mode<synchronous>, transform_indices = @transform_1, window_bounds = array<i64: 2, 32, 128>}, {pipeline_mode = #tpu.pipeline_mode<synchronous>, transform_indices = @transform_2, window_bounds = array<i64: 2, 32, 128>}, {pipeline_mode = #tpu.pipeline_mode<synchronous>, transform_indices = @transform_3, window_bounds = array<i64: 2, 4, 32>}, {pipeline_mode = #tpu.pipeline_mode<synchronous>, transform_indices = @transform_4, window_bounds = array<i64: 2, 32, 128>}, {pipeline_mode = #tpu.pipeline_mode<synchronous>, transform_indices = @transform_5, window_bounds = array<i64: 2, 1, 128>}, {transform_indices = @transform_6, window_bounds = array<i64: 2, 6, 128>}]} {
    %c0_i32 = arith.constant 0 : i32
    %0 = arith.cmpi eq, %arg1, %c0_i32 : i32
    %1 = arith.extui %0 : i1 to i32
    %c0_i32_0 = arith.constant 0 : i32
    %2 = arith.cmpi ne, %1, %c0_i32_0 : i32
    scf.if %2 {
      %cst_158 = arith.constant 0.000000e+00 : f32
      %601 = vector.broadcast %cst_158 : f32 to vector<2x32xf32>
      %c0_159 = arith.constant 0 : index
      %c0_160 = arith.constant 0 : index
      %602 = vector.load %arg9[%c0_159, %c0_160] : memref<2x32xf32, #tpu.memory_space<vmem>>, vector<2x32xf32>
      tpu.vector_store %arg9[%c0_159, %c0_160], %601 {strides = array<i32>} : memref<2x32xf32, #tpu.memory_space<vmem>>, vector<2x32xf32>,
      %cst_161 = arith.constant 0.000000e+00 : f32
      %603 = vector.broadcast %cst_161 : f32 to vector<2x32xf32>
      %c0_162 = arith.constant 0 : index
      %c0_163 = arith.constant 0 : index
      %604 = vector.load %arg10[%c0_162, %c0_163] : memref<2x32xf32, #tpu.memory_space<vmem>>, vector<2x32xf32>
      tpu.vector_store %arg10[%c0_162, %c0_163], %603 {strides = array<i32>} : memref<2x32xf32, #tpu.memory_space<vmem>>, vector<2x32xf32>,
    } else {
    }
    %c0 = arith.constant 0 : index
    %c0_1 = arith.constant 0 : index
    %c0_2 = arith.constant 0 : index
    %3 = vector.load %arg3[%c0, %c0_1, %c0_2] : memref<2x32x128xf32, #tpu.memory_space<vmem>>, vector<2x32x128xf32>
    %c0_3 = arith.constant 0 : index
    %c0_4 = arith.constant 0 : index
    %c0_5 = arith.constant 0 : index
    %4 = vector.load %arg4[%c0_3, %c0_4, %c0_5] : memref<2x32x128xf32, #tpu.memory_space<vmem>>, vector<2x32x128xf32>
    %c0_6 = arith.constant 0 : index
    %c0_7 = arith.constant 0 : index
    %c0_8 = arith.constant 0 : index
    %5 = vector.load %arg5[%c0_6, %c0_7, %c0_8] : memref<2x4x32xf32, #tpu.memory_space<vmem>>, vector<2x4x32xf32>
    %c0_9 = arith.constant 0 : index
    %c0_10 = arith.constant 0 : index
    %6 = vector.load %arg9[%c0_9, %c0_10] : memref<2x32xf32, #tpu.memory_space<vmem>>, vector<2x32xf32>
    %c0_11 = arith.constant 0 : index
    %c0_12 = arith.constant 0 : index
    %7 = vector.load %arg10[%c0_11, %c0_12] : memref<2x32xf32, #tpu.memory_space<vmem>>, vector<2x32xf32>
    %c0_i32_13 = arith.constant 0 : i32
    %8 = vector.shape_cast %6 : vector<2x32xf32> to vector<2x1x32xf32>
    %cst = arith.constant dense<0.000000e+00> : vector<2x1x128xf32>
    %9 = tpu.matmul %8, %3, %cst {dimension_numbers = #tpu.dot_dimension_numbers<[2], [1], [1], [2], [0, 0, 0, 1, 1, 2], [0], [0]>} : vector<2x1x32xf32>, vector<2x32x128xf32>, vector<2x1x128xf32> -> vector<2x1x128xf32>
    %10 = vector.shape_cast %9 : vector<2x1x128xf32> to vector<2x4x32xf32>
    %11 = arith.index_cast %c0_i32_13 : i32 to index
    %c0_14 = arith.constant 0 : index
    %c0_15 = arith.constant 0 : index
    %c0_16 = arith.constant 0 : index
    %12 = vector.load %arg2[%11, %c0_14, %c0_15, %c0_16] : memref<4x2x4x32xf32, #tpu.memory_space<vmem>>, vector<1x2x4x32xf32>
    %13 = vector.shape_cast %12 : vector<1x2x4x32xf32> to vector<2x4x32xf32>
    %14 = arith.addf %10, %13 : vector<2x4x32xf32>
    %cst_17 = arith.constant dense<0.000000e+00> : vector<2x4xf32>
    %15 = vector.multi_reduction <add>, %14, %cst_17 [2] : vector<2x4x32xf32> to vector<2x4xf32>
    %16 = vector.shape_cast %15 : vector<2x4xf32> to vector<2x4x1xf32>
    %cst_18 = arith.constant 3.200000e+01 : f32
    %17 = vector.broadcast %cst_18 : f32 to vector<2x4x1xf32>
    %18 = arith.divf %16, %17 : vector<2x4x1xf32>
    %19 = vector.broadcast %18 : vector<2x4x1xf32> to vector<2x4x32xf32>
    %20 = arith.subf %14, %19 : vector<2x4x32xf32>
    %21 = arith.mulf %20, %20 : vector<2x4x32xf32>
    %cst_19 = arith.constant dense<0.000000e+00> : vector<2x4xf32>
    %22 = vector.multi_reduction <add>, %21, %cst_19 [2] : vector<2x4x32xf32> to vector<2x4xf32>
    %23 = vector.shape_cast %22 : vector<2x4xf32> to vector<2x4x1xf32>
    %cst_20 = arith.constant 3.200000e+01 : f32
    %24 = vector.broadcast %cst_20 : f32 to vector<2x4x1xf32>
    %25 = arith.divf %23, %24 : vector<2x4x1xf32>
    %26 = vector.broadcast %18 : vector<2x4x1xf32> to vector<2x4x32xf32>
    %27 = arith.subf %14, %26 : vector<2x4x32xf32>
    %cst_21 = arith.constant 9.99999974E-6 : f32
    %28 = vector.broadcast %cst_21 : f32 to vector<2x4x1xf32>
    %29 = arith.addf %25, %28 : vector<2x4x1xf32>
    %30 = math.rsqrt %29 : vector<2x4x1xf32>
    %31 = vector.broadcast %30 : vector<2x4x1xf32> to vector<2x4x32xf32>
    %32 = arith.mulf %27, %31 : vector<2x4x32xf32>
    %33 = vector.extract_strided_slice %32 {offsets = [0, 0, 0], sizes = [2, 1, 32], strides = [1, 1, 1]} : vector<2x4x32xf32> to vector<2x1x32xf32>
    %34 = vector.shape_cast %33 : vector<2x1x32xf32> to vector<2x32xf32>
    %35 = arith.negf %34 : vector<2x32xf32>
    %36 = math.exp %35 : vector<2x32xf32>
    %cst_22 = arith.constant 1.000000e+00 : f32
    %37 = vector.broadcast %cst_22 : f32 to vector<2x32xf32>
    %38 = arith.addf %37, %36 : vector<2x32xf32>
    %39 = arith.divf %37, %38 : vector<2x32xf32>
    %40 = vector.extract_strided_slice %32 {offsets = [0, 1, 0], sizes = [2, 1, 32], strides = [1, 1, 1]} : vector<2x4x32xf32> to vector<2x1x32xf32>
    %41 = vector.shape_cast %40 : vector<2x1x32xf32> to vector<2x32xf32>
    %42 = arith.negf %41 : vector<2x32xf32>
    %43 = math.exp %42 : vector<2x32xf32>
    %cst_23 = arith.constant 1.000000e+00 : f32
    %44 = vector.broadcast %cst_23 : f32 to vector<2x32xf32>
    %45 = arith.addf %44, %43 : vector<2x32xf32>
    %46 = arith.divf %44, %45 : vector<2x32xf32>
    %47 = vector.extract_strided_slice %32 {offsets = [0, 2, 0], sizes = [2, 1, 32], strides = [1, 1, 1]} : vector<2x4x32xf32> to vector<2x1x32xf32>
    %48 = vector.shape_cast %47 : vector<2x1x32xf32> to vector<2x32xf32>
    %49 = math.tanh %48 : vector<2x32xf32>
    %50 = vector.extract_strided_slice %32 {offsets = [0, 3, 0], sizes = [2, 1, 32], strides = [1, 1, 1]} : vector<2x4x32xf32> to vector<2x1x32xf32>
    %51 = vector.shape_cast %50 : vector<2x1x32xf32> to vector<2x32xf32>
    %52 = arith.negf %51 : vector<2x32xf32>
    %53 = math.exp %52 : vector<2x32xf32>
    %cst_24 = arith.constant 1.000000e+00 : f32
    %54 = vector.broadcast %cst_24 : f32 to vector<2x32xf32>
    %55 = arith.addf %54, %53 : vector<2x32xf32>
    %56 = arith.divf %54, %55 : vector<2x32xf32>
    %57 = arith.mulf %46, %7 : vector<2x32xf32>
    %58 = arith.mulf %39, %49 : vector<2x32xf32>
    %59 = arith.addf %57, %58 : vector<2x32xf32>
    %cst_25 = arith.constant dense<0.000000e+00> : vector<2xf32>
    %60 = vector.multi_reduction <add>, %59, %cst_25 [1] : vector<2x32xf32> to vector<2xf32>
    %61 = vector.shape_cast %60 : vector<2xf32> to vector<2x1xf32>
    %cst_26 = arith.constant 3.200000e+01 : f32
    %62 = vector.broadcast %cst_26 : f32 to vector<2x1xf32>
    %63 = arith.divf %61, %62 : vector<2x1xf32>
    %64 = vector.broadcast %63 : vector<2x1xf32> to vector<2x32xf32>
    %65 = arith.subf %59, %64 : vector<2x32xf32>
    %66 = arith.mulf %65, %65 : vector<2x32xf32>
    %cst_27 = arith.constant dense<0.000000e+00> : vector<2xf32>
    %67 = vector.multi_reduction <add>, %66, %cst_27 [1] : vector<2x32xf32> to vector<2xf32>
    %68 = vector.shape_cast %67 : vector<2xf32> to vector<2x1xf32>
    %cst_28 = arith.constant 3.200000e+01 : f32
    %69 = vector.broadcast %cst_28 : f32 to vector<2x1xf32>
    %70 = arith.divf %68, %69 : vector<2x1xf32>
    %71 = vector.broadcast %63 : vector<2x1xf32> to vector<2x32xf32>
    %72 = arith.subf %59, %71 : vector<2x32xf32>
    %cst_29 = arith.constant 9.99999974E-6 : f32
    %73 = vector.broadcast %cst_29 : f32 to vector<2x1xf32>
    %74 = arith.addf %70, %73 : vector<2x1xf32>
    %75 = math.rsqrt %74 : vector<2x1xf32>
    %76 = vector.broadcast %75 : vector<2x1xf32> to vector<2x32xf32>
    %77 = arith.mulf %72, %76 : vector<2x32xf32>
    %78 = math.tanh %77 : vector<2x32xf32>
    %79 = arith.mulf %56, %78 : vector<2x32xf32>
    %80 = vector.shape_cast %79 : vector<2x32xf32> to vector<2x1x32xf32>
    %cst_30 = arith.constant dense<0.000000e+00> : vector<2x1x128xf32>
    %81 = tpu.matmul %80, %4, %cst_30 {dimension_numbers = #tpu.dot_dimension_numbers<[2], [1], [1], [2], [0, 0, 0, 1, 1, 2], [0], [0]>} : vector<2x1x32xf32>, vector<2x32x128xf32>, vector<2x1x128xf32> -> vector<2x1x128xf32>
    %82 = vector.shape_cast %81 : vector<2x1x128xf32> to vector<2x4x32xf32>
    %83 = arith.addf %82, %5 : vector<2x4x32xf32>
    %cst_31 = arith.constant dense<0.000000e+00> : vector<2x4xf32>
    %84 = vector.multi_reduction <add>, %83, %cst_31 [2] : vector<2x4x32xf32> to vector<2x4xf32>
    %85 = vector.shape_cast %84 : vector<2x4xf32> to vector<2x4x1xf32>
    %cst_32 = arith.constant 3.200000e+01 : f32
    %86 = vector.broadcast %cst_32 : f32 to vector<2x4x1xf32>
    %87 = arith.divf %85, %86 : vector<2x4x1xf32>
    %88 = vector.broadcast %87 : vector<2x4x1xf32> to vector<2x4x32xf32>
    %89 = arith.subf %83, %88 : vector<2x4x32xf32>
    %90 = arith.mulf %89, %89 : vector<2x4x32xf32>
    %cst_33 = arith.constant dense<0.000000e+00> : vector<2x4xf32>
    %91 = vector.multi_reduction <add>, %90, %cst_33 [2] : vector<2x4x32xf32> to vector<2x4xf32>
    %92 = vector.shape_cast %91 : vector<2x4xf32> to vector<2x4x1xf32>
    %cst_34 = arith.constant 3.200000e+01 : f32
    %93 = vector.broadcast %cst_34 : f32 to vector<2x4x1xf32>
    %94 = arith.divf %92, %93 : vector<2x4x1xf32>
    %95 = vector.broadcast %87 : vector<2x4x1xf32> to vector<2x4x32xf32>
    %96 = arith.subf %83, %95 : vector<2x4x32xf32>
    %cst_35 = arith.constant 9.99999974E-6 : f32
    %97 = vector.broadcast %cst_35 : f32 to vector<2x4x1xf32>
    %98 = arith.addf %94, %97 : vector<2x4x1xf32>
    %99 = math.rsqrt %98 : vector<2x4x1xf32>
    %100 = vector.broadcast %99 : vector<2x4x1xf32> to vector<2x4x32xf32>
    %101 = arith.mulf %96, %100 : vector<2x4x32xf32>
    %102 = vector.extract_strided_slice %101 {offsets = [0, 0, 0], sizes = [2, 1, 32], strides = [1, 1, 1]} : vector<2x4x32xf32> to vector<2x1x32xf32>
    %103 = vector.shape_cast %102 : vector<2x1x32xf32> to vector<2x32xf32>
    %104 = arith.negf %103 : vector<2x32xf32>
    %105 = math.exp %104 : vector<2x32xf32>
    %cst_36 = arith.constant 1.000000e+00 : f32
    %106 = vector.broadcast %cst_36 : f32 to vector<2x32xf32>
    %107 = arith.addf %106, %105 : vector<2x32xf32>
    %108 = arith.divf %106, %107 : vector<2x32xf32>
    %109 = vector.extract_strided_slice %101 {offsets = [0, 1, 0], sizes = [2, 1, 32], strides = [1, 1, 1]} : vector<2x4x32xf32> to vector<2x1x32xf32>
    %110 = vector.shape_cast %109 : vector<2x1x32xf32> to vector<2x32xf32>
    %111 = arith.negf %110 : vector<2x32xf32>
    %112 = math.exp %111 : vector<2x32xf32>
    %cst_37 = arith.constant 1.000000e+00 : f32
    %113 = vector.broadcast %cst_37 : f32 to vector<2x32xf32>
    %114 = arith.addf %113, %112 : vector<2x32xf32>
    %115 = arith.divf %113, %114 : vector<2x32xf32>
    %116 = vector.extract_strided_slice %101 {offsets = [0, 2, 0], sizes = [2, 1, 32], strides = [1, 1, 1]} : vector<2x4x32xf32> to vector<2x1x32xf32>
    %117 = vector.shape_cast %116 : vector<2x1x32xf32> to vector<2x32xf32>
    %118 = math.tanh %117 : vector<2x32xf32>
    %119 = vector.extract_strided_slice %101 {offsets = [0, 3, 0], sizes = [2, 1, 32], strides = [1, 1, 1]} : vector<2x4x32xf32> to vector<2x1x32xf32>
    %120 = vector.shape_cast %119 : vector<2x1x32xf32> to vector<2x32xf32>
    %121 = arith.negf %120 : vector<2x32xf32>
    %122 = math.exp %121 : vector<2x32xf32>
    %cst_38 = arith.constant 1.000000e+00 : f32
    %123 = vector.broadcast %cst_38 : f32 to vector<2x32xf32>
    %124 = arith.addf %123, %122 : vector<2x32xf32>
    %125 = arith.divf %123, %124 : vector<2x32xf32>
    %126 = arith.mulf %115, %59 : vector<2x32xf32>
    %127 = arith.mulf %108, %118 : vector<2x32xf32>
    %128 = arith.addf %126, %127 : vector<2x32xf32>
    %cst_39 = arith.constant dense<0.000000e+00> : vector<2xf32>
    %129 = vector.multi_reduction <add>, %128, %cst_39 [1] : vector<2x32xf32> to vector<2xf32>
    %130 = vector.shape_cast %129 : vector<2xf32> to vector<2x1xf32>
    %cst_40 = arith.constant 3.200000e+01 : f32
    %131 = vector.broadcast %cst_40 : f32 to vector<2x1xf32>
    %132 = arith.divf %130, %131 : vector<2x1xf32>
    %133 = vector.broadcast %132 : vector<2x1xf32> to vector<2x32xf32>
    %134 = arith.subf %128, %133 : vector<2x32xf32>
    %135 = arith.mulf %134, %134 : vector<2x32xf32>
    %cst_41 = arith.constant dense<0.000000e+00> : vector<2xf32>
    %136 = vector.multi_reduction <add>, %135, %cst_41 [1] : vector<2x32xf32> to vector<2xf32>
    %137 = vector.shape_cast %136 : vector<2xf32> to vector<2x1xf32>
    %cst_42 = arith.constant 3.200000e+01 : f32
    %138 = vector.broadcast %cst_42 : f32 to vector<2x1xf32>
    %139 = arith.divf %137, %138 : vector<2x1xf32>
    %140 = vector.broadcast %132 : vector<2x1xf32> to vector<2x32xf32>
    %141 = arith.subf %128, %140 : vector<2x32xf32>
    %cst_43 = arith.constant 9.99999974E-6 : f32
    %142 = vector.broadcast %cst_43 : f32 to vector<2x1xf32>
    %143 = arith.addf %139, %142 : vector<2x1xf32>
    %144 = math.rsqrt %143 : vector<2x1xf32>
    %145 = vector.broadcast %144 : vector<2x1xf32> to vector<2x32xf32>
    %146 = arith.mulf %141, %145 : vector<2x32xf32>
    %147 = math.tanh %146 : vector<2x32xf32>
    %148 = arith.mulf %125, %147 : vector<2x32xf32>
    %c4_i32 = arith.constant 4 : i32
    %149 = arith.muli %arg1, %c4_i32 : i32
    %150 = arith.addi %149, %c0_i32_13 : i32
    %c10_i32 = arith.constant 10 : i32
    %151 = arith.subi %150, %c10_i32 : i32
    %c0_i32_44 = arith.constant 0 : i32
    %152 = arith.cmpi sge, %151, %c0_i32_44 : i32
    %153 = arith.extui %152 : i1 to i32
    %c0_i32_45 = arith.constant 0 : i32
    %154 = arith.cmpi ne, %153, %c0_i32_45 : i32
    scf.if %154 {
      %601 = arith.index_cast %151 : i32 to index
      %c0_158 = arith.constant 0 : index
      %c0_159 = arith.constant 0 : index
      %602 = vector.load %arg11[%601, %c0_158, %c0_159] : memref<6x2x32xf32, #tpu.memory_space<vmem>>, vector<1x2x32xf32>
      %603 = vector.shape_cast %602 : vector<1x2x32xf32> to vector<2x32xf32>
      %604 = vector.shape_cast %148 : vector<2x32xf32> to vector<1x2x32xf32>
      tpu.vector_store %arg11[%601, %c0_158, %c0_159], %604 {strides = array<i32>} : memref<6x2x32xf32, #tpu.memory_space<vmem>>, vector<1x2x32xf32>,
    } else {
    }
    %c1_i32 = arith.constant 1 : i32
    %155 = vector.shape_cast %148 : vector<2x32xf32> to vector<2x1x32xf32>
    %cst_46 = arith.constant dense<0.000000e+00> : vector<2x1x128xf32>
    %156 = tpu.matmul %155, %3, %cst_46 {dimension_numbers = #tpu.dot_dimension_numbers<[2], [1], [1], [2], [0, 0, 0, 1, 1, 2], [0], [0]>} : vector<2x1x32xf32>, vector<2x32x128xf32>, vector<2x1x128xf32> -> vector<2x1x128xf32>
    %157 = vector.shape_cast %156 : vector<2x1x128xf32> to vector<2x4x32xf32>
    %158 = arith.index_cast %c1_i32 : i32 to index
    %c0_47 = arith.constant 0 : index
    %c0_48 = arith.constant 0 : index
    %c0_49 = arith.constant 0 : index
    %159 = vector.load %arg2[%158, %c0_47, %c0_48, %c0_49] : memref<4x2x4x32xf32, #tpu.memory_space<vmem>>, vector<1x2x4x32xf32>
    %160 = vector.shape_cast %159 : vector<1x2x4x32xf32> to vector<2x4x32xf32>
    %161 = arith.addf %157, %160 : vector<2x4x32xf32>
    %cst_50 = arith.constant dense<0.000000e+00> : vector<2x4xf32>
    %162 = vector.multi_reduction <add>, %161, %cst_50 [2] : vector<2x4x32xf32> to vector<2x4xf32>
    %163 = vector.shape_cast %162 : vector<2x4xf32> to vector<2x4x1xf32>
    %cst_51 = arith.constant 3.200000e+01 : f32
    %164 = vector.broadcast %cst_51 : f32 to vector<2x4x1xf32>
    %165 = arith.divf %163, %164 : vector<2x4x1xf32>
    %166 = vector.broadcast %165 : vector<2x4x1xf32> to vector<2x4x32xf32>
    %167 = arith.subf %161, %166 : vector<2x4x32xf32>
    %168 = arith.mulf %167, %167 : vector<2x4x32xf32>
    %cst_52 = arith.constant dense<0.000000e+00> : vector<2x4xf32>
    %169 = vector.multi_reduction <add>, %168, %cst_52 [2] : vector<2x4x32xf32> to vector<2x4xf32>
    %170 = vector.shape_cast %169 : vector<2x4xf32> to vector<2x4x1xf32>
    %cst_53 = arith.constant 3.200000e+01 : f32
    %171 = vector.broadcast %cst_53 : f32 to vector<2x4x1xf32>
    %172 = arith.divf %170, %171 : vector<2x4x1xf32>
    %173 = vector.broadcast %165 : vector<2x4x1xf32> to vector<2x4x32xf32>
    %174 = arith.subf %161, %173 : vector<2x4x32xf32>
    %cst_54 = arith.constant 9.99999974E-6 : f32
    %175 = vector.broadcast %cst_54 : f32 to vector<2x4x1xf32>
    %176 = arith.addf %172, %175 : vector<2x4x1xf32>
    %177 = math.rsqrt %176 : vector<2x4x1xf32>
    %178 = vector.broadcast %177 : vector<2x4x1xf32> to vector<2x4x32xf32>
    %179 = arith.mulf %174, %178 : vector<2x4x32xf32>
    %180 = vector.extract_strided_slice %179 {offsets = [0, 0, 0], sizes = [2, 1, 32], strides = [1, 1, 1]} : vector<2x4x32xf32> to vector<2x1x32xf32>
    %181 = vector.shape_cast %180 : vector<2x1x32xf32> to vector<2x32xf32>
    %182 = arith.negf %181 : vector<2x32xf32>
    %183 = math.exp %182 : vector<2x32xf32>
    %cst_55 = arith.constant 1.000000e+00 : f32
    %184 = vector.broadcast %cst_55 : f32 to vector<2x32xf32>
    %185 = arith.addf %184, %183 : vector<2x32xf32>
    %186 = arith.divf %184, %185 : vector<2x32xf32>
    %187 = vector.extract_strided_slice %179 {offsets = [0, 1, 0], sizes = [2, 1, 32], strides = [1, 1, 1]} : vector<2x4x32xf32> to vector<2x1x32xf32>
    %188 = vector.shape_cast %187 : vector<2x1x32xf32> to vector<2x32xf32>
    %189 = arith.negf %188 : vector<2x32xf32>
    %190 = math.exp %189 : vector<2x32xf32>
    %cst_56 = arith.constant 1.000000e+00 : f32
    %191 = vector.broadcast %cst_56 : f32 to vector<2x32xf32>
    %192 = arith.addf %191, %190 : vector<2x32xf32>
    %193 = arith.divf %191, %192 : vector<2x32xf32>
    %194 = vector.extract_strided_slice %179 {offsets = [0, 2, 0], sizes = [2, 1, 32], strides = [1, 1, 1]} : vector<2x4x32xf32> to vector<2x1x32xf32>
    %195 = vector.shape_cast %194 : vector<2x1x32xf32> to vector<2x32xf32>
    %196 = math.tanh %195 : vector<2x32xf32>
    %197 = vector.extract_strided_slice %179 {offsets = [0, 3, 0], sizes = [2, 1, 32], strides = [1, 1, 1]} : vector<2x4x32xf32> to vector<2x1x32xf32>
    %198 = vector.shape_cast %197 : vector<2x1x32xf32> to vector<2x32xf32>
    %199 = arith.negf %198 : vector<2x32xf32>
    %200 = math.exp %199 : vector<2x32xf32>
    %cst_57 = arith.constant 1.000000e+00 : f32
    %201 = vector.broadcast %cst_57 : f32 to vector<2x32xf32>
    %202 = arith.addf %201, %200 : vector<2x32xf32>
    %203 = arith.divf %201, %202 : vector<2x32xf32>
    %204 = arith.mulf %193, %128 : vector<2x32xf32>
    %205 = arith.mulf %186, %196 : vector<2x32xf32>
    %206 = arith.addf %204, %205 : vector<2x32xf32>
    %cst_58 = arith.constant dense<0.000000e+00> : vector<2xf32>
    %207 = vector.multi_reduction <add>, %206, %cst_58 [1] : vector<2x32xf32> to vector<2xf32>
    %208 = vector.shape_cast %207 : vector<2xf32> to vector<2x1xf32>
    %cst_59 = arith.constant 3.200000e+01 : f32
    %209 = vector.broadcast %cst_59 : f32 to vector<2x1xf32>
    %210 = arith.divf %208, %209 : vector<2x1xf32>
    %211 = vector.broadcast %210 : vector<2x1xf32> to vector<2x32xf32>
    %212 = arith.subf %206, %211 : vector<2x32xf32>
    %213 = arith.mulf %212, %212 : vector<2x32xf32>
    %cst_60 = arith.constant dense<0.000000e+00> : vector<2xf32>
    %214 = vector.multi_reduction <add>, %213, %cst_60 [1] : vector<2x32xf32> to vector<2xf32>
    %215 = vector.shape_cast %214 : vector<2xf32> to vector<2x1xf32>
    %cst_61 = arith.constant 3.200000e+01 : f32
    %216 = vector.broadcast %cst_61 : f32 to vector<2x1xf32>
    %217 = arith.divf %215, %216 : vector<2x1xf32>
    %218 = vector.broadcast %210 : vector<2x1xf32> to vector<2x32xf32>
    %219 = arith.subf %206, %218 : vector<2x32xf32>
    %cst_62 = arith.constant 9.99999974E-6 : f32
    %220 = vector.broadcast %cst_62 : f32 to vector<2x1xf32>
    %221 = arith.addf %217, %220 : vector<2x1xf32>
    %222 = math.rsqrt %221 : vector<2x1xf32>
    %223 = vector.broadcast %222 : vector<2x1xf32> to vector<2x32xf32>
    %224 = arith.mulf %219, %223 : vector<2x32xf32>
    %225 = math.tanh %224 : vector<2x32xf32>
    %226 = arith.mulf %203, %225 : vector<2x32xf32>
    %227 = vector.shape_cast %226 : vector<2x32xf32> to vector<2x1x32xf32>
    %cst_63 = arith.constant dense<0.000000e+00> : vector<2x1x128xf32>
    %228 = tpu.matmul %227, %4, %cst_63 {dimension_numbers = #tpu.dot_dimension_numbers<[2], [1], [1], [2], [0, 0, 0, 1, 1, 2], [0], [0]>} : vector<2x1x32xf32>, vector<2x32x128xf32>, vector<2x1x128xf32> -> vector<2x1x128xf32>
    %229 = vector.shape_cast %228 : vector<2x1x128xf32> to vector<2x4x32xf32>
    %230 = arith.addf %229, %5 : vector<2x4x32xf32>
    %cst_64 = arith.constant dense<0.000000e+00> : vector<2x4xf32>
    %231 = vector.multi_reduction <add>, %230, %cst_64 [2] : vector<2x4x32xf32> to vector<2x4xf32>
    %232 = vector.shape_cast %231 : vector<2x4xf32> to vector<2x4x1xf32>
    %cst_65 = arith.constant 3.200000e+01 : f32
    %233 = vector.broadcast %cst_65 : f32 to vector<2x4x1xf32>
    %234 = arith.divf %232, %233 : vector<2x4x1xf32>
    %235 = vector.broadcast %234 : vector<2x4x1xf32> to vector<2x4x32xf32>
    %236 = arith.subf %230, %235 : vector<2x4x32xf32>
    %237 = arith.mulf %236, %236 : vector<2x4x32xf32>
    %cst_66 = arith.constant dense<0.000000e+00> : vector<2x4xf32>
    %238 = vector.multi_reduction <add>, %237, %cst_66 [2] : vector<2x4x32xf32> to vector<2x4xf32>
    %239 = vector.shape_cast %238 : vector<2x4xf32> to vector<2x4x1xf32>
    %cst_67 = arith.constant 3.200000e+01 : f32
    %240 = vector.broadcast %cst_67 : f32 to vector<2x4x1xf32>
    %241 = arith.divf %239, %240 : vector<2x4x1xf32>
    %242 = vector.broadcast %234 : vector<2x4x1xf32> to vector<2x4x32xf32>
    %243 = arith.subf %230, %242 : vector<2x4x32xf32>
    %cst_68 = arith.constant 9.99999974E-6 : f32
    %244 = vector.broadcast %cst_68 : f32 to vector<2x4x1xf32>
    %245 = arith.addf %241, %244 : vector<2x4x1xf32>
    %246 = math.rsqrt %245 : vector<2x4x1xf32>
    %247 = vector.broadcast %246 : vector<2x4x1xf32> to vector<2x4x32xf32>
    %248 = arith.mulf %243, %247 : vector<2x4x32xf32>
    %249 = vector.extract_strided_slice %248 {offsets = [0, 0, 0], sizes = [2, 1, 32], strides = [1, 1, 1]} : vector<2x4x32xf32> to vector<2x1x32xf32>
    %250 = vector.shape_cast %249 : vector<2x1x32xf32> to vector<2x32xf32>
    %251 = arith.negf %250 : vector<2x32xf32>
    %252 = math.exp %251 : vector<2x32xf32>
    %cst_69 = arith.constant 1.000000e+00 : f32
    %253 = vector.broadcast %cst_69 : f32 to vector<2x32xf32>
    %254 = arith.addf %253, %252 : vector<2x32xf32>
    %255 = arith.divf %253, %254 : vector<2x32xf32>
    %256 = vector.extract_strided_slice %248 {offsets = [0, 1, 0], sizes = [2, 1, 32], strides = [1, 1, 1]} : vector<2x4x32xf32> to vector<2x1x32xf32>
    %257 = vector.shape_cast %256 : vector<2x1x32xf32> to vector<2x32xf32>
    %258 = arith.negf %257 : vector<2x32xf32>
    %259 = math.exp %258 : vector<2x32xf32>
    %cst_70 = arith.constant 1.000000e+00 : f32
    %260 = vector.broadcast %cst_70 : f32 to vector<2x32xf32>
    %261 = arith.addf %260, %259 : vector<2x32xf32>
    %262 = arith.divf %260, %261 : vector<2x32xf32>
    %263 = vector.extract_strided_slice %248 {offsets = [0, 2, 0], sizes = [2, 1, 32], strides = [1, 1, 1]} : vector<2x4x32xf32> to vector<2x1x32xf32>
    %264 = vector.shape_cast %263 : vector<2x1x32xf32> to vector<2x32xf32>
    %265 = math.tanh %264 : vector<2x32xf32>
    %266 = vector.extract_strided_slice %248 {offsets = [0, 3, 0], sizes = [2, 1, 32], strides = [1, 1, 1]} : vector<2x4x32xf32> to vector<2x1x32xf32>
    %267 = vector.shape_cast %266 : vector<2x1x32xf32> to vector<2x32xf32>
    %268 = arith.negf %267 : vector<2x32xf32>
    %269 = math.exp %268 : vector<2x32xf32>
    %cst_71 = arith.constant 1.000000e+00 : f32
    %270 = vector.broadcast %cst_71 : f32 to vector<2x32xf32>
    %271 = arith.addf %270, %269 : vector<2x32xf32>
    %272 = arith.divf %270, %271 : vector<2x32xf32>
    %273 = arith.mulf %262, %206 : vector<2x32xf32>
    %274 = arith.mulf %255, %265 : vector<2x32xf32>
    %275 = arith.addf %273, %274 : vector<2x32xf32>
    %cst_72 = arith.constant dense<0.000000e+00> : vector<2xf32>
    %276 = vector.multi_reduction <add>, %275, %cst_72 [1] : vector<2x32xf32> to vector<2xf32>
    %277 = vector.shape_cast %276 : vector<2xf32> to vector<2x1xf32>
    %cst_73 = arith.constant 3.200000e+01 : f32
    %278 = vector.broadcast %cst_73 : f32 to vector<2x1xf32>
    %279 = arith.divf %277, %278 : vector<2x1xf32>
    %280 = vector.broadcast %279 : vector<2x1xf32> to vector<2x32xf32>
    %281 = arith.subf %275, %280 : vector<2x32xf32>
    %282 = arith.mulf %281, %281 : vector<2x32xf32>
    %cst_74 = arith.constant dense<0.000000e+00> : vector<2xf32>
    %283 = vector.multi_reduction <add>, %282, %cst_74 [1] : vector<2x32xf32> to vector<2xf32>
    %284 = vector.shape_cast %283 : vector<2xf32> to vector<2x1xf32>
    %cst_75 = arith.constant 3.200000e+01 : f32
    %285 = vector.broadcast %cst_75 : f32 to vector<2x1xf32>
    %286 = arith.divf %284, %285 : vector<2x1xf32>
    %287 = vector.broadcast %279 : vector<2x1xf32> to vector<2x32xf32>
    %288 = arith.subf %275, %287 : vector<2x32xf32>
    %cst_76 = arith.constant 9.99999974E-6 : f32
    %289 = vector.broadcast %cst_76 : f32 to vector<2x1xf32>
    %290 = arith.addf %286, %289 : vector<2x1xf32>
    %291 = math.rsqrt %290 : vector<2x1xf32>
    %292 = vector.broadcast %291 : vector<2x1xf32> to vector<2x32xf32>
    %293 = arith.mulf %288, %292 : vector<2x32xf32>
    %294 = math.tanh %293 : vector<2x32xf32>
    %295 = arith.mulf %272, %294 : vector<2x32xf32>
    %c4_i32_77 = arith.constant 4 : i32
    %296 = arith.muli %arg1, %c4_i32_77 : i32
    %297 = arith.addi %296, %c1_i32 : i32
    %c10_i32_78 = arith.constant 10 : i32
    %298 = arith.subi %297, %c10_i32_78 : i32
    %c0_i32_79 = arith.constant 0 : i32
    %299 = arith.cmpi sge, %298, %c0_i32_79 : i32
    %300 = arith.extui %299 : i1 to i32
    %c0_i32_80 = arith.constant 0 : i32
    %301 = arith.cmpi ne, %300, %c0_i32_80 : i32
    scf.if %301 {
      %601 = arith.index_cast %298 : i32 to index
      %c0_158 = arith.constant 0 : index
      %c0_159 = arith.constant 0 : index
      %602 = vector.load %arg11[%601, %c0_158, %c0_159] : memref<6x2x32xf32, #tpu.memory_space<vmem>>, vector<1x2x32xf32>
      %603 = vector.shape_cast %602 : vector<1x2x32xf32> to vector<2x32xf32>
      %604 = vector.shape_cast %295 : vector<2x32xf32> to vector<1x2x32xf32>
      tpu.vector_store %arg11[%601, %c0_158, %c0_159], %604 {strides = array<i32>} : memref<6x2x32xf32, #tpu.memory_space<vmem>>, vector<1x2x32xf32>,
    } else {
    }
    %c2_i32 = arith.constant 2 : i32
    %302 = vector.shape_cast %295 : vector<2x32xf32> to vector<2x1x32xf32>
    %cst_81 = arith.constant dense<0.000000e+00> : vector<2x1x128xf32>
    %303 = tpu.matmul %302, %3, %cst_81 {dimension_numbers = #tpu.dot_dimension_numbers<[2], [1], [1], [2], [0, 0, 0, 1, 1, 2], [0], [0]>} : vector<2x1x32xf32>, vector<2x32x128xf32>, vector<2x1x128xf32> -> vector<2x1x128xf32>
    %304 = vector.shape_cast %303 : vector<2x1x128xf32> to vector<2x4x32xf32>
    %305 = arith.index_cast %c2_i32 : i32 to index
    %c0_82 = arith.constant 0 : index
    %c0_83 = arith.constant 0 : index
    %c0_84 = arith.constant 0 : index
    %306 = vector.load %arg2[%305, %c0_82, %c0_83, %c0_84] : memref<4x2x4x32xf32, #tpu.memory_space<vmem>>, vector<1x2x4x32xf32>
    %307 = vector.shape_cast %306 : vector<1x2x4x32xf32> to vector<2x4x32xf32>
    %308 = arith.addf %304, %307 : vector<2x4x32xf32>
    %cst_85 = arith.constant dense<0.000000e+00> : vector<2x4xf32>
    %309 = vector.multi_reduction <add>, %308, %cst_85 [2] : vector<2x4x32xf32> to vector<2x4xf32>
    %310 = vector.shape_cast %309 : vector<2x4xf32> to vector<2x4x1xf32>
    %cst_86 = arith.constant 3.200000e+01 : f32
    %311 = vector.broadcast %cst_86 : f32 to vector<2x4x1xf32>
    %312 = arith.divf %310, %311 : vector<2x4x1xf32>
    %313 = vector.broadcast %312 : vector<2x4x1xf32> to vector<2x4x32xf32>
    %314 = arith.subf %308, %313 : vector<2x4x32xf32>
    %315 = arith.mulf %314, %314 : vector<2x4x32xf32>
    %cst_87 = arith.constant dense<0.000000e+00> : vector<2x4xf32>
    %316 = vector.multi_reduction <add>, %315, %cst_87 [2] : vector<2x4x32xf32> to vector<2x4xf32>
    %317 = vector.shape_cast %316 : vector<2x4xf32> to vector<2x4x1xf32>
    %cst_88 = arith.constant 3.200000e+01 : f32
    %318 = vector.broadcast %cst_88 : f32 to vector<2x4x1xf32>
    %319 = arith.divf %317, %318 : vector<2x4x1xf32>
    %320 = vector.broadcast %312 : vector<2x4x1xf32> to vector<2x4x32xf32>
    %321 = arith.subf %308, %320 : vector<2x4x32xf32>
    %cst_89 = arith.constant 9.99999974E-6 : f32
    %322 = vector.broadcast %cst_89 : f32 to vector<2x4x1xf32>
    %323 = arith.addf %319, %322 : vector<2x4x1xf32>
    %324 = math.rsqrt %323 : vector<2x4x1xf32>
    %325 = vector.broadcast %324 : vector<2x4x1xf32> to vector<2x4x32xf32>
    %326 = arith.mulf %321, %325 : vector<2x4x32xf32>
    %327 = vector.extract_strided_slice %326 {offsets = [0, 0, 0], sizes = [2, 1, 32], strides = [1, 1, 1]} : vector<2x4x32xf32> to vector<2x1x32xf32>
    %328 = vector.shape_cast %327 : vector<2x1x32xf32> to vector<2x32xf32>
    %329 = arith.negf %328 : vector<2x32xf32>
    %330 = math.exp %329 : vector<2x32xf32>
    %cst_90 = arith.constant 1.000000e+00 : f32
    %331 = vector.broadcast %cst_90 : f32 to vector<2x32xf32>
    %332 = arith.addf %331, %330 : vector<2x32xf32>
    %333 = arith.divf %331, %332 : vector<2x32xf32>
    %334 = vector.extract_strided_slice %326 {offsets = [0, 1, 0], sizes = [2, 1, 32], strides = [1, 1, 1]} : vector<2x4x32xf32> to vector<2x1x32xf32>
    %335 = vector.shape_cast %334 : vector<2x1x32xf32> to vector<2x32xf32>
    %336 = arith.negf %335 : vector<2x32xf32>
    %337 = math.exp %336 : vector<2x32xf32>
    %cst_91 = arith.constant 1.000000e+00 : f32
    %338 = vector.broadcast %cst_91 : f32 to vector<2x32xf32>
    %339 = arith.addf %338, %337 : vector<2x32xf32>
    %340 = arith.divf %338, %339 : vector<2x32xf32>
    %341 = vector.extract_strided_slice %326 {offsets = [0, 2, 0], sizes = [2, 1, 32], strides = [1, 1, 1]} : vector<2x4x32xf32> to vector<2x1x32xf32>
    %342 = vector.shape_cast %341 : vector<2x1x32xf32> to vector<2x32xf32>
    %343 = math.tanh %342 : vector<2x32xf32>
    %344 = vector.extract_strided_slice %326 {offsets = [0, 3, 0], sizes = [2, 1, 32], strides = [1, 1, 1]} : vector<2x4x32xf32> to vector<2x1x32xf32>
    %345 = vector.shape_cast %344 : vector<2x1x32xf32> to vector<2x32xf32>
    %346 = arith.negf %345 : vector<2x32xf32>
    %347 = math.exp %346 : vector<2x32xf32>
    %cst_92 = arith.constant 1.000000e+00 : f32
    %348 = vector.broadcast %cst_92 : f32 to vector<2x32xf32>
    %349 = arith.addf %348, %347 : vector<2x32xf32>
    %350 = arith.divf %348, %349 : vector<2x32xf32>
    %351 = arith.mulf %340, %275 : vector<2x32xf32>
    %352 = arith.mulf %333, %343 : vector<2x32xf32>
    %353 = arith.addf %351, %352 : vector<2x32xf32>
    %cst_93 = arith.constant dense<0.000000e+00> : vector<2xf32>
    %354 = vector.multi_reduction <add>, %353, %cst_93 [1] : vector<2x32xf32> to vector<2xf32>
    %355 = vector.shape_cast %354 : vector<2xf32> to vector<2x1xf32>
    %cst_94 = arith.constant 3.200000e+01 : f32
    %356 = vector.broadcast %cst_94 : f32 to vector<2x1xf32>
    %357 = arith.divf %355, %356 : vector<2x1xf32>
    %358 = vector.broadcast %357 : vector<2x1xf32> to vector<2x32xf32>
    %359 = arith.subf %353, %358 : vector<2x32xf32>
    %360 = arith.mulf %359, %359 : vector<2x32xf32>
    %cst_95 = arith.constant dense<0.000000e+00> : vector<2xf32>
    %361 = vector.multi_reduction <add>, %360, %cst_95 [1] : vector<2x32xf32> to vector<2xf32>
    %362 = vector.shape_cast %361 : vector<2xf32> to vector<2x1xf32>
    %cst_96 = arith.constant 3.200000e+01 : f32
    %363 = vector.broadcast %cst_96 : f32 to vector<2x1xf32>
    %364 = arith.divf %362, %363 : vector<2x1xf32>
    %365 = vector.broadcast %357 : vector<2x1xf32> to vector<2x32xf32>
    %366 = arith.subf %353, %365 : vector<2x32xf32>
    %cst_97 = arith.constant 9.99999974E-6 : f32
    %367 = vector.broadcast %cst_97 : f32 to vector<2x1xf32>
    %368 = arith.addf %364, %367 : vector<2x1xf32>
    %369 = math.rsqrt %368 : vector<2x1xf32>
    %370 = vector.broadcast %369 : vector<2x1xf32> to vector<2x32xf32>
    %371 = arith.mulf %366, %370 : vector<2x32xf32>
    %372 = math.tanh %371 : vector<2x32xf32>
    %373 = arith.mulf %350, %372 : vector<2x32xf32>
    %374 = vector.shape_cast %373 : vector<2x32xf32> to vector<2x1x32xf32>
    %cst_98 = arith.constant dense<0.000000e+00> : vector<2x1x128xf32>
    %375 = tpu.matmul %374, %4, %cst_98 {dimension_numbers = #tpu.dot_dimension_numbers<[2], [1], [1], [2], [0, 0, 0, 1, 1, 2], [0], [0]>} : vector<2x1x32xf32>, vector<2x32x128xf32>, vector<2x1x128xf32> -> vector<2x1x128xf32>
    %376 = vector.shape_cast %375 : vector<2x1x128xf32> to vector<2x4x32xf32>
    %377 = arith.addf %376, %5 : vector<2x4x32xf32>
    %cst_99 = arith.constant dense<0.000000e+00> : vector<2x4xf32>
    %378 = vector.multi_reduction <add>, %377, %cst_99 [2] : vector<2x4x32xf32> to vector<2x4xf32>
    %379 = vector.shape_cast %378 : vector<2x4xf32> to vector<2x4x1xf32>
    %cst_100 = arith.constant 3.200000e+01 : f32
    %380 = vector.broadcast %cst_100 : f32 to vector<2x4x1xf32>
    %381 = arith.divf %379, %380 : vector<2x4x1xf32>
    %382 = vector.broadcast %381 : vector<2x4x1xf32> to vector<2x4x32xf32>
    %383 = arith.subf %377, %382 : vector<2x4x32xf32>
    %384 = arith.mulf %383, %383 : vector<2x4x32xf32>
    %cst_101 = arith.constant dense<0.000000e+00> : vector<2x4xf32>
    %385 = vector.multi_reduction <add>, %384, %cst_101 [2] : vector<2x4x32xf32> to vector<2x4xf32>
    %386 = vector.shape_cast %385 : vector<2x4xf32> to vector<2x4x1xf32>
    %cst_102 = arith.constant 3.200000e+01 : f32
    %387 = vector.broadcast %cst_102 : f32 to vector<2x4x1xf32>
    %388 = arith.divf %386, %387 : vector<2x4x1xf32>
    %389 = vector.broadcast %381 : vector<2x4x1xf32> to vector<2x4x32xf32>
    %390 = arith.subf %377, %389 : vector<2x4x32xf32>
    %cst_103 = arith.constant 9.99999974E-6 : f32
    %391 = vector.broadcast %cst_103 : f32 to vector<2x4x1xf32>
    %392 = arith.addf %388, %391 : vector<2x4x1xf32>
    %393 = math.rsqrt %392 : vector<2x4x1xf32>
    %394 = vector.broadcast %393 : vector<2x4x1xf32> to vector<2x4x32xf32>
    %395 = arith.mulf %390, %394 : vector<2x4x32xf32>
    %396 = vector.extract_strided_slice %395 {offsets = [0, 0, 0], sizes = [2, 1, 32], strides = [1, 1, 1]} : vector<2x4x32xf32> to vector<2x1x32xf32>
    %397 = vector.shape_cast %396 : vector<2x1x32xf32> to vector<2x32xf32>
    %398 = arith.negf %397 : vector<2x32xf32>
    %399 = math.exp %398 : vector<2x32xf32>
    %cst_104 = arith.constant 1.000000e+00 : f32
    %400 = vector.broadcast %cst_104 : f32 to vector<2x32xf32>
    %401 = arith.addf %400, %399 : vector<2x32xf32>
    %402 = arith.divf %400, %401 : vector<2x32xf32>
    %403 = vector.extract_strided_slice %395 {offsets = [0, 1, 0], sizes = [2, 1, 32], strides = [1, 1, 1]} : vector<2x4x32xf32> to vector<2x1x32xf32>
    %404 = vector.shape_cast %403 : vector<2x1x32xf32> to vector<2x32xf32>
    %405 = arith.negf %404 : vector<2x32xf32>
    %406 = math.exp %405 : vector<2x32xf32>
    %cst_105 = arith.constant 1.000000e+00 : f32
    %407 = vector.broadcast %cst_105 : f32 to vector<2x32xf32>
    %408 = arith.addf %407, %406 : vector<2x32xf32>
    %409 = arith.divf %407, %408 : vector<2x32xf32>
    %410 = vector.extract_strided_slice %395 {offsets = [0, 2, 0], sizes = [2, 1, 32], strides = [1, 1, 1]} : vector<2x4x32xf32> to vector<2x1x32xf32>
    %411 = vector.shape_cast %410 : vector<2x1x32xf32> to vector<2x32xf32>
    %412 = math.tanh %411 : vector<2x32xf32>
    %413 = vector.extract_strided_slice %395 {offsets = [0, 3, 0], sizes = [2, 1, 32], strides = [1, 1, 1]} : vector<2x4x32xf32> to vector<2x1x32xf32>
    %414 = vector.shape_cast %413 : vector<2x1x32xf32> to vector<2x32xf32>
    %415 = arith.negf %414 : vector<2x32xf32>
    %416 = math.exp %415 : vector<2x32xf32>
    %cst_106 = arith.constant 1.000000e+00 : f32
    %417 = vector.broadcast %cst_106 : f32 to vector<2x32xf32>
    %418 = arith.addf %417, %416 : vector<2x32xf32>
    %419 = arith.divf %417, %418 : vector<2x32xf32>
    %420 = arith.mulf %409, %353 : vector<2x32xf32>
    %421 = arith.mulf %402, %412 : vector<2x32xf32>
    %422 = arith.addf %420, %421 : vector<2x32xf32>
    %cst_107 = arith.constant dense<0.000000e+00> : vector<2xf32>
    %423 = vector.multi_reduction <add>, %422, %cst_107 [1] : vector<2x32xf32> to vector<2xf32>
    %424 = vector.shape_cast %423 : vector<2xf32> to vector<2x1xf32>
    %cst_108 = arith.constant 3.200000e+01 : f32
    %425 = vector.broadcast %cst_108 : f32 to vector<2x1xf32>
    %426 = arith.divf %424, %425 : vector<2x1xf32>
    %427 = vector.broadcast %426 : vector<2x1xf32> to vector<2x32xf32>
    %428 = arith.subf %422, %427 : vector<2x32xf32>
    %429 = arith.mulf %428, %428 : vector<2x32xf32>
    %cst_109 = arith.constant dense<0.000000e+00> : vector<2xf32>
    %430 = vector.multi_reduction <add>, %429, %cst_109 [1] : vector<2x32xf32> to vector<2xf32>
    %431 = vector.shape_cast %430 : vector<2xf32> to vector<2x1xf32>
    %cst_110 = arith.constant 3.200000e+01 : f32
    %432 = vector.broadcast %cst_110 : f32 to vector<2x1xf32>
    %433 = arith.divf %431, %432 : vector<2x1xf32>
    %434 = vector.broadcast %426 : vector<2x1xf32> to vector<2x32xf32>
    %435 = arith.subf %422, %434 : vector<2x32xf32>
    %cst_111 = arith.constant 9.99999974E-6 : f32
    %436 = vector.broadcast %cst_111 : f32 to vector<2x1xf32>
    %437 = arith.addf %433, %436 : vector<2x1xf32>
    %438 = math.rsqrt %437 : vector<2x1xf32>
    %439 = vector.broadcast %438 : vector<2x1xf32> to vector<2x32xf32>
    %440 = arith.mulf %435, %439 : vector<2x32xf32>
    %441 = math.tanh %440 : vector<2x32xf32>
    %442 = arith.mulf %419, %441 : vector<2x32xf32>
    %c4_i32_112 = arith.constant 4 : i32
    %443 = arith.muli %arg1, %c4_i32_112 : i32
    %444 = arith.addi %443, %c2_i32 : i32
    %c10_i32_113 = arith.constant 10 : i32
    %445 = arith.subi %444, %c10_i32_113 : i32
    %c0_i32_114 = arith.constant 0 : i32
    %446 = arith.cmpi sge, %445, %c0_i32_114 : i32
    %447 = arith.extui %446 : i1 to i32
    %c0_i32_115 = arith.constant 0 : i32
    %448 = arith.cmpi ne, %447, %c0_i32_115 : i32
    scf.if %448 {
      %601 = arith.index_cast %445 : i32 to index
      %c0_158 = arith.constant 0 : index
      %c0_159 = arith.constant 0 : index
      %602 = vector.load %arg11[%601, %c0_158, %c0_159] : memref<6x2x32xf32, #tpu.memory_space<vmem>>, vector<1x2x32xf32>
      %603 = vector.shape_cast %602 : vector<1x2x32xf32> to vector<2x32xf32>
      %604 = vector.shape_cast %442 : vector<2x32xf32> to vector<1x2x32xf32>
      tpu.vector_store %arg11[%601, %c0_158, %c0_159], %604 {strides = array<i32>} : memref<6x2x32xf32, #tpu.memory_space<vmem>>, vector<1x2x32xf32>,
    } else {
    }
    %c3_i32 = arith.constant 3 : i32
    %449 = vector.shape_cast %442 : vector<2x32xf32> to vector<2x1x32xf32>
    %cst_116 = arith.constant dense<0.000000e+00> : vector<2x1x128xf32>
    %450 = tpu.matmul %449, %3, %cst_116 {dimension_numbers = #tpu.dot_dimension_numbers<[2], [1], [1], [2], [0, 0, 0, 1, 1, 2], [0], [0]>} : vector<2x1x32xf32>, vector<2x32x128xf32>, vector<2x1x128xf32> -> vector<2x1x128xf32>
    %451 = vector.shape_cast %450 : vector<2x1x128xf32> to vector<2x4x32xf32>
    %452 = arith.index_cast %c3_i32 : i32 to index
    %c0_117 = arith.constant 0 : index
    %c0_118 = arith.constant 0 : index
    %c0_119 = arith.constant 0 : index
    %453 = vector.load %arg2[%452, %c0_117, %c0_118, %c0_119] : memref<4x2x4x32xf32, #tpu.memory_space<vmem>>, vector<1x2x4x32xf32>
    %454 = vector.shape_cast %453 : vector<1x2x4x32xf32> to vector<2x4x32xf32>
    %455 = arith.addf %451, %454 : vector<2x4x32xf32>
    %cst_120 = arith.constant dense<0.000000e+00> : vector<2x4xf32>
    %456 = vector.multi_reduction <add>, %455, %cst_120 [2] : vector<2x4x32xf32> to vector<2x4xf32>
    %457 = vector.shape_cast %456 : vector<2x4xf32> to vector<2x4x1xf32>
    %cst_121 = arith.constant 3.200000e+01 : f32
    %458 = vector.broadcast %cst_121 : f32 to vector<2x4x1xf32>
    %459 = arith.divf %457, %458 : vector<2x4x1xf32>
    %460 = vector.broadcast %459 : vector<2x4x1xf32> to vector<2x4x32xf32>
    %461 = arith.subf %455, %460 : vector<2x4x32xf32>
    %462 = arith.mulf %461, %461 : vector<2x4x32xf32>
    %cst_122 = arith.constant dense<0.000000e+00> : vector<2x4xf32>
    %463 = vector.multi_reduction <add>, %462, %cst_122 [2] : vector<2x4x32xf32> to vector<2x4xf32>
    %464 = vector.shape_cast %463 : vector<2x4xf32> to vector<2x4x1xf32>
    %cst_123 = arith.constant 3.200000e+01 : f32
    %465 = vector.broadcast %cst_123 : f32 to vector<2x4x1xf32>
    %466 = arith.divf %464, %465 : vector<2x4x1xf32>
    %467 = vector.broadcast %459 : vector<2x4x1xf32> to vector<2x4x32xf32>
    %468 = arith.subf %455, %467 : vector<2x4x32xf32>
    %cst_124 = arith.constant 9.99999974E-6 : f32
    %469 = vector.broadcast %cst_124 : f32 to vector<2x4x1xf32>
    %470 = arith.addf %466, %469 : vector<2x4x1xf32>
    %471 = math.rsqrt %470 : vector<2x4x1xf32>
    %472 = vector.broadcast %471 : vector<2x4x1xf32> to vector<2x4x32xf32>
    %473 = arith.mulf %468, %472 : vector<2x4x32xf32>
    %474 = vector.extract_strided_slice %473 {offsets = [0, 0, 0], sizes = [2, 1, 32], strides = [1, 1, 1]} : vector<2x4x32xf32> to vector<2x1x32xf32>
    %475 = vector.shape_cast %474 : vector<2x1x32xf32> to vector<2x32xf32>
    %476 = arith.negf %475 : vector<2x32xf32>
    %477 = math.exp %476 : vector<2x32xf32>
    %cst_125 = arith.constant 1.000000e+00 : f32
    %478 = vector.broadcast %cst_125 : f32 to vector<2x32xf32>
    %479 = arith.addf %478, %477 : vector<2x32xf32>
    %480 = arith.divf %478, %479 : vector<2x32xf32>
    %481 = vector.extract_strided_slice %473 {offsets = [0, 1, 0], sizes = [2, 1, 32], strides = [1, 1, 1]} : vector<2x4x32xf32> to vector<2x1x32xf32>
    %482 = vector.shape_cast %481 : vector<2x1x32xf32> to vector<2x32xf32>
    %483 = arith.negf %482 : vector<2x32xf32>
    %484 = math.exp %483 : vector<2x32xf32>
    %cst_126 = arith.constant 1.000000e+00 : f32
    %485 = vector.broadcast %cst_126 : f32 to vector<2x32xf32>
    %486 = arith.addf %485, %484 : vector<2x32xf32>
    %487 = arith.divf %485, %486 : vector<2x32xf32>
    %488 = vector.extract_strided_slice %473 {offsets = [0, 2, 0], sizes = [2, 1, 32], strides = [1, 1, 1]} : vector<2x4x32xf32> to vector<2x1x32xf32>
    %489 = vector.shape_cast %488 : vector<2x1x32xf32> to vector<2x32xf32>
    %490 = math.tanh %489 : vector<2x32xf32>
    %491 = vector.extract_strided_slice %473 {offsets = [0, 3, 0], sizes = [2, 1, 32], strides = [1, 1, 1]} : vector<2x4x32xf32> to vector<2x1x32xf32>
    %492 = vector.shape_cast %491 : vector<2x1x32xf32> to vector<2x32xf32>
    %493 = arith.negf %492 : vector<2x32xf32>
    %494 = math.exp %493 : vector<2x32xf32>
    %cst_127 = arith.constant 1.000000e+00 : f32
    %495 = vector.broadcast %cst_127 : f32 to vector<2x32xf32>
    %496 = arith.addf %495, %494 : vector<2x32xf32>
    %497 = arith.divf %495, %496 : vector<2x32xf32>
    %498 = arith.mulf %487, %422 : vector<2x32xf32>
    %499 = arith.mulf %480, %490 : vector<2x32xf32>
    %500 = arith.addf %498, %499 : vector<2x32xf32>
    %cst_128 = arith.constant dense<0.000000e+00> : vector<2xf32>
    %501 = vector.multi_reduction <add>, %500, %cst_128 [1] : vector<2x32xf32> to vector<2xf32>
    %502 = vector.shape_cast %501 : vector<2xf32> to vector<2x1xf32>
    %cst_129 = arith.constant 3.200000e+01 : f32
    %503 = vector.broadcast %cst_129 : f32 to vector<2x1xf32>
    %504 = arith.divf %502, %503 : vector<2x1xf32>
    %505 = vector.broadcast %504 : vector<2x1xf32> to vector<2x32xf32>
    %506 = arith.subf %500, %505 : vector<2x32xf32>
    %507 = arith.mulf %506, %506 : vector<2x32xf32>
    %cst_130 = arith.constant dense<0.000000e+00> : vector<2xf32>
    %508 = vector.multi_reduction <add>, %507, %cst_130 [1] : vector<2x32xf32> to vector<2xf32>
    %509 = vector.shape_cast %508 : vector<2xf32> to vector<2x1xf32>
    %cst_131 = arith.constant 3.200000e+01 : f32
    %510 = vector.broadcast %cst_131 : f32 to vector<2x1xf32>
    %511 = arith.divf %509, %510 : vector<2x1xf32>
    %512 = vector.broadcast %504 : vector<2x1xf32> to vector<2x32xf32>
    %513 = arith.subf %500, %512 : vector<2x32xf32>
    %cst_132 = arith.constant 9.99999974E-6 : f32
    %514 = vector.broadcast %cst_132 : f32 to vector<2x1xf32>
    %515 = arith.addf %511, %514 : vector<2x1xf32>
    %516 = math.rsqrt %515 : vector<2x1xf32>
    %517 = vector.broadcast %516 : vector<2x1xf32> to vector<2x32xf32>
    %518 = arith.mulf %513, %517 : vector<2x32xf32>
    %519 = math.tanh %518 : vector<2x32xf32>
    %520 = arith.mulf %497, %519 : vector<2x32xf32>
    %521 = vector.shape_cast %520 : vector<2x32xf32> to vector<2x1x32xf32>
    %cst_133 = arith.constant dense<0.000000e+00> : vector<2x1x128xf32>
    %522 = tpu.matmul %521, %4, %cst_133 {dimension_numbers = #tpu.dot_dimension_numbers<[2], [1], [1], [2], [0, 0, 0, 1, 1, 2], [0], [0]>} : vector<2x1x32xf32>, vector<2x32x128xf32>, vector<2x1x128xf32> -> vector<2x1x128xf32>
    %523 = vector.shape_cast %522 : vector<2x1x128xf32> to vector<2x4x32xf32>
    %524 = arith.addf %523, %5 : vector<2x4x32xf32>
    %cst_134 = arith.constant dense<0.000000e+00> : vector<2x4xf32>
    %525 = vector.multi_reduction <add>, %524, %cst_134 [2] : vector<2x4x32xf32> to vector<2x4xf32>
    %526 = vector.shape_cast %525 : vector<2x4xf32> to vector<2x4x1xf32>
    %cst_135 = arith.constant 3.200000e+01 : f32
    %527 = vector.broadcast %cst_135 : f32 to vector<2x4x1xf32>
    %528 = arith.divf %526, %527 : vector<2x4x1xf32>
    %529 = vector.broadcast %528 : vector<2x4x1xf32> to vector<2x4x32xf32>
    %530 = arith.subf %524, %529 : vector<2x4x32xf32>
    %531 = arith.mulf %530, %530 : vector<2x4x32xf32>
    %cst_136 = arith.constant dense<0.000000e+00> : vector<2x4xf32>
    %532 = vector.multi_reduction <add>, %531, %cst_136 [2] : vector<2x4x32xf32> to vector<2x4xf32>
    %533 = vector.shape_cast %532 : vector<2x4xf32> to vector<2x4x1xf32>
    %cst_137 = arith.constant 3.200000e+01 : f32
    %534 = vector.broadcast %cst_137 : f32 to vector<2x4x1xf32>
    %535 = arith.divf %533, %534 : vector<2x4x1xf32>
    %536 = vector.broadcast %528 : vector<2x4x1xf32> to vector<2x4x32xf32>
    %537 = arith.subf %524, %536 : vector<2x4x32xf32>
    %cst_138 = arith.constant 9.99999974E-6 : f32
    %538 = vector.broadcast %cst_138 : f32 to vector<2x4x1xf32>
    %539 = arith.addf %535, %538 : vector<2x4x1xf32>
    %540 = math.rsqrt %539 : vector<2x4x1xf32>
    %541 = vector.broadcast %540 : vector<2x4x1xf32> to vector<2x4x32xf32>
    %542 = arith.mulf %537, %541 : vector<2x4x32xf32>
    %543 = vector.extract_strided_slice %542 {offsets = [0, 0, 0], sizes = [2, 1, 32], strides = [1, 1, 1]} : vector<2x4x32xf32> to vector<2x1x32xf32>
    %544 = vector.shape_cast %543 : vector<2x1x32xf32> to vector<2x32xf32>
    %545 = arith.negf %544 : vector<2x32xf32>
    %546 = math.exp %545 : vector<2x32xf32>
    %cst_139 = arith.constant 1.000000e+00 : f32
    %547 = vector.broadcast %cst_139 : f32 to vector<2x32xf32>
    %548 = arith.addf %547, %546 : vector<2x32xf32>
    %549 = arith.divf %547, %548 : vector<2x32xf32>
    %550 = vector.extract_strided_slice %542 {offsets = [0, 1, 0], sizes = [2, 1, 32], strides = [1, 1, 1]} : vector<2x4x32xf32> to vector<2x1x32xf32>
    %551 = vector.shape_cast %550 : vector<2x1x32xf32> to vector<2x32xf32>
    %552 = arith.negf %551 : vector<2x32xf32>
    %553 = math.exp %552 : vector<2x32xf32>
    %cst_140 = arith.constant 1.000000e+00 : f32
    %554 = vector.broadcast %cst_140 : f32 to vector<2x32xf32>
    %555 = arith.addf %554, %553 : vector<2x32xf32>
    %556 = arith.divf %554, %555 : vector<2x32xf32>
    %557 = vector.extract_strided_slice %542 {offsets = [0, 2, 0], sizes = [2, 1, 32], strides = [1, 1, 1]} : vector<2x4x32xf32> to vector<2x1x32xf32>
    %558 = vector.shape_cast %557 : vector<2x1x32xf32> to vector<2x32xf32>
    %559 = math.tanh %558 : vector<2x32xf32>
    %560 = vector.extract_strided_slice %542 {offsets = [0, 3, 0], sizes = [2, 1, 32], strides = [1, 1, 1]} : vector<2x4x32xf32> to vector<2x1x32xf32>
    %561 = vector.shape_cast %560 : vector<2x1x32xf32> to vector<2x32xf32>
    %562 = arith.negf %561 : vector<2x32xf32>
    %563 = math.exp %562 : vector<2x32xf32>
    %cst_141 = arith.constant 1.000000e+00 : f32
    %564 = vector.broadcast %cst_141 : f32 to vector<2x32xf32>
    %565 = arith.addf %564, %563 : vector<2x32xf32>
    %566 = arith.divf %564, %565 : vector<2x32xf32>
    %567 = arith.mulf %556, %500 : vector<2x32xf32>
    %568 = arith.mulf %549, %559 : vector<2x32xf32>
    %569 = arith.addf %567, %568 : vector<2x32xf32>
    %cst_142 = arith.constant dense<0.000000e+00> : vector<2xf32>
    %570 = vector.multi_reduction <add>, %569, %cst_142 [1] : vector<2x32xf32> to vector<2xf32>
    %571 = vector.shape_cast %570 : vector<2xf32> to vector<2x1xf32>
    %cst_143 = arith.constant 3.200000e+01 : f32
    %572 = vector.broadcast %cst_143 : f32 to vector<2x1xf32>
    %573 = arith.divf %571, %572 : vector<2x1xf32>
    %574 = vector.broadcast %573 : vector<2x1xf32> to vector<2x32xf32>
    %575 = arith.subf %569, %574 : vector<2x32xf32>
    %576 = arith.mulf %575, %575 : vector<2x32xf32>
    %cst_144 = arith.constant dense<0.000000e+00> : vector<2xf32>
    %577 = vector.multi_reduction <add>, %576, %cst_144 [1] : vector<2x32xf32> to vector<2xf32>
    %578 = vector.shape_cast %577 : vector<2xf32> to vector<2x1xf32>
    %cst_145 = arith.constant 3.200000e+01 : f32
    %579 = vector.broadcast %cst_145 : f32 to vector<2x1xf32>
    %580 = arith.divf %578, %579 : vector<2x1xf32>
    %581 = vector.broadcast %573 : vector<2x1xf32> to vector<2x32xf32>
    %582 = arith.subf %569, %581 : vector<2x32xf32>
    %cst_146 = arith.constant 9.99999974E-6 : f32
    %583 = vector.broadcast %cst_146 : f32 to vector<2x1xf32>
    %584 = arith.addf %580, %583 : vector<2x1xf32>
    %585 = math.rsqrt %584 : vector<2x1xf32>
    %586 = vector.broadcast %585 : vector<2x1xf32> to vector<2x32xf32>
    %587 = arith.mulf %582, %586 : vector<2x32xf32>
    %588 = math.tanh %587 : vector<2x32xf32>
    %589 = arith.mulf %566, %588 : vector<2x32xf32>
    %c4_i32_147 = arith.constant 4 : i32
    %590 = arith.muli %arg1, %c4_i32_147 : i32
    %591 = arith.addi %590, %c3_i32 : i32
    %c10_i32_148 = arith.constant 10 : i32
    %592 = arith.subi %591, %c10_i32_148 : i32
    %c0_i32_149 = arith.constant 0 : i32
    %593 = arith.cmpi sge, %592, %c0_i32_149 : i32
    %594 = arith.extui %593 : i1 to i32
    %c0_i32_150 = arith.constant 0 : i32
    %595 = arith.cmpi ne, %594, %c0_i32_150 : i32
    scf.if %595 {
      %601 = arith.index_cast %592 : i32 to index
      %c0_158 = arith.constant 0 : index
      %c0_159 = arith.constant 0 : index
      %602 = vector.load %arg11[%601, %c0_158, %c0_159] : memref<6x2x32xf32, #tpu.memory_space<vmem>>, vector<1x2x32xf32>
      %603 = vector.shape_cast %602 : vector<1x2x32xf32> to vector<2x32xf32>
      %604 = vector.shape_cast %589 : vector<2x32xf32> to vector<1x2x32xf32>
      tpu.vector_store %arg11[%601, %c0_158, %c0_159], %604 {strides = array<i32>} : memref<6x2x32xf32, #tpu.memory_space<vmem>>, vector<1x2x32xf32>,
    } else {
    }
    %c4_i32_151 = arith.constant 4 : i32
    %c0_152 = arith.constant 0 : index
    %c0_153 = arith.constant 0 : index
    %596 = vector.load %arg9[%c0_152, %c0_153] : memref<2x32xf32, #tpu.memory_space<vmem>>, vector<2x32xf32>
    tpu.vector_store %arg9[%c0_152, %c0_153], %589 {strides = array<i32>} : memref<2x32xf32, #tpu.memory_space<vmem>>, vector<2x32xf32>,
    %c0_154 = arith.constant 0 : index
    %c0_155 = arith.constant 0 : index
    %597 = vector.load %arg10[%c0_154, %c0_155] : memref<2x32xf32, #tpu.memory_space<vmem>>, vector<2x32xf32>
    tpu.vector_store %arg10[%c0_154, %c0_155], %569 {strides = array<i32>} : memref<2x32xf32, #tpu.memory_space<vmem>>, vector<2x32xf32>,
    %c3_i32_156 = arith.constant 3 : i32
    %598 = arith.cmpi eq, %arg1, %c3_i32_156 : i32
    %599 = arith.extui %598 : i1 to i32
    %c0_i32_157 = arith.constant 0 : i32
    %600 = arith.cmpi ne, %599, %c0_i32_157 : i32
    scf.if %600 {
      %c0_158 = arith.constant 0 : index
      %c0_159 = arith.constant 0 : index
      %c0_160 = arith.constant 0 : index
      %601 = vector.load %arg11[%c0_158, %c0_159, %c0_160] : memref<6x2x32xf32, #tpu.memory_space<vmem>>, vector<6x2x32xf32>
      %c0_161 = arith.constant 0 : index
      %c0_162 = arith.constant 0 : index
      %c0_163 = arith.constant 0 : index
      %602 = vector.load %arg6[%c0_161, %c0_162, %c0_163] : memref<2x32x128xf32, #tpu.memory_space<vmem>>, vector<2x32x128xf32>
      %cst_164 = arith.constant dense<0.000000e+00> : vector<2x6x128xf32>
      %603 = tpu.matmul %601, %602, %cst_164 {dimension_numbers = #tpu.dot_dimension_numbers<[2], [1], [0], [2], [0, 1, 0, 0, 1, 2], [1], [0]>} : vector<6x2x32xf32>, vector<2x32x128xf32>, vector<2x6x128xf32> -> vector<2x6x128xf32>
      %c0_165 = arith.constant 0 : index
      %c0_166 = arith.constant 0 : index
      %c0_167 = arith.constant 0 : index
      %604 = vector.load %arg7[%c0_165, %c0_166, %c0_167] : memref<2x1x128xf32, #tpu.memory_space<vmem>>, vector<2x1x128xf32>
      %605 = vector.broadcast %604 : vector<2x1x128xf32> to vector<2x6x128xf32>
      %606 = arith.addf %603, %605 : vector<2x6x128xf32>
      %c0_168 = arith.constant 0 : index
      %c0_169 = arith.constant 0 : index
      %c0_170 = arith.constant 0 : index
      %607 = vector.load %arg8[%c0_168, %c0_169, %c0_170] : memref<2x6x128xf32, #tpu.memory_space<vmem>>, vector<2x6x128xf32>
      tpu.vector_store %arg8[%c0_168, %c0_169, %c0_170], %606 {strides = array<i32>} : memref<2x6x128xf32, #tpu.memory_space<vmem>>, vector<2x6x128xf32>,
    } else {
    }
    return
  }
  func.func @transform_0(%arg0: i32, %arg1: i32) -> (i32, i32, i32, i32) {
    %c0_i32 = arith.constant 0 : i32
    %c0_i32_0 = arith.constant 0 : i32
    %c0_i32_1 = arith.constant 0 : i32
    return %arg1, %arg0, %c0_i32, %c0_i32_0 : i32, i32, i32, i32
  }
  func.func @transform_1(%arg0: i32, %arg1: i32) -> (i32, i32, i32) {
    %c0_i32 = arith.constant 0 : i32
    %c0_i32_0 = arith.constant 0 : i32
    %c0_i32_1 = arith.constant 0 : i32
    return %arg0, %c0_i32, %c0_i32_0 : i32, i32, i32
  }
  func.func @transform_2(%arg0: i32, %arg1: i32) -> (i32, i32, i32) {
    %c0_i32 = arith.constant 0 : i32
    %c0_i32_0 = arith.constant 0 : i32
    %c0_i32_1 = arith.constant 0 : i32
    return %arg0, %c0_i32, %c0_i32_0 : i32, i32, i32
  }
  func.func @transform_3(%arg0: i32, %arg1: i32) -> (i32, i32, i32) {
    %c0_i32 = arith.constant 0 : i32
    %c0_i32_0 = arith.constant 0 : i32
    %c0_i32_1 = arith.constant 0 : i32
    return %arg0, %c0_i32, %c0_i32_0 : i32, i32, i32
  }
  func.func @transform_4(%arg0: i32, %arg1: i32) -> (i32, i32, i32) {
    %c0_i32 = arith.constant 0 : i32
    %c0_i32_0 = arith.constant 0 : i32
    %c0_i32_1 = arith.constant 0 : i32
    return %arg0, %c0_i32, %c0_i32_0 : i32, i32, i32
  }
  func.func @transform_5(%arg0: i32, %arg1: i32) -> (i32, i32, i32) {
    %c0_i32 = arith.constant 0 : i32
    %c0_i32_0 = arith.constant 0 : i32
    %c0_i32_1 = arith.constant 0 : i32
    return %arg0, %c0_i32, %c0_i32_0 : i32, i32, i32
  }
  func.func @transform_6(%arg0: i32, %arg1: i32) -> (i32, i32, i32) {
    %c0_i32 = arith.constant 0 : i32
    %c0_i32_0 = arith.constant 0 : i32
    %c0_i32_1 = arith.constant 0 : i32
    return %arg0, %c0_i32, %c0_i32_0 : i32, i32, i32
  }
}

</mosaic_0001>

<llo_original>
// kernel: tpu_custom_call.1
$region0: #{tpu_custom_call.1}
  #allocation0 [shape = 'u32[]', space=smem, size = 0x4, offset = 0x4, fixed_abs, tag = 'smem constant byte address 0x4 - core index']
  #allocation1 [shape = 'u32[144,128]{1,0:T(1,128)}', space=vmem, size = 0x12000, scoped, tag = 'internal scratch']
  #allocation2 [shape = 'f32[2,32]{1,0:T(2,128)}', space=vmem, size = 0x400, scoped, tag = 'scratch operand']
  #allocation3 [shape = 'f32[2,32]{1,0:T(2,128)}', space=vmem, size = 0x400, scoped, tag = 'scratch operand']
  #allocation4 [shape = 'f32[6,2,32]{2,1,0:T(2,128)}', space=vmem, size = 0x1800, scoped, tag = 'scratch operand']
  %s0 = inlined_call_operand.hbm [shape: f32[16,2,4,32], index: 0, kind: input, shape index: {}]
  %s1 = inlined_call_operand.hbm [shape: f32[2,32,128], index: 1, kind: input, shape index: {}]
  %s2 = inlined_call_operand.hbm [shape: f32[2,32,128], index: 2, kind: input, shape index: {}]
  %s3 = inlined_call_operand.hbm [shape: f32[2,4,32], index: 3, kind: input, shape index: {}]
  %s4 = inlined_call_operand.hbm [shape: f32[2,32,128], index: 4, kind: input, shape index: {}]
  %s5 = inlined_call_operand.vmem [shape: f32[2,1,128], index: 5, kind: input, shape index: {}]
  %s6 = inlined_call_operand.vmem [shape: f32[2,6,128], index: 6, kind: output, shape index: {}]
  %s7 = sld [smem:[#allocation0]]
  $region101: #{tpu_custom_call.1} parent=0
    _
  %s9 = ssub.s32 1, %s7
  %s10 = scalar_select 0, %s9, %s7
  $region1: #{tpu_custom_call.1} parent=0
    #allocation5 [shape = 'u8[32768]{0}', space=vmem, size = 0x8000, scoped, tag = 'input window, operand 0']
    #allocation6 [shape = 's32[2]{0}', space=sflag, size = 0x8, scoped, tag = 'scoped memory for tpu_custom_call.1']
    #allocation7 [shape = 'u8[32768]{0}', space=vmem, size = 0x8000, scoped, tag = 'input window, operand 1, single buffered']
    #allocation8 [shape = 's32[1]{0}', space=sflag, size = 0x4, scoped, tag = 'scoped memory for tpu_custom_call.1']
    #allocation9 [shape = 'u8[32768]{0}', space=vmem, size = 0x8000, scoped, tag = 'input window, operand 2, single buffered']
    #allocation10 [shape = 'u8[4096]{0}', space=vmem, size = 0x1000, scoped, tag = 'input window, operand 3, single buffered']
    #allocation11 [shape = 's32[1]{0}', space=sflag, size = 0x4, scoped, tag = 'scoped memory for tpu_custom_call.1']
    #allocation12 [shape = 'u8[32768]{0}', space=vmem, size = 0x8000, scoped, tag = 'input window, operand 4, single buffered']
    %11 = vsyncpa [#allocation6], 0
    %s12 = scalar_lea.sflag [#allocation6], 1
    %13 = vsyncpa %s12, 0
    %14 = vsyncpa [#allocation8], 0
    %15 = vsyncpa [#allocation11], 0
    loop: start=0, step=1, limit=6
    $region2: #{tpu_custom_call.1} parent=1 // loop_pre_header
      _
    $region3: #{tpu_custom_call.1} parent=1 // loop_header
      %s17 = sphi 0, %s21
      %p18 = scmp.ge.s32.totalorder %s17, 6
      %s24 = sphi 0, %s36
      %s25 = sphi 0, %s32
      %s26 = sphi 0, %s24
      %s27 = sphi 0, %s25
      %s28 = sphi 0, %s26
      %s29 = sphi 0, %s27
      %s41 = sphi 0, %s43
      %s44 = sphi 0, %s41
      %s45 = sphi 0, %s44
      %s61 = sphi 0, %s45
      %s67 = sphi 0, %s69
      %s70 = sphi 0, %s67
      %s71 = sphi 0, %s70
      %s87 = sphi 0, %s71
      %s93 = sphi 0, %s95
      %s96 = sphi 0, %s93
      %s97 = sphi 0, %s96
      %s113 = sphi 0, %s97
      %s119 = sphi 0, %s121
      %s122 = sphi 0, %s119
      %s123 = sphi 0, %s122
      %s139 = sphi 0, %s123
      %s145 = sphi 0, %s147
      %s148 = sphi 0, %s145
      %s149 = sphi 0, %s148
      %s165 = sphi 0, %s149
      %s171 = sphi 0, %s173
      %s174 = sphi 0, %s171
      %s175 = sphi 0, %s174
      %s191 = sphi 0, %s175
      %s197 = sphi 0, %s199
      %s200 = sphi 0, %s197
      %s201 = sphi 0, %s200
      %s217 = sphi 0, %s201
    $region4: #{tpu_custom_call.1} parent=1 // loop_header_branch
      %20 = sbr.rel (%p18) target = $region8
    $region5: #{tpu_custom_call.1} parent=1 // loop_body
      %s22 = ssub.s32 %s17, 1
      %s23 = ssub.s32 %s17, 2
      %s30 = sadd.s32 1, %s25
      %p31 = scmp.ge.s32.totalorder %s30, 4
      %s32 = scalar_select %p31, 0, %s30
      %s33 = sadd.s32 1, %s24
      %s34 = scalar_select %p31, %s33, %s24
      %p35 = scmp.ge.s32.totalorder %s34, 1
      %s36 = scalar_select %p35, 0, %s34
      %s37 = ssub.s32 %s25, %s32
      %s38 = ssub.s32 %s24, %s36
      %s39 = sor.u32 %s37, %s38
      %p40 = scmp.eq.s32.totalorder %s39, 0
      %s42 = sadd.s32 %s41, 1
      %s43 = scalar_select %p40, %s41, %s42
      %p46 = pneg %p40
      %p47 = scmp.eq.s32.totalorder %s17, 3
      %p48 = por %p46, %p47
      %p49 = scmp.ne.s32.totalorder %s41, %s44
      %p50 = scmp.eq.s32.totalorder %s17, 0
      %p51 = por %p49, %p50
      %p52 = scmp.ne.s32.totalorder %s41, %s44
      %p53 = scmp.eq.s32.totalorder %s22, 3
      %p54 = por %p52, %p53
      %p55 = scmp.ne.s32.totalorder %s44, %s45
      %p56 = scmp.eq.s32.totalorder %s22, 0
      %p57 = por %p55, %p56
      %p58 = scmp.ne.s32.totalorder %s44, %s45
      %p59 = scmp.eq.s32.totalorder %s23, 3
      %p60 = por %p58, %p59
      %p62 = scmp.ne.s32.totalorder %s45, %s61
      %p63 = scmp.eq.s32.totalorder %s23, 0
      %p64 = por %p62, %p63
      %s65 = ssub.s32 %s24, %s36
      %p66 = scmp.eq.s32.totalorder %s65, 0
      %s68 = sadd.s32 %s67, 1
      %s69 = scalar_select %p66, %s67, %s68
      %p72 = pneg %p66
      %p73 = scmp.eq.s32.totalorder %s17, 3
      %p74 = por %p72, %p73
      %p75 = scmp.ne.s32.totalorder %s67, %s70
      %p76 = scmp.eq.s32.totalorder %s17, 0
      %p77 = por %p75, %p76
      %p78 = scmp.ne.s32.totalorder %s67, %s70
      %p79 = scmp.eq.s32.totalorder %s22, 3
      %p80 = por %p78, %p79
      %p81 = scmp.ne.s32.totalorder %s70, %s71
      %p82 = scmp.eq.s32.totalorder %s22, 0
      %p83 = por %p81, %p82
      %p84 = scmp.ne.s32.totalorder %s70, %s71
      %p85 = scmp.eq.s32.totalorder %s23, 3
      %p86 = por %p84, %p85
      %p88 = scmp.ne.s32.totalorder %s71, %s87
      %p89 = scmp.eq.s32.totalorder %s23, 0
      %p90 = por %p88, %p89
      %s91 = ssub.s32 %s24, %s36
      %p92 = scmp.eq.s32.totalorder %s91, 0
      %s94 = sadd.s32 %s93, 1
      %s95 = scalar_select %p92, %s93, %s94
      %p98 = pneg %p92
      %p99 = scmp.eq.s32.totalorder %s17, 3
      %p100 = por %p98, %p99
      %p101 = scmp.ne.s32.totalorder %s93, %s96
      %p102 = scmp.eq.s32.totalorder %s17, 0
      %p103 = por %p101, %p102
      %p104 = scmp.ne.s32.totalorder %s93, %s96
      %p105 = scmp.eq.s32.totalorder %s22, 3
      %p106 = por %p104, %p105
      %p107 = scmp.ne.s32.totalorder %s96, %s97
      %p108 = scmp.eq.s32.totalorder %s22, 0
      %p109 = por %p107, %p108
      %p110 = scmp.ne.s32.totalorder %s96, %s97
      %p111 = scmp.eq.s32.totalorder %s23, 3
      %p112 = por %p110, %p111
      %p114 = scmp.ne.s32.totalorder %s97, %s113
      %p115 = scmp.eq.s32.totalorder %s23, 0
      %p116 = por %p114, %p115
      %s117 = ssub.s32 %s24, %s36
      %p118 = scmp.eq.s32.totalorder %s117, 0
      %s120 = sadd.s32 %s119, 1
      %s121 = scalar_select %p118, %s119, %s120
      %p124 = pneg %p118
      %p125 = scmp.eq.s32.totalorder %s17, 3
      %p126 = por %p124, %p125
      %p127 = scmp.ne.s32.totalorder %s119, %s122
      %p128 = scmp.eq.s32.totalorder %s17, 0
      %p129 = por %p127, %p128
      %p130 = scmp.ne.s32.totalorder %s119, %s122
      %p131 = scmp.eq.s32.totalorder %s22, 3
      %p132 = por %p130, %p131
      %p133 = scmp.ne.s32.totalorder %s122, %s123
      %p134 = scmp.eq.s32.totalorder %s22, 0
      %p135 = por %p133, %p134
      %p136 = scmp.ne.s32.totalorder %s122, %s123
      %p137 = scmp.eq.s32.totalorder %s23, 3
      %p138 = por %p136, %p137
      %p140 = scmp.ne.s32.totalorder %s123, %s139
      %p141 = scmp.eq.s32.totalorder %s23, 0
      %p142 = por %p140, %p141
      %s143 = ssub.s32 %s24, %s36
      %p144 = scmp.eq.s32.totalorder %s143, 0
      %s146 = sadd.s32 %s145, 1
      %s147 = scalar_select %p144, %s145, %s146
      %p150 = pneg %p144
      %p151 = scmp.eq.s32.totalorder %s17, 3
      %p152 = por %p150, %p151
      %p153 = scmp.ne.s32.totalorder %s145, %s148
      %p154 = scmp.eq.s32.totalorder %s17, 0
      %p155 = por %p153, %p154
      %p156 = scmp.ne.s32.totalorder %s145, %s148
      %p157 = scmp.eq.s32.totalorder %s22, 3
      %p158 = por %p156, %p157
      %p159 = scmp.ne.s32.totalorder %s148, %s149
      %p160 = scmp.eq.s32.totalorder %s22, 0
      %p161 = por %p159, %p160
      %p162 = scmp.ne.s32.totalorder %s148, %s149
      %p163 = scmp.eq.s32.totalorder %s23, 3
      %p164 = por %p162, %p163
      %p166 = scmp.ne.s32.totalorder %s149, %s165
      %p167 = scmp.eq.s32.totalorder %s23, 0
      %p168 = por %p166, %p167
      %s169 = ssub.s32 %s24, %s36
      %p170 = scmp.eq.s32.totalorder %s169, 0
      %s172 = sadd.s32 %s171, 1
      %s173 = scalar_select %p170, %s171, %s172
      %p176 = pneg %p170
      %p177 = scmp.eq.s32.totalorder %s17, 3
      %p178 = por %p176, %p177
      %p179 = scmp.ne.s32.totalorder %s171, %s174
      %p180 = scmp.eq.s32.totalorder %s17, 0
      %p181 = por %p179, %p180
      %p182 = scmp.ne.s32.totalorder %s171, %s174
      %p183 = scmp.eq.s32.totalorder %s22, 3
      %p184 = por %p182, %p183
      %p185 = scmp.ne.s32.totalorder %s174, %s175
      %p186 = scmp.eq.s32.totalorder %s22, 0
      %p187 = por %p185, %p186
      %p188 = scmp.ne.s32.totalorder %s174, %s175
      %p189 = scmp.eq.s32.totalorder %s23, 3
      %p190 = por %p188, %p189
      %p192 = scmp.ne.s32.totalorder %s175, %s191
      %p193 = scmp.eq.s32.totalorder %s23, 0
      %p194 = por %p192, %p193
      %s195 = ssub.s32 %s24, %s36
      %p196 = scmp.eq.s32.totalorder %s195, 0
      %s198 = sadd.s32 %s197, 1
      %s199 = scalar_select %p196, %s197, %s198
      %p202 = pneg %p196
      %p203 = scmp.eq.s32.totalorder %s17, 3
      %p204 = por %p202, %p203
      %p205 = scmp.ne.s32.totalorder %s197, %s200
      %p206 = scmp.eq.s32.totalorder %s17, 0
      %p207 = por %p205, %p206
      %p208 = scmp.ne.s32.totalorder %s197, %s200
      %p209 = scmp.eq.s32.totalorder %s22, 3
      %p210 = por %p208, %p209
      %p211 = scmp.ne.s32.totalorder %s200, %s201
      %p212 = scmp.eq.s32.totalorder %s22, 0
      %p213 = por %p211, %p212
      %p214 = scmp.ne.s32.totalorder %s200, %s201
      %p215 = scmp.eq.s32.totalorder %s23, 3
      %p216 = por %p214, %p215
      %p218 = scmp.ne.s32.totalorder %s201, %s217
      %p219 = scmp.eq.s32.totalorder %s23, 0
      %p220 = por %p218, %p219
      %p221 = scmp.le.s32.totalorder 1, %s17
      %p222 = scmp.lt.s32.totalorder %s17, 5
      %p223 = pnand %p221, %p222
      %p224 = pneg %p223
      // Predicated region
      $region9: #{tpu_custom_call.1} parent=5 // pred_check
        _
      $region10: #{tpu_custom_call.1} parent=5 // pred_check_branch
        %226 = sbr.rel (%p223) target = $region12
      $region11: #{tpu_custom_call.1} parent=5 // pred_region
        %s227 = ssub.s32 %s17, 1
        // Predicated region
        $region13: #{tpu_custom_call.1} parent=11 // pred_check
          %p228 = pneg %p83
        $region14: #{tpu_custom_call.1} parent=11 // pred_check_branch
          %230 = sbr.rel (%p228) target = $region16
        $region15: #{tpu_custom_call.1} parent=11 // pred_region
          %s231 = smul.u32 2, %s26
          %s233 = ssub.s32 1024, 1024
          %234 = vsyncadd [#allocation8], %s233
          %s235 = smul.addr %s231, 4
          %s236 = smul.addr %s235, 128
          %s237 = scalar_lea.hbm %s1, %s236
          %s238 = sshll.u32 [#allocation7], 4
          %s239 = int_to_ptr.vmem [resolvable:$true] %s238
          %244 = dma.hbm_to_vmem [thread:$0]  %s237, 1024, %s239, [#allocation8], 128, 128, 8
        $region16: #{tpu_custom_call.1} parent=11 // pred_fallthru
          _
        // Predicated region
        $region17: #{tpu_custom_call.1} parent=11 // pred_check
          %p245 = pneg %p109
        $region18: #{tpu_custom_call.1} parent=11 // pred_check_branch
          %247 = sbr.rel (%p245) target = $region20
        $region19: #{tpu_custom_call.1} parent=11 // pred_region
          %s248 = smul.u32 2, %s26
          %s250 = ssub.s32 1024, 1024
          %251 = vsyncadd [#allocation8], %s250
          %s252 = smul.addr %s248, 4
          %s253 = smul.addr %s252, 128
          %s254 = scalar_lea.hbm %s2, %s253
          %s255 = sshll.u32 [#allocation9], 4
          %s256 = int_to_ptr.vmem [resolvable:$true] %s255
          %261 = dma.hbm_to_vmem [thread:$0]  %s254, 1024, %s256, [#allocation8], 128, 128, 8
        $region20: #{tpu_custom_call.1} parent=11 // pred_fallthru
          _
        // Predicated region
        $region21: #{tpu_custom_call.1} parent=11 // pred_check
          %p262 = pneg %p135
        $region22: #{tpu_custom_call.1} parent=11 // pred_check_branch
          %264 = sbr.rel (%p262) target = $region24
        $region23: #{tpu_custom_call.1} parent=11 // pred_region
          %s265 = smul.u32 2, %s26
          %s267 = ssub.s32 128, 128
          %268 = vsyncadd [#allocation11], %s267
          %s269 = smul.addr %s265, 64
          %s270 = scalar_lea.hbm %s3, %s269
          %s271 = sshll.u32 [#allocation10], 4
          %s272 = int_to_ptr.vmem [resolvable:$true] %s271
          %277 = dma.hbm_to_vmem [thread:$0]  %s270, 128, %s272, [#allocation11], 64, 64, 4
        $region24: #{tpu_custom_call.1} parent=11 // pred_fallthru
          _
        // Predicated region
        $region25: #{tpu_custom_call.1} parent=11 // pred_check
          %p278 = pneg %p161
        $region26: #{tpu_custom_call.1} parent=11 // pred_check_branch
          %280 = sbr.rel (%p278) target = $region28
        $region27: #{tpu_custom_call.1} parent=11 // pred_region
          %s281 = smul.u32 2, %s26
          %s283 = ssub.s32 1024, 1024
          %284 = vsyncadd [#allocation11], %s283
          %s285 = smul.addr %s281, 4
          %s286 = smul.addr %s285, 128
          %s287 = scalar_lea.hbm %s4, %s286
          %s288 = sshll.u32 [#allocation12], 4
          %s289 = int_to_ptr.vmem [resolvable:$true] %s288
          %294 = dma.hbm_to_vmem [thread:$0]  %s287, 1024, %s289, [#allocation11], 128, 128, 8
        $region28: #{tpu_custom_call.1} parent=11 // pred_fallthru
          _
        // Predicated region
        $region29: #{tpu_custom_call.1} parent=11 // pred_check
          %p295 = pneg %p187
        $region30: #{tpu_custom_call.1} parent=11 // pred_check_branch
          %297 = sbr.rel (%p295) target = $region32
        $region31: #{tpu_custom_call.1} parent=11 // pred_region
          %s298 = smul.u32 2, %s26
          %p299 = scmp.lt.s32.totalorder %s298, 1
          %s300 = scalar_select %p299, %s298, 1
          %s301 = scalar_lea.vmem %s5, %s300
          %s302 = smul.u32 2, %s26
        $region32: #{tpu_custom_call.1} parent=11 // pred_fallthru
          _
      $region12: #{tpu_custom_call.1} parent=5 // pred_fallthru
        _
      %p303 = scmp.lt.s32.totalorder %s17, 4
      // Predicated region
      $region33: #{tpu_custom_call.1} parent=5 // pred_check
        %p304 = pneg %p303
      $region34: #{tpu_custom_call.1} parent=5 // pred_check_branch
        %306 = sbr.rel (%p304) target = $region36
      $region35: #{tpu_custom_call.1} parent=5 // pred_region
        // Predicated region
        $region37: #{tpu_custom_call.1} parent=35 // pred_check
          %p307 = pneg %p51
        $region38: #{tpu_custom_call.1} parent=35 // pred_check_branch
          %309 = sbr.rel (%p307) target = $region40
        $region39: #{tpu_custom_call.1} parent=35 // pred_region
          %s310 = sand.u32 %s41, 1
          %s311 = scalar_lea.sflag [#allocation6], %s310
          %s312 = sand.u32 %s41, 1
          %s313 = smul.addr %s312, 32
          %s314 = scalar_lea.vmem [#allocation5], %s313
          %s315 = smul.u32 4, %s25
          %s316 = smul.u32 2, %s24
          %s318 = ssub.s32 512, 512
          %319 = vsyncadd %s311, %s318
          %s320 = smul.addr %s315, 2
          %s321 = sadd.s32 %s316, %s320
          %s322 = smul.addr %s321, 64
          %s323 = scalar_lea.hbm %s0, %s322
          %s324 = sshll.u32 %s314, 4
          %s325 = int_to_ptr.vmem [resolvable:$true] %s324
          %330 = dma.hbm_to_vmem [thread:$0]  %s323, 512, %s325, %s311, 64, 64, 4
        $region40: #{tpu_custom_call.1} parent=35 // pred_fallthru
          _
      $region36: #{tpu_custom_call.1} parent=5 // pred_fallthru
        _
      %p331 = scmp.le.s32.totalorder 1, %s17
      %p332 = scmp.lt.s32.totalorder %s17, 5
      %p333 = pnand %p331, %p332
      %p334 = pneg %p333
      // Predicated region
      $region41: #{tpu_custom_call.1} parent=5 // pred_check
        _
      $region42: #{tpu_custom_call.1} parent=5 // pred_check_branch
        %336 = sbr.rel (%p333) target = $region44
      $region43: #{tpu_custom_call.1} parent=5 // pred_region
        %s337 = ssub.s32 %s17, 1
        %s338 = sand.u32 %s44, 1
        %s339 = scalar_lea.sflag [#allocation6], %s338
        %s340 = sand.u32 %s44, 1
        %s341 = smul.addr %s340, 32
        %s342 = scalar_lea.vmem [#allocation5], %s341
        // Predicated region
        $region45: #{tpu_custom_call.1} parent=43 // pred_check
          %p343 = pneg %p57
        $region46: #{tpu_custom_call.1} parent=43 // pred_check_branch
          %345 = sbr.rel (%p343) target = $region48
        $region47: #{tpu_custom_call.1} parent=43 // pred_region
          %346 = dma.done %s339, 512
        $region48: #{tpu_custom_call.1} parent=43 // pred_fallthru
          _
        // Predicated region
        $region49: #{tpu_custom_call.1} parent=43 // pred_check
          %p347 = pneg %p83
        $region50: #{tpu_custom_call.1} parent=43 // pred_check_branch
          %349 = sbr.rel (%p347) target = $region52
        $region51: #{tpu_custom_call.1} parent=43 // pred_region
          %350 = dma.done [#allocation8], 1024
        $region52: #{tpu_custom_call.1} parent=43 // pred_fallthru
          _
        // Predicated region
        $region53: #{tpu_custom_call.1} parent=43 // pred_check
          %p351 = pneg %p109
        $region54: #{tpu_custom_call.1} parent=43 // pred_check_branch
          %353 = sbr.rel (%p351) target = $region56
        $region55: #{tpu_custom_call.1} parent=43 // pred_region
          %354 = dma.done [#allocation8], 1024
        $region56: #{tpu_custom_call.1} parent=43 // pred_fallthru
          _
        // Predicated region
        $region57: #{tpu_custom_call.1} parent=43 // pred_check
          %p355 = pneg %p135
        $region58: #{tpu_custom_call.1} parent=43 // pred_check_branch
          %357 = sbr.rel (%p355) target = $region60
        $region59: #{tpu_custom_call.1} parent=43 // pred_region
          %358 = dma.done [#allocation11], 128
        $region60: #{tpu_custom_call.1} parent=43 // pred_fallthru
          _
        // Predicated region
        $region61: #{tpu_custom_call.1} parent=43 // pred_check
          %p359 = pneg %p161
        $region62: #{tpu_custom_call.1} parent=43 // pred_check_branch
          %361 = sbr.rel (%p359) target = $region64
        $region63: #{tpu_custom_call.1} parent=43 // pred_region
          %362 = dma.done [#allocation11], 1024
        $region64: #{tpu_custom_call.1} parent=43 // pred_fallthru
          _
        %s363 = sand.u32 %s44, 1
        %s364 = scalar_lea.sflag [#allocation6], %s363
        %s365 = sand.u32 %s44, 1
        %s366 = smul.addr %s365, 32
        %s367 = scalar_lea.vmem [#allocation5], %s366
        %p368 = pneg %p57
        %p369 = pneg %p54
        %p370 = pneg %p83
        %p371 = pneg %p80
        %p372 = pneg %p109
        %p373 = pneg %p106
        %p374 = pneg %p135
        %p375 = pneg %p132
        %p376 = pneg %p161
        %p377 = pneg %p158
        %s378 = smul.u32 2, %s26
        %p379 = scmp.lt.s32.totalorder %s378, 1
        %s380 = scalar_select %p379, %s378, 1
        %s381 = scalar_lea.vmem %s5, %s380
        %p382 = pneg %p187
        %p383 = pneg %p184
        %p384 = pneg %p213
        %p385 = pneg %p210
        %s386 = smul.u32 2, %s26
        %p387 = scmp.lt.s32.totalorder %s386, 1
        %s388 = scalar_select %p387, %s386, 1
        %s389 = smul.addr %s388, 8
        %s390 = scalar_lea.vmem %s6, %s389
        %s391 = smul.u32 4, %s27
        %s392 = smul.u32 2, %s26
        %s393 = smul.u32 2, %s26
        %s394 = smul.u32 2, %s26
        %s395 = smul.u32 2, %s26
        %s396 = smul.u32 2, %s26
        %s397 = smul.u32 2, %s26
        %p398 = scmp.lt.s32.totalorder %s397, 1
        %s399 = scalar_select %p398, %s397, 1
        %s400 = scalar_lea.vmem %s5, %s399
        %s401 = smul.u32 2, %s26
        %s402 = smul.u32 2, %s26
        %p403 = scmp.lt.s32.totalorder %s402, 1
        %s404 = scalar_select %p403, %s402, 1
        %s405 = smul.addr %s404, 8
        %s406 = scalar_lea.vmem %s6, %s405
        %s407 = smul.u32 2, %s26
        %p408 = scmp.eq.s32.totalorder %s27, 0
        // Predicated region
        $region65: #{tpu_custom_call.1} parent=43 // pred_check
          %p409 = pneg %p408
        $region66: #{tpu_custom_call.1} parent=43 // pred_check_branch
          %411 = sbr.rel (%p409) target = $region68
        $region67: #{tpu_custom_call.1} parent=43 // pred_region
          %vm412 = vcmask 254976
          %413 = vst.msk [vmem:[#allocation2] sm:$0x3] %vm412, 0.0
          %414 = vst.msk [vmem:[#allocation3] sm:$0x3] %vm412, 0.0
        $region68: #{tpu_custom_call.1} parent=43 // pred_fallthru
          _
        %v415 = vld [vmem:[#allocation7] sm:$0xff]
        %v416 = vld [vmem:[#allocation7 + $0x8] sm:$0xff]
        %v417 = vld [vmem:[#allocation7 + $0x10] sm:$0xff]
        %v418 = vld [vmem:[#allocation7 + $0x18] sm:$0xff]
        %v419 = vld [vmem:[#allocation7 + $0x20] sm:$0xff]
        %v420 = vld [vmem:[#allocation7 + $0x28] sm:$0xff]
        %v421 = vld [vmem:[#allocation7 + $0x30] sm:$0xff]
        %v422 = vld [vmem:[#allocation7 + $0x38] sm:$0xff]
        %v423 = vld [vmem:[#allocation9] sm:$0xff]
        %v424 = vld [vmem:[#allocation9 + $0x8] sm:$0xff]
        %v425 = vld [vmem:[#allocation9 + $0x10] sm:$0xff]
        %v426 = vld [vmem:[#allocation9 + $0x18] sm:$0xff]
        %v427 = vld [vmem:[#allocation9 + $0x20] sm:$0xff]
        %v428 = vld [vmem:[#allocation9 + $0x28] sm:$0xff]
        %v429 = vld [vmem:[#allocation9 + $0x30] sm:$0xff]
        %v430 = vld [vmem:[#allocation9 + $0x38] sm:$0xff]
        %v431 = vld [vmem:[#allocation10] sm:$0xf]
        %v432 = vld [vmem:[#allocation10 + $0x4] sm:$0xf]
        %v433 = vld [vmem:[#allocation2] sm:$0x3]
        %v434 = vld [vmem:[#allocation3] sm:$0x3]
        %v437 = vunpack.c.l.s4 1966171168
        %v438 = vunpack.c.0.s8 %v437
        %v439 = vlaneseq
        %v440 = vshrl.u32 %v439, 7
        %v441 = vsub.s32 %v438, %v440
        %v442 = vrot.slane %v433, %v441
        %v443 = vcombine.high %v442, %v442
        %v445 = vunpack.c.l.s4 1966171168
        %v446 = vunpack.c.0.s8 %v445
        %v447 = vlaneseq
        %v448 = vshrl.u32 %v447, 7
        %v449 = vsub.s32 %v446, %v448
        %v450 = vrot.slane %v442, %v449
        %v452 = vunpack.c.l.s4 1966171168
        %v453 = vunpack.c.0.s8 %v452
        %v454 = vlaneseq
        %v455 = vshrl.u32 %v454, 7
        %v456 = vsub.s32 %v453, %v455
        %v457 = vrot.slane %v443, %v456
        %vm458 = vcmask 261120
        %v459 = vsel %vm458, %v450, 0
        %461 = vmatprep.subr.mxu0 0.0
        %462 = vmatpush1.msra.mxu0 0.0
        %463 = vmatprep.subr.mxu0 0.0
        %464 = vmatpush1.msra.mxu0 0.0
        %465 = vmatprep.subr.mxu0 0.0
        %466 = vmatpush1.msra.mxu0 0.0
        %467 = vmatprep.subr.mxu0 0.0
        %468 = vmatpush1.msra.mxu0 0.0
        %469 = vmatprep.subr.mxu0 0.0
        %470 = vmatpush1.msra.mxu0 0.0
        %471 = vmatprep.subr.mxu0 0.0
        %472 = vmatpush1.msra.mxu0 0.0
        %473 = vmatprep.subr.mxu0 0.0
        %474 = vmatpush1.msra.mxu0 0.0
        %475 = vmatprep.subr.mxu0 0.0
        %476 = vmatpush1.msra.mxu0 0.0
        %477 = vmatprep.subr.mxu0 0.0
        %478 = vmatpush1.msra.mxu0 0.0
        %479 = vmatprep.subr.mxu0 0.0
        %480 = vmatpush1.msra.mxu0 0.0
        %481 = vmatprep.subr.mxu0 0.0
        %482 = vmatpush1.msra.mxu0 0.0
        %483 = vmatprep.subr.mxu0 0.0
        %484 = vmatpush1.msra.mxu0 0.0
        %485 = vmatprep.subr.mxu0 0.0
        %486 = vmatpush1.msra.mxu0 %v418
        %487 = vmatprep.subr.mxu0 0.0
        %488 = vmatpush1.msra.mxu0 %v417
        %489 = vmatprep.subr.mxu0 0.0
        %490 = vmatpush1.msra.mxu0 %v416
        %491 = vmatprep.subr.mxu0 0.0
        %492 = vmatpush1.msra.mxu0 %v415
        %493 = vmatprep.subr.mxu0 0.0
        %494 = vmatpush2.msra.mxu0 0.0
        %495 = vmatprep.subr.mxu0 0.0
        %496 = vmatpush2.msra.mxu0 0.0
        %497 = vmatprep.subr.mxu0 0.0
        %498 = vmatpush2.msra.mxu0 0.0
        %499 = vmatprep.subr.mxu0 0.0
        %500 = vmatpush2.msra.mxu0 0.0
        %501 = vmatprep.subr.mxu0 0.0
        %502 = vmatpush2.msra.mxu0 0.0
        %503 = vmatprep.subr.mxu0 0.0
        %504 = vmatpush2.msra.mxu0 0.0
        %505 = vmatprep.subr.mxu0 0.0
        %506 = vmatpush2.msra.mxu0 0.0
        %507 = vmatprep.subr.mxu0 0.0
        %508 = vmatpush2.msra.mxu0 0.0
        %509 = vmatprep.subr.mxu0 0.0
        %510 = vmatpush2.msra.mxu0 0.0
        %511 = vmatprep.subr.mxu0 0.0
        %512 = vmatpush2.msra.mxu0 0.0
        %513 = vmatprep.subr.mxu0 0.0
        %514 = vmatpush2.msra.mxu0 0.0
        %515 = vmatprep.subr.mxu0 0.0
        %516 = vmatpush2.msra.mxu0 0.0
        %517 = vmatprep.subr.mxu0 0.0
        %518 = vmatpush2.msra.mxu0 0.0
        %519 = vmatprep.subr.mxu0 0.0
        %520 = vmatpush2.msra.mxu0 0.0
        %521 = vmatprep.subr.mxu0 0.0
        %522 = vmatpush2.msra.mxu0 0.0
        %523 = vmatprep.subr.mxu0 0.0
        %524 = vmatpush2.msra.mxu0 0.0
        %525 = vmatprep.mubr.f32.mxu0 0.0
        %526 = vmatmul.mubr.f32.gmra.mxu0 %v459
        %v527 = vpop.f32.mrf.mxu0
        %v528 = vadd.f32 0.0, %v527
        %v529 = vpop.f32.mrf.mxu0
        %530 = vdwg.mxu0
        %v531 = vsel %vm458, %v457, 0
        %533 = vmatprep.subr.mxu0 0.0
        %534 = vmatpush1.msra.mxu0 0.0
        %535 = vmatprep.subr.mxu0 0.0
        %536 = vmatpush1.msra.mxu0 0.0
        %537 = vmatprep.subr.mxu0 0.0
        %538 = vmatpush1.msra.mxu0 0.0
        %539 = vmatprep.subr.mxu0 0.0
        %540 = vmatpush1.msra.mxu0 0.0
        %541 = vmatprep.subr.mxu0 0.0
        %542 = vmatpush1.msra.mxu0 0.0
        %543 = vmatprep.subr.mxu0 0.0
        %544 = vmatpush1.msra.mxu0 0.0
        %545 = vmatprep.subr.mxu0 0.0
        %546 = vmatpush1.msra.mxu0 0.0
        %547 = vmatprep.subr.mxu0 0.0
        %548 = vmatpush1.msra.mxu0 0.0
        %549 = vmatprep.subr.mxu0 0.0
        %550 = vmatpush1.msra.mxu0 0.0
        %551 = vmatprep.subr.mxu0 0.0
        %552 = vmatpush1.msra.mxu0 0.0
        %553 = vmatprep.subr.mxu0 0.0
        %554 = vmatpush1.msra.mxu0 0.0
        %555 = vmatprep.subr.mxu0 0.0
        %556 = vmatpush1.msra.mxu0 0.0
        %557 = vmatprep.subr.mxu0 0.0
        %558 = vmatpush1.msra.mxu0 %v422
        %559 = vmatprep.subr.mxu0 0.0
        %560 = vmatpush1.msra.mxu0 %v421
        %561 = vmatprep.subr.mxu0 0.0
        %562 = vmatpush1.msra.mxu0 %v420
        %563 = vmatprep.subr.mxu0 0.0
        %564 = vmatpush1.msra.mxu0 %v419
        %565 = vmatprep.subr.mxu0 0.0
        %566 = vmatpush2.msra.mxu0 0.0
        %567 = vmatprep.subr.mxu0 0.0
        %568 = vmatpush2.msra.mxu0 0.0
        %569 = vmatprep.subr.mxu0 0.0
        %570 = vmatpush2.msra.mxu0 0.0
        %571 = vmatprep.subr.mxu0 0.0
        %572 = vmatpush2.msra.mxu0 0.0
        %573 = vmatprep.subr.mxu0 0.0
        %574 = vmatpush2.msra.mxu0 0.0
        %575 = vmatprep.subr.mxu0 0.0
        %576 = vmatpush2.msra.mxu0 0.0
        %577 = vmatprep.subr.mxu0 0.0
        %578 = vmatpush2.msra.mxu0 0.0
        %579 = vmatprep.subr.mxu0 0.0
        %580 = vmatpush2.msra.mxu0 0.0
        %581 = vmatprep.subr.mxu0 0.0
        %582 = vmatpush2.msra.mxu0 0.0
        %583 = vmatprep.subr.mxu0 0.0
        %584 = vmatpush2.msra.mxu0 0.0
        %585 = vmatprep.subr.mxu0 0.0
        %586 = vmatpush2.msra.mxu0 0.0
        %587 = vmatprep.subr.mxu0 0.0
        %588 = vmatpush2.msra.mxu0 0.0
        %589 = vmatprep.subr.mxu0 0.0
        %590 = vmatpush2.msra.mxu0 0.0
        %591 = vmatprep.subr.mxu0 0.0
        %592 = vmatpush2.msra.mxu0 0.0
        %593 = vmatprep.subr.mxu0 0.0
        %594 = vmatpush2.msra.mxu0 0.0
        %595 = vmatprep.subr.mxu0 0.0
        %596 = vmatpush2.msra.mxu0 0.0
        %597 = vmatprep.mubr.f32.mxu0 0.0
        %598 = vmatmul.mubr.f32.gmra.mxu0 %v531
        %v599 = vpop.f32.mrf.mxu0
        %v600 = vadd.f32 0.0, %v599
        %v601 = vpop.f32.mrf.mxu0
        %602 = vdwg.mxu0
        %605 = vrot.lane.b32.xlu0 %v528, 96
        %v606 = vpop.permute.xlu0 %605
        %607 = vrot.lane.b32.xlu0 %v600, 96
        %v608 = vpop.permute.xlu0 %607
        %611 = vrot.lane.b32.xlu0 %v528, 64
        %v612 = vpop.permute.xlu0 %611
        %613 = vrot.lane.b32.xlu0 %v600, 64
        %v614 = vpop.permute.xlu0 %613
        %617 = vrot.lane.b32.xlu0 %v528, 32
        %v618 = vpop.permute.xlu0 %617
        %619 = vrot.lane.b32.xlu0 %v600, 32
        %v620 = vpop.permute.xlu0 %619
        %v623 = vcombine.low %v528, %v612
        %v625 = vunpack.c.l.s4 1983009808
        %v626 = vunpack.c.0.s8 %v625
        %v627 = vlaneseq
        %v628 = vshrl.u32 %v627, 7
        %v629 = vsub.s32 %v626, %v628
        %v630 = vrot.slane %v623, %v629
        %v631 = vcombine.low %v606, %v618
        %v633 = vunpack.c.l.s4 1983009808
        %v634 = vunpack.c.0.s8 %v633
        %v635 = vlaneseq
        %v636 = vshrl.u32 %v635, 7
        %v637 = vsub.s32 %v634, %v636
        %v638 = vrot.slane %v631, %v637
        %v639 = vcombine.low %v630, %v638
        %v641 = vunpack.c.l.s4 1934713408
        %v642 = vunpack.c.0.s8 %v641
        %v643 = vlaneseq
        %v644 = vshrl.u32 %v643, 7
        %v645 = vsub.s32 %v642, %v644
        %v646 = vrot.slane %v639, %v645
        %v647 = vcombine.low %v600, %v614
        %v649 = vunpack.c.l.s4 1983009808
        %v650 = vunpack.c.0.s8 %v649
        %v651 = vlaneseq
        %v652 = vshrl.u32 %v651, 7
        %v653 = vsub.s32 %v650, %v652
        %v654 = vrot.slane %v647, %v653
        %v655 = vcombine.low %v608, %v620
        %v657 = vunpack.c.l.s4 1983009808
        %v658 = vunpack.c.0.s8 %v657
        %v659 = vlaneseq
        %v660 = vshrl.u32 %v659, 7
        %v661 = vsub.s32 %v658, %v660
        %v662 = vrot.slane %v655, %v661
        %v663 = vcombine.low %v654, %v662
        %v665 = vunpack.c.l.s4 1934713408
        %v666 = vunpack.c.0.s8 %v665
        %v667 = vlaneseq
        %v668 = vshrl.u32 %v667, 7
        %v669 = vsub.s32 %v666, %v668
        %v670 = vrot.slane %v663, %v669
        %v671 = vld [vmem:[%s342] sm:$0xf]
        %v672 = vld [vmem:[%s342 + $0x4] sm:$0xf]
        %v673 = vadd.f32 %v646, %v671
        %v674 = vadd.f32 %v670, %v672
        %vm675 = vcmask 257024
        %v676 = vsel %vm675, %v673, 0.0
        %677 = vadd.xlane.f32.xlu0 %v676
        %v678 = vpop.xlane.xlu0 %677
        %v679 = vsel %vm675, %v674, 0.0
        %680 = vadd.xlane.f32.xlu0 %v679
        %v681 = vpop.xlane.xlu0 %680
        %v682 = vrcp.pop 32.0
        %v683 = vmul.f32 %v678, %v682
        %v684 = vmul.f32 %v681, %v682
        %v685 = vsub.f32 %v673, %v683
        %v686 = vsub.f32 %v674, %v684
        %v687 = vmul.f32 %v685, %v685
        %v688 = vmul.f32 %v686, %v686
        %v689 = vsel %vm675, %v687, 0.0
        %690 = vadd.xlane.f32.xlu0 %v689
        %v691 = vpop.xlane.xlu0 %690
        %v692 = vsel %vm675, %v688, 0.0
        %693 = vadd.xlane.f32.xlu0 %v692
        %v694 = vpop.xlane.xlu0 %693
        %v695 = vmul.f32 %v691, %v682
        %v696 = vmul.f32 %v694, %v682
        %v697 = vadd.f32 %v695, 1e-05
        %v698 = vadd.f32 %v696, 1e-05
        %v699 = vrsqrt.pop %v697
        %v700 = vrsqrt.pop %v698
        %v701 = vmul.f32 %v685, %v699
        %v702 = vmul.f32 %v686, %v700
        %v703 = vxor.u32 %v701, 2147483648
        %v704 = vxor.u32 %v702, 2147483648
        %v705 = vmul.f32 %v703, 1.442695
        %v706 = vpow.pop %v705
        %v707 = vmul.f32 %v704, 1.442695
        %v708 = vpow.pop %v707
        %v709 = vadd.f32 %v706, 1.0
        %v710 = vadd.f32 %v708, 1.0
        %v711 = vrcp.pop %v709
        %v712 = vmul.f32 1.0, %v711
        %v713 = vrcp.pop %v710
        %v714 = vmul.f32 1.0, %v713
        %v715 = vtanh.pop %v701
        %v716 = vtanh.pop %v702
        %v718 = vrot.slane %v434, 7
        %v721 = vmul.f32 %v712, %v718
        %v722 = vmul.f32 %v714, %v434
        %v725 = vrot.slane %v715, 2
        %v726 = vrot.slane %v716, 2
        %v729 = vmul.f32 %v712, %v725
        %v730 = vmul.f32 %v714, %v726
        %v733 = vrot.slane %v729, 7
        %v734 = vrot.slane %v730, 7
        %v737 = vadd.f32 %v721, %v733
        %v738 = vadd.f32 %v722, %v734
        %v741 = vrot.slane %v738, 7
        %vm742 = vcmask 1042434
        %v743 = vsel %vm742, %v741, %v737
        %vm745 = vcmask 256001
        %v746 = vsel %vm745, %v743, 0.0
        %747 = vadd.xlane.f32.xlu0 %v746
        %v748 = vpop.xlane.xlu0 %747
        %v749 = vmul.f32 %v748, %v682
        %v751 = vrot.slane %v749, 1
        %v754 = vsub.f32 %v737, %v749
        %v755 = vsub.f32 %v738, %v751
        %v756 = vmul.f32 %v754, %v754
        %v757 = vmul.f32 %v755, %v755
        %v760 = vrot.slane %v757, 7
        %v761 = vsel %vm742, %v760, %v756
        %v763 = vsel %vm745, %v761, 0.0
        %764 = vadd.xlane.f32.xlu0 %v763
        %v765 = vpop.xlane.xlu0 %764
        %v766 = vmul.f32 %v765, %v682
        %v767 = vadd.f32 %v766, 1e-05
        %v768 = vrsqrt.pop %v767
        %v770 = vrot.slane %v768, 1
        %v773 = vmul.f32 %v754, %v768
        %v774 = vmul.f32 %v755, %v770
        %v775 = vtanh.pop %v773
        %v776 = vtanh.pop %v774
        %v779 = vrot.slane %v775, 6
        %v780 = vrot.slane %v776, 6
        %v783 = vmul.f32 %v712, %v779
        %v784 = vmul.f32 %v714, %v780
        %v786 = vrot.slane %v783, 3
        %v787 = vsel %vm458, %v786, 0
        %789 = vmatprep.subr.mxu0 0.0
        %790 = vmatpush1.msra.mxu0 0.0
        %791 = vmatprep.subr.mxu0 0.0
        %792 = vmatpush1.msra.mxu0 0.0
        %793 = vmatprep.subr.mxu0 0.0
        %794 = vmatpush1.msra.mxu0 0.0
        %795 = vmatprep.subr.mxu0 0.0
        %796 = vmatpush1.msra.mxu0 0.0
        %797 = vmatprep.subr.mxu0 0.0
        %798 = vmatpush1.msra.mxu0 0.0
        %799 = vmatprep.subr.mxu0 0.0
        %800 = vmatpush1.msra.mxu0 0.0
        %801 = vmatprep.subr.mxu0 0.0
        %802 = vmatpush1.msra.mxu0 0.0
        %803 = vmatprep.subr.mxu0 0.0
        %804 = vmatpush1.msra.mxu0 0.0
        %805 = vmatprep.subr.mxu0 0.0
        %806 = vmatpush1.msra.mxu0 0.0
        %807 = vmatprep.subr.mxu0 0.0
        %808 = vmatpush1.msra.mxu0 0.0
        %809 = vmatprep.subr.mxu0 0.0
        %810 = vmatpush1.msra.mxu0 0.0
        %811 = vmatprep.subr.mxu0 0.0
        %812 = vmatpush1.msra.mxu0 0.0
        %813 = vmatprep.subr.mxu0 0.0
        %814 = vmatpush1.msra.mxu0 %v426
        %815 = vmatprep.subr.mxu0 0.0
        %816 = vmatpush1.msra.mxu0 %v425
        %817 = vmatprep.subr.mxu0 0.0
        %818 = vmatpush1.msra.mxu0 %v424
        %819 = vmatprep.subr.mxu0 0.0
        %820 = vmatpush1.msra.mxu0 %v423
        %821 = vmatprep.subr.mxu0 0.0
        %822 = vmatpush2.msra.mxu0 0.0
        %823 = vmatprep.subr.mxu0 0.0
        %824 = vmatpush2.msra.mxu0 0.0
        %825 = vmatprep.subr.mxu0 0.0
        %826 = vmatpush2.msra.mxu0 0.0
        %827 = vmatprep.subr.mxu0 0.0
        %828 = vmatpush2.msra.mxu0 0.0
        %829 = vmatprep.subr.mxu0 0.0
        %830 = vmatpush2.msra.mxu0 0.0
        %831 = vmatprep.subr.mxu0 0.0
        %832 = vmatpush2.msra.mxu0 0.0
        %833 = vmatprep.subr.mxu0 0.0
        %834 = vmatpush2.msra.mxu0 0.0
        %835 = vmatprep.subr.mxu0 0.0
        %836 = vmatpush2.msra.mxu0 0.0
        %837 = vmatprep.subr.mxu0 0.0
        %838 = vmatpush2.msra.mxu0 0.0
        %839 = vmatprep.subr.mxu0 0.0
        %840 = vmatpush2.msra.mxu0 0.0
        %841 = vmatprep.subr.mxu0 0.0
        %842 = vmatpush2.msra.mxu0 0.0
        %843 = vmatprep.subr.mxu0 0.0
        %844 = vmatpush2.msra.mxu0 0.0
        %845 = vmatprep.subr.mxu0 0.0
        %846 = vmatpush2.msra.mxu0 0.0
        %847 = vmatprep.subr.mxu0 0.0
        %848 = vmatpush2.msra.mxu0 0.0
        %849 = vmatprep.subr.mxu0 0.0
        %850 = vmatpush2.msra.mxu0 0.0
        %851 = vmatprep.subr.mxu0 0.0
        %852 = vmatpush2.msra.mxu0 0.0
        %853 = vmatprep.mubr.f32.mxu0 0.0
        %854 = vmatmul.mubr.f32.gmra.mxu0 %v787
        %v855 = vpop.f32.mrf.mxu0
        %v856 = vadd.f32 0.0, %v855
        %v857 = vpop.f32.mrf.mxu0
        %858 = vdwg.mxu0
        %v860 = vrot.slane %v784, 3
        %v861 = vsel %vm458, %v860, 0
        %863 = vmatprep.subr.mxu0 0.0
        %864 = vmatpush1.msra.mxu0 0.0
        %865 = vmatprep.subr.mxu0 0.0
        %866 = vmatpush1.msra.mxu0 0.0
        %867 = vmatprep.subr.mxu0 0.0
        %868 = vmatpush1.msra.mxu0 0.0
        %869 = vmatprep.subr.mxu0 0.0
        %870 = vmatpush1.msra.mxu0 0.0
        %871 = vmatprep.subr.mxu0 0.0
        %872 = vmatpush1.msra.mxu0 0.0
        %873 = vmatprep.subr.mxu0 0.0
        %874 = vmatpush1.msra.mxu0 0.0
        %875 = vmatprep.subr.mxu0 0.0
        %876 = vmatpush1.msra.mxu0 0.0
        %877 = vmatprep.subr.mxu0 0.0
        %878 = vmatpush1.msra.mxu0 0.0
        %879 = vmatprep.subr.mxu0 0.0
        %880 = vmatpush1.msra.mxu0 0.0
        %881 = vmatprep.subr.mxu0 0.0
        %882 = vmatpush1.msra.mxu0 0.0
        %883 = vmatprep.subr.mxu0 0.0
        %884 = vmatpush1.msra.mxu0 0.0
        %885 = vmatprep.subr.mxu0 0.0
        %886 = vmatpush1.msra.mxu0 0.0
        %887 = vmatprep.subr.mxu0 0.0
        %888 = vmatpush1.msra.mxu0 %v430
        %889 = vmatprep.subr.mxu0 0.0
        %890 = vmatpush1.msra.mxu0 %v429
        %891 = vmatprep.subr.mxu0 0.0
        %892 = vmatpush1.msra.mxu0 %v428
        %893 = vmatprep.subr.mxu0 0.0
        %894 = vmatpush1.msra.mxu0 %v427
        %895 = vmatprep.subr.mxu0 0.0
        %896 = vmatpush2.msra.mxu0 0.0
        %897 = vmatprep.subr.mxu0 0.0
        %898 = vmatpush2.msra.mxu0 0.0
        %899 = vmatprep.subr.mxu0 0.0
        %900 = vmatpush2.msra.mxu0 0.0
        %901 = vmatprep.subr.mxu0 0.0
        %902 = vmatpush2.msra.mxu0 0.0
        %903 = vmatprep.subr.mxu0 0.0
        %904 = vmatpush2.msra.mxu0 0.0
        %905 = vmatprep.subr.mxu0 0.0
        %906 = vmatpush2.msra.mxu0 0.0
        %907 = vmatprep.subr.mxu0 0.0
        %908 = vmatpush2.msra.mxu0 0.0
        %909 = vmatprep.subr.mxu0 0.0
        %910 = vmatpush2.msra.mxu0 0.0
        %911 = vmatprep.subr.mxu0 0.0
        %912 = vmatpush2.msra.mxu0 0.0
        %913 = vmatprep.subr.mxu0 0.0
        %914 = vmatpush2.msra.mxu0 0.0
        %915 = vmatprep.subr.mxu0 0.0
        %916 = vmatpush2.msra.mxu0 0.0
        %917 = vmatprep.subr.mxu0 0.0
        %918 = vmatpush2.msra.mxu0 0.0
        %919 = vmatprep.subr.mxu0 0.0
        %920 = vmatpush2.msra.mxu0 0.0
        %921 = vmatprep.subr.mxu0 0.0
        %922 = vmatpush2.msra.mxu0 0.0
        %923 = vmatprep.subr.mxu0 0.0
        %924 = vmatpush2.msra.mxu0 0.0
        %925 = vmatprep.subr.mxu0 0.0
        %926 = vmatpush2.msra.mxu0 0.0
        %927 = vmatprep.mubr.f32.mxu0 0.0
        %928 = vmatmul.mubr.f32.gmra.mxu0 %v861
        %v929 = vpop.f32.mrf.mxu0
        %v930 = vadd.f32 0.0, %v929
        %v931 = vpop.f32.mrf.mxu0
        %932 = vdwg.mxu0
        %935 = vrot.lane.b32.xlu0 %v856, 96
        %v936 = vpop.permute.xlu0 %935
        %937 = vrot.lane.b32.xlu0 %v930, 96
        %v938 = vpop.permute.xlu0 %937
        %941 = vrot.lane.b32.xlu0 %v856, 64
        %v942 = vpop.permute.xlu0 %941
        %943 = vrot.lane.b32.xlu0 %v930, 64
        %v944 = vpop.permute.xlu0 %943
        %947 = vrot.lane.b32.xlu0 %v856, 32
        %v948 = vpop.permute.xlu0 %947
        %949 = vrot.lane.b32.xlu0 %v930, 32
        %v950 = vpop.permute.xlu0 %949
        %v953 = vcombine.low %v856, %v942
        %v955 = vunpack.c.l.s4 1983009808
        %v956 = vunpack.c.0.s8 %v955
        %v957 = vlaneseq
        %v958 = vshrl.u32 %v957, 7
        %v959 = vsub.s32 %v956, %v958
        %v960 = vrot.slane %v953, %v959
        %v961 = vcombine.low %v936, %v948
        %v963 = vunpack.c.l.s4 1983009808
        %v964 = vunpack.c.0.s8 %v963
        %v965 = vlaneseq
        %v966 = vshrl.u32 %v965, 7
        %v967 = vsub.s32 %v964, %v966
        %v968 = vrot.slane %v961, %v967
        %v969 = vcombine.low %v960, %v968
        %v971 = vunpack.c.l.s4 1934713408
        %v972 = vunpack.c.0.s8 %v971
        %v973 = vlaneseq
        %v974 = vshrl.u32 %v973, 7
        %v975 = vsub.s32 %v972, %v974
        %v976 = vrot.slane %v969, %v975
        %v977 = vcombine.low %v930, %v944
        %v979 = vunpack.c.l.s4 1983009808
        %v980 = vunpack.c.0.s8 %v979
        %v981 = vlaneseq
        %v982 = vshrl.u32 %v981, 7
        %v983 = vsub.s32 %v980, %v982
        %v984 = vrot.slane %v977, %v983
        %v985 = vcombine.low %v938, %v950
        %v987 = vunpack.c.l.s4 1983009808
        %v988 = vunpack.c.0.s8 %v987
        %v989 = vlaneseq
        %v990 = vshrl.u32 %v989, 7
        %v991 = vsub.s32 %v988, %v990
        %v992 = vrot.slane %v985, %v991
        %v993 = vcombine.low %v984, %v992
        %v995 = vunpack.c.l.s4 1934713408
        %v996 = vunpack.c.0.s8 %v995
        %v997 = vlaneseq
        %v998 = vshrl.u32 %v997, 7
        %v999 = vsub.s32 %v996, %v998
        %v1000 = vrot.slane %v993, %v999
        %v1001 = vadd.f32 %v976, %v431
        %v1002 = vadd.f32 %v1000, %v432
        %v1003 = vsel %vm675, %v1001, 0.0
        %1004 = vadd.xlane.f32.xlu0 %v1003
        %v1005 = vpop.xlane.xlu0 %1004
        %v1006 = vsel %vm675, %v1002, 0.0
        %1007 = vadd.xlane.f32.xlu0 %v1006
        %v1008 = vpop.xlane.xlu0 %1007
        %v1009 = vmul.f32 %v1005, %v682
        %v1010 = vmul.f32 %v1008, %v682
        %v1011 = vsub.f32 %v1001, %v1009
        %v1012 = vsub.f32 %v1002, %v1010
        %v1013 = vmul.f32 %v1011, %v1011
        %v1014 = vmul.f32 %v1012, %v1012
        %v1015 = vsel %vm675, %v1013, 0.0
        %1016 = vadd.xlane.f32.xlu0 %v1015
        %v1017 = vpop.xlane.xlu0 %1016
        %v1018 = vsel %vm675, %v1014, 0.0
        %1019 = vadd.xlane.f32.xlu0 %v1018
        %v1020 = vpop.xlane.xlu0 %1019
        %v1021 = vmul.f32 %v1017, %v682
        %v1022 = vmul.f32 %v1020, %v682
        %v1023 = vadd.f32 %v1021, 1e-05
        %v1024 = vadd.f32 %v1022, 1e-05
        %v1025 = vrsqrt.pop %v1023
        %v1026 = vrsqrt.pop %v1024
        %v1027 = vmul.f32 %v1011, %v1025
        %v1028 = vmul.f32 %v1012, %v1026
        %v1029 = vxor.u32 %v1027, 2147483648
        %v1030 = vxor.u32 %v1028, 2147483648
        %v1031 = vmul.f32 %v1029, 1.442695
        %v1032 = vpow.pop %v1031
        %v1033 = vmul.f32 %v1030, 1.442695
        %v1034 = vpow.pop %v1033
        %v1035 = vadd.f32 %v1032, 1.0
        %v1036 = vadd.f32 %v1034, 1.0
        %v1037 = vrcp.pop %v1035
        %v1038 = vmul.f32 1.0, %v1037
        %v1039 = vrcp.pop %v1036
        %v1040 = vmul.f32 1.0, %v1039
        %v1041 = vtanh.pop %v1027
        %v1042 = vtanh.pop %v1028
        %v1043 = vmul.f32 %v1038, %v737
        %v1044 = vmul.f32 %v1040, %v738
        %v1047 = vrot.slane %v1041, 2
        %v1048 = vrot.slane %v1042, 2
        %v1051 = vmul.f32 %v1038, %v1047
        %v1052 = vmul.f32 %v1040, %v1048
        %v1055 = vrot.slane %v1051, 7
        %v1056 = vrot.slane %v1052, 7
        %v1059 = vadd.f32 %v1043, %v1055
        %v1060 = vadd.f32 %v1044, %v1056
        %v1063 = vrot.slane %v1060, 7
        %v1064 = vsel %vm742, %v1063, %v1059
        %v1066 = vsel %vm745, %v1064, 0.0
        %1067 = vadd.xlane.f32.xlu0 %v1066
        %v1068 = vpop.xlane.xlu0 %1067
        %v1069 = vmul.f32 %v1068, %v682
        %v1071 = vrot.slane %v1069, 1
        %v1074 = vsub.f32 %v1059, %v1069
        %v1075 = vsub.f32 %v1060, %v1071
        %v1076 = vmul.f32 %v1074, %v1074
        %v1077 = vmul.f32 %v1075, %v1075
        %v1080 = vrot.slane %v1077, 7
        %v1081 = vsel %vm742, %v1080, %v1076
        %v1083 = vsel %vm745, %v1081, 0.0
        %1084 = vadd.xlane.f32.xlu0 %v1083
        %v1085 = vpop.xlane.xlu0 %1084
        %v1086 = vmul.f32 %v1085, %v682
        %v1087 = vadd.f32 %v1086, 1e-05
        %v1088 = vrsqrt.pop %v1087
        %v1090 = vrot.slane %v1088, 1
        %v1093 = vmul.f32 %v1074, %v1088
        %v1094 = vmul.f32 %v1075, %v1090
        %v1095 = vtanh.pop %v1093
        %v1096 = vtanh.pop %v1094
        %v1099 = vrot.slane %v1095, 6
        %v1100 = vrot.slane %v1096, 6
        %v1103 = vmul.f32 %v1038, %v1099
        %v1104 = vmul.f32 %v1040, %v1100
        %s1105 = smul.u32 %s27, 4
        %s1106 = sadd.s32 %s1105, 4294967286
        %p1107 = scmp.ge.s32.totalorder %s1106, 0
        // Predicated region
        $region69: #{tpu_custom_call.1} parent=43 // pred_check
          %p1108 = pneg %p1107
        $region70: #{tpu_custom_call.1} parent=43 // pred_check_branch
          %1110 = sbr.rel (%p1108) target = $region72
        $region71: #{tpu_custom_call.1} parent=43 // pred_region
          %v1113 = vrot.slane %v1104, 7
          %vm1114 = vcmask 1044484
          %v1115 = vsel %vm1114, %v1113, %v1103
          %s1117 = smul.u32 %s1106, 2
          %s1118 = scalar_lea.vmem [#allocation4], %s1117
          %vm1119 = vcmask 258051
          %1120 = vst.msk [vmem:[%s1118 - $0x3] sm:$0x18] %vm1119, %v1115
        $region72: #{tpu_custom_call.1} parent=43 // pred_fallthru
          _
        %v1122 = vrot.slane %v1103, 3
        %v1123 = vsel %vm458, %v1122, 0
        %1125 = vmatprep.subr.mxu0 0.0
        %1126 = vmatpush1.msra.mxu0 0.0
        %1127 = vmatprep.subr.mxu0 0.0
        %1128 = vmatpush1.msra.mxu0 0.0
        %1129 = vmatprep.subr.mxu0 0.0
        %1130 = vmatpush1.msra.mxu0 0.0
        %1131 = vmatprep.subr.mxu0 0.0
        %1132 = vmatpush1.msra.mxu0 0.0
        %1133 = vmatprep.subr.mxu0 0.0
        %1134 = vmatpush1.msra.mxu0 0.0
        %1135 = vmatprep.subr.mxu0 0.0
        %1136 = vmatpush1.msra.mxu0 0.0
        %1137 = vmatprep.subr.mxu0 0.0
        %1138 = vmatpush1.msra.mxu0 0.0
        %1139 = vmatprep.subr.mxu0 0.0
        %1140 = vmatpush1.msra.mxu0 0.0
        %1141 = vmatprep.subr.mxu0 0.0
        %1142 = vmatpush1.msra.mxu0 0.0
        %1143 = vmatprep.subr.mxu0 0.0
        %1144 = vmatpush1.msra.mxu0 0.0
        %1145 = vmatprep.subr.mxu0 0.0
        %1146 = vmatpush1.msra.mxu0 0.0
        %1147 = vmatprep.subr.mxu0 0.0
        %1148 = vmatpush1.msra.mxu0 0.0
        %1149 = vmatprep.subr.mxu0 0.0
        %1150 = vmatpush1.msra.mxu0 %v418
        %1151 = vmatprep.subr.mxu0 0.0
        %1152 = vmatpush1.msra.mxu0 %v417
        %1153 = vmatprep.subr.mxu0 0.0
        %1154 = vmatpush1.msra.mxu0 %v416
        %1155 = vmatprep.subr.mxu0 0.0
        %1156 = vmatpush1.msra.mxu0 %v415
        %1157 = vmatprep.subr.mxu0 0.0
        %1158 = vmatpush2.msra.mxu0 0.0
        %1159 = vmatprep.subr.mxu0 0.0
        %1160 = vmatpush2.msra.mxu0 0.0
        %1161 = vmatprep.subr.mxu0 0.0
        %1162 = vmatpush2.msra.mxu0 0.0
        %1163 = vmatprep.subr.mxu0 0.0
        %1164 = vmatpush2.msra.mxu0 0.0
        %1165 = vmatprep.subr.mxu0 0.0
        %1166 = vmatpush2.msra.mxu0 0.0
        %1167 = vmatprep.subr.mxu0 0.0
        %1168 = vmatpush2.msra.mxu0 0.0
        %1169 = vmatprep.subr.mxu0 0.0
        %1170 = vmatpush2.msra.mxu0 0.0
        %1171 = vmatprep.subr.mxu0 0.0
        %1172 = vmatpush2.msra.mxu0 0.0
        %1173 = vmatprep.subr.mxu0 0.0
        %1174 = vmatpush2.msra.mxu0 0.0
        %1175 = vmatprep.subr.mxu0 0.0
        %1176 = vmatpush2.msra.mxu0 0.0
        %1177 = vmatprep.subr.mxu0 0.0
        %1178 = vmatpush2.msra.mxu0 0.0
        %1179 = vmatprep.subr.mxu0 0.0
        %1180 = vmatpush2.msra.mxu0 0.0
        %1181 = vmatprep.subr.mxu0 0.0
        %1182 = vmatpush2.msra.mxu0 0.0
        %1183 = vmatprep.subr.mxu0 0.0
        %1184 = vmatpush2.msra.mxu0 0.0
        %1185 = vmatprep.subr.mxu0 0.0
        %1186 = vmatpush2.msra.mxu0 0.0
        %1187 = vmatprep.subr.mxu0 0.0
        %1188 = vmatpush2.msra.mxu0 0.0
        %1189 = vmatprep.mubr.f32.mxu0 0.0
        %1190 = vmatmul.mubr.f32.gmra.mxu0 %v1123
        %v1191 = vpop.f32.mrf.mxu0
        %v1192 = vadd.f32 0.0, %v1191
        %v1193 = vpop.f32.mrf.mxu0
        %1194 = vdwg.mxu0
        %v1196 = vrot.slane %v1104, 3
        %v1197 = vsel %vm458, %v1196, 0
        %1199 = vmatprep.subr.mxu0 0.0
        %1200 = vmatpush1.msra.mxu0 0.0
        %1201 = vmatprep.subr.mxu0 0.0
        %1202 = vmatpush1.msra.mxu0 0.0
        %1203 = vmatprep.subr.mxu0 0.0
        %1204 = vmatpush1.msra.mxu0 0.0
        %1205 = vmatprep.subr.mxu0 0.0
        %1206 = vmatpush1.msra.mxu0 0.0
        %1207 = vmatprep.subr.mxu0 0.0
        %1208 = vmatpush1.msra.mxu0 0.0
        %1209 = vmatprep.subr.mxu0 0.0
        %1210 = vmatpush1.msra.mxu0 0.0
        %1211 = vmatprep.subr.mxu0 0.0
        %1212 = vmatpush1.msra.mxu0 0.0
        %1213 = vmatprep.subr.mxu0 0.0
        %1214 = vmatpush1.msra.mxu0 0.0
        %1215 = vmatprep.subr.mxu0 0.0
        %1216 = vmatpush1.msra.mxu0 0.0
        %1217 = vmatprep.subr.mxu0 0.0
        %1218 = vmatpush1.msra.mxu0 0.0
        %1219 = vmatprep.subr.mxu0 0.0
        %1220 = vmatpush1.msra.mxu0 0.0
        %1221 = vmatprep.subr.mxu0 0.0
        %1222 = vmatpush1.msra.mxu0 0.0
        %1223 = vmatprep.subr.mxu0 0.0
        %1224 = vmatpush1.msra.mxu0 %v422
        %1225 = vmatprep.subr.mxu0 0.0
        %1226 = vmatpush1.msra.mxu0 %v421
        %1227 = vmatprep.subr.mxu0 0.0
        %1228 = vmatpush1.msra.mxu0 %v420
        %1229 = vmatprep.subr.mxu0 0.0
        %1230 = vmatpush1.msra.mxu0 %v419
        %1231 = vmatprep.subr.mxu0 0.0
        %1232 = vmatpush2.msra.mxu0 0.0
        %1233 = vmatprep.subr.mxu0 0.0
        %1234 = vmatpush2.msra.mxu0 0.0
        %1235 = vmatprep.subr.mxu0 0.0
        %1236 = vmatpush2.msra.mxu0 0.0
        %1237 = vmatprep.subr.mxu0 0.0
        %1238 = vmatpush2.msra.mxu0 0.0
        %1239 = vmatprep.subr.mxu0 0.0
        %1240 = vmatpush2.msra.mxu0 0.0
        %1241 = vmatprep.subr.mxu0 0.0
        %1242 = vmatpush2.msra.mxu0 0.0
        %1243 = vmatprep.subr.mxu0 0.0
        %1244 = vmatpush2.msra.mxu0 0.0
        %1245 = vmatprep.subr.mxu0 0.0
        %1246 = vmatpush2.msra.mxu0 0.0
        %1247 = vmatprep.subr.mxu0 0.0
        %1248 = vmatpush2.msra.mxu0 0.0
        %1249 = vmatprep.subr.mxu0 0.0
        %1250 = vmatpush2.msra.mxu0 0.0
        %1251 = vmatprep.subr.mxu0 0.0
        %1252 = vmatpush2.msra.mxu0 0.0
        %1253 = vmatprep.subr.mxu0 0.0
        %1254 = vmatpush2.msra.mxu0 0.0
        %1255 = vmatprep.subr.mxu0 0.0
        %1256 = vmatpush2.msra.mxu0 0.0
        %1257 = vmatprep.subr.mxu0 0.0
        %1258 = vmatpush2.msra.mxu0 0.0
        %1259 = vmatprep.subr.mxu0 0.0
        %1260 = vmatpush2.msra.mxu0 0.0
        %1261 = vmatprep.subr.mxu0 0.0
        %1262 = vmatpush2.msra.mxu0 0.0
        %1263 = vmatprep.mubr.f32.mxu0 0.0
        %1264 = vmatmul.mubr.f32.gmra.mxu0 %v1197
        %v1265 = vpop.f32.mrf.mxu0
        %v1266 = vadd.f32 0.0, %v1265
        %v1267 = vpop.f32.mrf.mxu0
        %1268 = vdwg.mxu0
        %1271 = vrot.lane.b32.xlu0 %v1192, 96
        %v1272 = vpop.permute.xlu0 %1271
        %1273 = vrot.lane.b32.xlu0 %v1266, 96
        %v1274 = vpop.permute.xlu0 %1273
        %1277 = vrot.lane.b32.xlu0 %v1192, 64
        %v1278 = vpop.permute.xlu0 %1277
        %1279 = vrot.lane.b32.xlu0 %v1266, 64
        %v1280 = vpop.permute.xlu0 %1279
        %1283 = vrot.lane.b32.xlu0 %v1192, 32
        %v1284 = vpop.permute.xlu0 %1283
        %1285 = vrot.lane.b32.xlu0 %v1266, 32
        %v1286 = vpop.permute.xlu0 %1285
        %v1289 = vcombine.low %v1192, %v1278
        %v1291 = vunpack.c.l.s4 1983009808
        %v1292 = vunpack.c.0.s8 %v1291
        %v1293 = vlaneseq
        %v1294 = vshrl.u32 %v1293, 7
        %v1295 = vsub.s32 %v1292, %v1294
        %v1296 = vrot.slane %v1289, %v1295
        %v1297 = vcombine.low %v1272, %v1284
        %v1299 = vunpack.c.l.s4 1983009808
        %v1300 = vunpack.c.0.s8 %v1299
        %v1301 = vlaneseq
        %v1302 = vshrl.u32 %v1301, 7
        %v1303 = vsub.s32 %v1300, %v1302
        %v1304 = vrot.slane %v1297, %v1303
        %v1305 = vcombine.low %v1296, %v1304
        %v1307 = vunpack.c.l.s4 1934713408
        %v1308 = vunpack.c.0.s8 %v1307
        %v1309 = vlaneseq
        %v1310 = vshrl.u32 %v1309, 7
        %v1311 = vsub.s32 %v1308, %v1310
        %v1312 = vrot.slane %v1305, %v1311
        %v1313 = vcombine.low %v1266, %v1280
        %v1315 = vunpack.c.l.s4 1983009808
        %v1316 = vunpack.c.0.s8 %v1315
        %v1317 = vlaneseq
        %v1318 = vshrl.u32 %v1317, 7
        %v1319 = vsub.s32 %v1316, %v1318
        %v1320 = vrot.slane %v1313, %v1319
        %v1321 = vcombine.low %v1274, %v1286
        %v1323 = vunpack.c.l.s4 1983009808
        %v1324 = vunpack.c.0.s8 %v1323
        %v1325 = vlaneseq
        %v1326 = vshrl.u32 %v1325, 7
        %v1327 = vsub.s32 %v1324, %v1326
        %v1328 = vrot.slane %v1321, %v1327
        %v1329 = vcombine.low %v1320, %v1328
        %v1331 = vunpack.c.l.s4 1934713408
        %v1332 = vunpack.c.0.s8 %v1331
        %v1333 = vlaneseq
        %v1334 = vshrl.u32 %v1333, 7
        %v1335 = vsub.s32 %v1332, %v1334
        %v1336 = vrot.slane %v1329, %v1335
        %s1337 = scalar_lea.vmem %s342, 8 [#allocation5]
        %v1338 = vld [vmem:[%s1337] sm:$0xf]
        %v1339 = vld [vmem:[%s1337 + $0x4] sm:$0xf]
        %v1340 = vadd.f32 %v1312, %v1338
        %v1341 = vadd.f32 %v1336, %v1339
        %v1342 = vsel %vm675, %v1340, 0.0
        %1343 = vadd.xlane.f32.xlu0 %v1342
        %v1344 = vpop.xlane.xlu0 %1343
        %v1345 = vsel %vm675, %v1341, 0.0
        %1346 = vadd.xlane.f32.xlu0 %v1345
        %v1347 = vpop.xlane.xlu0 %1346
        %v1348 = vmul.f32 %v1344, %v682
        %v1349 = vmul.f32 %v1347, %v682
        %v1350 = vsub.f32 %v1340, %v1348
        %v1351 = vsub.f32 %v1341, %v1349
        %v1352 = vmul.f32 %v1350, %v1350
        %v1353 = vmul.f32 %v1351, %v1351
        %v1354 = vsel %vm675, %v1352, 0.0
        %1355 = vadd.xlane.f32.xlu0 %v1354
        %v1356 = vpop.xlane.xlu0 %1355
        %v1357 = vsel %vm675, %v1353, 0.0
        %1358 = vadd.xlane.f32.xlu0 %v1357
        %v1359 = vpop.xlane.xlu0 %1358
        %v1360 = vmul.f32 %v1356, %v682
        %v1361 = vmul.f32 %v1359, %v682
        %v1362 = vadd.f32 %v1360, 1e-05
        %v1363 = vadd.f32 %v1361, 1e-05
        %v1364 = vrsqrt.pop %v1362
        %v1365 = vrsqrt.pop %v1363
        %v1366 = vmul.f32 %v1350, %v1364
        %v1367 = vmul.f32 %v1351, %v1365
        %v1368 = vxor.u32 %v1366, 2147483648
        %v1369 = vxor.u32 %v1367, 2147483648
        %v1370 = vmul.f32 %v1368, 1.442695
        %v1371 = vpow.pop %v1370
        %v1372 = vmul.f32 %v1369, 1.442695
        %v1373 = vpow.pop %v1372
        %v1374 = vadd.f32 %v1371, 1.0
        %v1375 = vadd.f32 %v1373, 1.0
        %v1376 = vrcp.pop %v1374
        %v1377 = vmul.f32 1.0, %v1376
        %v1378 = vrcp.pop %v1375
        %v1379 = vmul.f32 1.0, %v1378
        %v1380 = vtanh.pop %v1366
        %v1381 = vtanh.pop %v1367
        %v1382 = vmul.f32 %v1377, %v1059
        %v1383 = vmul.f32 %v1379, %v1060
        %v1386 = vrot.slane %v1380, 2
        %v1387 = vrot.slane %v1381, 2
        %v1390 = vmul.f32 %v1377, %v1386
        %v1391 = vmul.f32 %v1379, %v1387
        %v1394 = vrot.slane %v1390, 7
        %v1395 = vrot.slane %v1391, 7
        %v1398 = vadd.f32 %v1382, %v1394
        %v1399 = vadd.f32 %v1383, %v1395
        %v1402 = vrot.slane %v1399, 7
        %v1403 = vsel %vm742, %v1402, %v1398
        %v1405 = vsel %vm745, %v1403, 0.0
        %1406 = vadd.xlane.f32.xlu0 %v1405
        %v1407 = vpop.xlane.xlu0 %1406
        %v1408 = vmul.f32 %v1407, %v682
        %v1410 = vrot.slane %v1408, 1
        %v1413 = vsub.f32 %v1398, %v1408
        %v1414 = vsub.f32 %v1399, %v1410
        %v1415 = vmul.f32 %v1413, %v1413
        %v1416 = vmul.f32 %v1414, %v1414
        %v1419 = vrot.slane %v1416, 7
        %v1420 = vsel %vm742, %v1419, %v1415
        %v1422 = vsel %vm745, %v1420, 0.0
        %1423 = vadd.xlane.f32.xlu0 %v1422
        %v1424 = vpop.xlane.xlu0 %1423
        %v1425 = vmul.f32 %v1424, %v682
        %v1426 = vadd.f32 %v1425, 1e-05
        %v1427 = vrsqrt.pop %v1426
        %v1429 = vrot.slane %v1427, 1
        %v1432 = vmul.f32 %v1413, %v1427
        %v1433 = vmul.f32 %v1414, %v1429
        %v1434 = vtanh.pop %v1432
        %v1435 = vtanh.pop %v1433
        %v1438 = vrot.slane %v1434, 6
        %v1439 = vrot.slane %v1435, 6
        %v1442 = vmul.f32 %v1377, %v1438
        %v1443 = vmul.f32 %v1379, %v1439
        %v1445 = vrot.slane %v1442, 3
        %v1446 = vsel %vm458, %v1445, 0
        %1448 = vmatprep.subr.mxu0 0.0
        %1449 = vmatpush1.msra.mxu0 0.0
        %1450 = vmatprep.subr.mxu0 0.0
        %1451 = vmatpush1.msra.mxu0 0.0
        %1452 = vmatprep.subr.mxu0 0.0
        %1453 = vmatpush1.msra.mxu0 0.0
        %1454 = vmatprep.subr.mxu0 0.0
        %1455 = vmatpush1.msra.mxu0 0.0
        %1456 = vmatprep.subr.mxu0 0.0
        %1457 = vmatpush1.msra.mxu0 0.0
        %1458 = vmatprep.subr.mxu0 0.0
        %1459 = vmatpush1.msra.mxu0 0.0
        %1460 = vmatprep.subr.mxu0 0.0
        %1461 = vmatpush1.msra.mxu0 0.0
        %1462 = vmatprep.subr.mxu0 0.0
        %1463 = vmatpush1.msra.mxu0 0.0
        %1464 = vmatprep.subr.mxu0 0.0
        %1465 = vmatpush1.msra.mxu0 0.0
        %1466 = vmatprep.subr.mxu0 0.0
        %1467 = vmatpush1.msra.mxu0 0.0
        %1468 = vmatprep.subr.mxu0 0.0
        %1469 = vmatpush1.msra.mxu0 0.0
        %1470 = vmatprep.subr.mxu0 0.0
        %1471 = vmatpush1.msra.mxu0 0.0
        %1472 = vmatprep.subr.mxu0 0.0
        %1473 = vmatpush1.msra.mxu0 %v426
        %1474 = vmatprep.subr.mxu0 0.0
        %1475 = vmatpush1.msra.mxu0 %v425
        %1476 = vmatprep.subr.mxu0 0.0
        %1477 = vmatpush1.msra.mxu0 %v424
        %1478 = vmatprep.subr.mxu0 0.0
        %1479 = vmatpush1.msra.mxu0 %v423
        %1480 = vmatprep.subr.mxu0 0.0
        %1481 = vmatpush2.msra.mxu0 0.0
        %1482 = vmatprep.subr.mxu0 0.0
        %1483 = vmatpush2.msra.mxu0 0.0
        %1484 = vmatprep.subr.mxu0 0.0
        %1485 = vmatpush2.msra.mxu0 0.0
        %1486 = vmatprep.subr.mxu0 0.0
        %1487 = vmatpush2.msra.mxu0 0.0
        %1488 = vmatprep.subr.mxu0 0.0
        %1489 = vmatpush2.msra.mxu0 0.0
        %1490 = vmatprep.subr.mxu0 0.0
        %1491 = vmatpush2.msra.mxu0 0.0
        %1492 = vmatprep.subr.mxu0 0.0
        %1493 = vmatpush2.msra.mxu0 0.0
        %1494 = vmatprep.subr.mxu0 0.0
        %1495 = vmatpush2.msra.mxu0 0.0
        %1496 = vmatprep.subr.mxu0 0.0
        %1497 = vmatpush2.msra.mxu0 0.0
        %1498 = vmatprep.subr.mxu0 0.0
        %1499 = vmatpush2.msra.mxu0 0.0
        %1500 = vmatprep.subr.mxu0 0.0
        %1501 = vmatpush2.msra.mxu0 0.0
        %1502 = vmatprep.subr.mxu0 0.0
        %1503 = vmatpush2.msra.mxu0 0.0
        %1504 = vmatprep.subr.mxu0 0.0
        %1505 = vmatpush2.msra.mxu0 0.0
        %1506 = vmatprep.subr.mxu0 0.0
        %1507 = vmatpush2.msra.mxu0 0.0
        %1508 = vmatprep.subr.mxu0 0.0
        %1509 = vmatpush2.msra.mxu0 0.0
        %1510 = vmatprep.subr.mxu0 0.0
        %1511 = vmatpush2.msra.mxu0 0.0
        %1512 = vmatprep.mubr.f32.mxu0 0.0
        %1513 = vmatmul.mubr.f32.gmra.mxu0 %v1446
        %v1514 = vpop.f32.mrf.mxu0
        %v1515 = vadd.f32 0.0, %v1514
        %v1516 = vpop.f32.mrf.mxu0
        %1517 = vdwg.mxu0
        %v1519 = vrot.slane %v1443, 3
        %v1520 = vsel %vm458, %v1519, 0
        %1522 = vmatprep.subr.mxu0 0.0
        %1523 = vmatpush1.msra.mxu0 0.0
        %1524 = vmatprep.subr.mxu0 0.0
        %1525 = vmatpush1.msra.mxu0 0.0
        %1526 = vmatprep.subr.mxu0 0.0
        %1527 = vmatpush1.msra.mxu0 0.0
        %1528 = vmatprep.subr.mxu0 0.0
        %1529 = vmatpush1.msra.mxu0 0.0
        %1530 = vmatprep.subr.mxu0 0.0
        %1531 = vmatpush1.msra.mxu0 0.0
        %1532 = vmatprep.subr.mxu0 0.0
        %1533 = vmatpush1.msra.mxu0 0.0
        %1534 = vmatprep.subr.mxu0 0.0
        %1535 = vmatpush1.msra.mxu0 0.0
        %1536 = vmatprep.subr.mxu0 0.0
        %1537 = vmatpush1.msra.mxu0 0.0
        %1538 = vmatprep.subr.mxu0 0.0
        %1539 = vmatpush1.msra.mxu0 0.0
        %1540 = vmatprep.subr.mxu0 0.0
        %1541 = vmatpush1.msra.mxu0 0.0
        %1542 = vmatprep.subr.mxu0 0.0
        %1543 = vmatpush1.msra.mxu0 0.0
        %1544 = vmatprep.subr.mxu0 0.0
        %1545 = vmatpush1.msra.mxu0 0.0
        %1546 = vmatprep.subr.mxu0 0.0
        %1547 = vmatpush1.msra.mxu0 %v430
        %1548 = vmatprep.subr.mxu0 0.0
        %1549 = vmatpush1.msra.mxu0 %v429
        %1550 = vmatprep.subr.mxu0 0.0
        %1551 = vmatpush1.msra.mxu0 %v428
        %1552 = vmatprep.subr.mxu0 0.0
        %1553 = vmatpush1.msra.mxu0 %v427
        %1554 = vmatprep.subr.mxu0 0.0
        %1555 = vmatpush2.msra.mxu0 0.0
        %1556 = vmatprep.subr.mxu0 0.0
        %1557 = vmatpush2.msra.mxu0 0.0
        %1558 = vmatprep.subr.mxu0 0.0
        %1559 = vmatpush2.msra.mxu0 0.0
        %1560 = vmatprep.subr.mxu0 0.0
        %1561 = vmatpush2.msra.mxu0 0.0
        %1562 = vmatprep.subr.mxu0 0.0
        %1563 = vmatpush2.msra.mxu0 0.0
        %1564 = vmatprep.subr.mxu0 0.0
        %1565 = vmatpush2.msra.mxu0 0.0
        %1566 = vmatprep.subr.mxu0 0.0
        %1567 = vmatpush2.msra.mxu0 0.0
        %1568 = vmatprep.subr.mxu0 0.0
        %1569 = vmatpush2.msra.mxu0 0.0
        %1570 = vmatprep.subr.mxu0 0.0
        %1571 = vmatpush2.msra.mxu0 0.0
        %1572 = vmatprep.subr.mxu0 0.0
        %1573 = vmatpush2.msra.mxu0 0.0
        %1574 = vmatprep.subr.mxu0 0.0
        %1575 = vmatpush2.msra.mxu0 0.0
        %1576 = vmatprep.subr.mxu0 0.0
        %1577 = vmatpush2.msra.mxu0 0.0
        %1578 = vmatprep.subr.mxu0 0.0
        %1579 = vmatpush2.msra.mxu0 0.0
        %1580 = vmatprep.subr.mxu0 0.0
        %1581 = vmatpush2.msra.mxu0 0.0
        %1582 = vmatprep.subr.mxu0 0.0
        %1583 = vmatpush2.msra.mxu0 0.0
        %1584 = vmatprep.subr.mxu0 0.0
        %1585 = vmatpush2.msra.mxu0 0.0
        %1586 = vmatprep.mubr.f32.mxu0 0.0
        %1587 = vmatmul.mubr.f32.gmra.mxu0 %v1520
        %v1588 = vpop.f32.mrf.mxu0
        %v1589 = vadd.f32 0.0, %v1588
        %v1590 = vpop.f32.mrf.mxu0
        %1591 = vdwg.mxu0
        %1594 = vrot.lane.b32.xlu0 %v1515, 96
        %v1595 = vpop.permute.xlu0 %1594
        %1596 = vrot.lane.b32.xlu0 %v1589, 96
        %v1597 = vpop.permute.xlu0 %1596
        %1600 = vrot.lane.b32.xlu0 %v1515, 64
        %v1601 = vpop.permute.xlu0 %1600
        %1602 = vrot.lane.b32.xlu0 %v1589, 64
        %v1603 = vpop.permute.xlu0 %1602
        %1606 = vrot.lane.b32.xlu0 %v1515, 32
        %v1607 = vpop.permute.xlu0 %1606
        %1608 = vrot.lane.b32.xlu0 %v1589, 32
        %v1609 = vpop.permute.xlu0 %1608
        %v1612 = vcombine.low %v1515, %v1601
        %v1614 = vunpack.c.l.s4 1983009808
        %v1615 = vunpack.c.0.s8 %v1614
        %v1616 = vlaneseq
        %v1617 = vshrl.u32 %v1616, 7
        %v1618 = vsub.s32 %v1615, %v1617
        %v1619 = vrot.slane %v1612, %v1618
        %v1620 = vcombine.low %v1595, %v1607
        %v1622 = vunpack.c.l.s4 1983009808
        %v1623 = vunpack.c.0.s8 %v1622
        %v1624 = vlaneseq
        %v1625 = vshrl.u32 %v1624, 7
        %v1626 = vsub.s32 %v1623, %v1625
        %v1627 = vrot.slane %v1620, %v1626
        %v1628 = vcombine.low %v1619, %v1627
        %v1630 = vunpack.c.l.s4 1934713408
        %v1631 = vunpack.c.0.s8 %v1630
        %v1632 = vlaneseq
        %v1633 = vshrl.u32 %v1632, 7
        %v1634 = vsub.s32 %v1631, %v1633
        %v1635 = vrot.slane %v1628, %v1634
        %v1636 = vcombine.low %v1589, %v1603
        %v1638 = vunpack.c.l.s4 1983009808
        %v1639 = vunpack.c.0.s8 %v1638
        %v1640 = vlaneseq
        %v1641 = vshrl.u32 %v1640, 7
        %v1642 = vsub.s32 %v1639, %v1641
        %v1643 = vrot.slane %v1636, %v1642
        %v1644 = vcombine.low %v1597, %v1609
        %v1646 = vunpack.c.l.s4 1983009808
        %v1647 = vunpack.c.0.s8 %v1646
        %v1648 = vlaneseq
        %v1649 = vshrl.u32 %v1648, 7
        %v1650 = vsub.s32 %v1647, %v1649
        %v1651 = vrot.slane %v1644, %v1650
        %v1652 = vcombine.low %v1643, %v1651
        %v1654 = vunpack.c.l.s4 1934713408
        %v1655 = vunpack.c.0.s8 %v1654
        %v1656 = vlaneseq
        %v1657 = vshrl.u32 %v1656, 7
        %v1658 = vsub.s32 %v1655, %v1657
        %v1659 = vrot.slane %v1652, %v1658
        %v1660 = vadd.f32 %v1635, %v431
        %v1661 = vadd.f32 %v1659, %v432
        %v1662 = vsel %vm675, %v1660, 0.0
        %1663 = vadd.xlane.f32.xlu0 %v1662
        %v1664 = vpop.xlane.xlu0 %1663
        %v1665 = vsel %vm675, %v1661, 0.0
        %1666 = vadd.xlane.f32.xlu0 %v1665
        %v1667 = vpop.xlane.xlu0 %1666
        %v1668 = vmul.f32 %v1664, %v682
        %v1669 = vmul.f32 %v1667, %v682
        %v1670 = vsub.f32 %v1660, %v1668
        %v1671 = vsub.f32 %v1661, %v1669
        %v1672 = vmul.f32 %v1670, %v1670
        %v1673 = vmul.f32 %v1671, %v1671
        %v1674 = vsel %vm675, %v1672, 0.0
        %1675 = vadd.xlane.f32.xlu0 %v1674
        %v1676 = vpop.xlane.xlu0 %1675
        %v1677 = vsel %vm675, %v1673, 0.0
        %1678 = vadd.xlane.f32.xlu0 %v1677
        %v1679 = vpop.xlane.xlu0 %1678
        %v1680 = vmul.f32 %v1676, %v682
        %v1681 = vmul.f32 %v1679, %v682
        %v1682 = vadd.f32 %v1680, 1e-05
        %v1683 = vadd.f32 %v1681, 1e-05
        %v1684 = vrsqrt.pop %v1682
        %v1685 = vrsqrt.pop %v1683
        %v1686 = vmul.f32 %v1670, %v1684
        %v1687 = vmul.f32 %v1671, %v1685
        %v1688 = vxor.u32 %v1686, 2147483648
        %v1689 = vxor.u32 %v1687, 2147483648
        %v1690 = vmul.f32 %v1688, 1.442695
        %v1691 = vpow.pop %v1690
        %v1692 = vmul.f32 %v1689, 1.442695
        %v1693 = vpow.pop %v1692
        %v1694 = vadd.f32 %v1691, 1.0
        %v1695 = vadd.f32 %v1693, 1.0
        %v1696 = vrcp.pop %v1694
        %v1697 = vmul.f32 1.0, %v1696
        %v1698 = vrcp.pop %v1695
        %v1699 = vmul.f32 1.0, %v1698
        %v1700 = vtanh.pop %v1686
        %v1701 = vtanh.pop %v1687
        %v1702 = vmul.f32 %v1697, %v1398
        %v1703 = vmul.f32 %v1699, %v1399
        %v1706 = vrot.slane %v1700, 2
        %v1707 = vrot.slane %v1701, 2
        %v1710 = vmul.f32 %v1697, %v1706
        %v1711 = vmul.f32 %v1699, %v1707
        %v1714 = vrot.slane %v1710, 7
        %v1715 = vrot.slane %v1711, 7
        %v1718 = vadd.f32 %v1702, %v1714
        %v1719 = vadd.f32 %v1703, %v1715
        %v1722 = vrot.slane %v1719, 7
        %v1723 = vsel %vm742, %v1722, %v1718
        %v1725 = vsel %vm745, %v1723, 0.0
        %1726 = vadd.xlane.f32.xlu0 %v1725
        %v1727 = vpop.xlane.xlu0 %1726
        %v1728 = vmul.f32 %v1727, %v682
        %v1730 = vrot.slane %v1728, 1
        %v1733 = vsub.f32 %v1718, %v1728
        %v1734 = vsub.f32 %v1719, %v1730
        %v1735 = vmul.f32 %v1733, %v1733
        %v1736 = vmul.f32 %v1734, %v1734
        %v1739 = vrot.slane %v1736, 7
        %v1740 = vsel %vm742, %v1739, %v1735
        %v1742 = vsel %vm745, %v1740, 0.0
        %1743 = vadd.xlane.f32.xlu0 %v1742
        %v1744 = vpop.xlane.xlu0 %1743
        %v1745 = vmul.f32 %v1744, %v682
        %v1746 = vadd.f32 %v1745, 1e-05
        %v1747 = vrsqrt.pop %v1746
        %v1749 = vrot.slane %v1747, 1
        %v1752 = vmul.f32 %v1733, %v1747
        %v1753 = vmul.f32 %v1734, %v1749
        %v1754 = vtanh.pop %v1752
        %v1755 = vtanh.pop %v1753
        %v1758 = vrot.slane %v1754, 6
        %v1759 = vrot.slane %v1755, 6
        %v1762 = vmul.f32 %v1697, %v1758
        %v1763 = vmul.f32 %v1699, %v1759
        %s1764 = sadd.s32 %s1105, 4294967287
        %p1765 = scmp.ge.s32.totalorder %s1764, 0
        // Predicated region
        $region73: #{tpu_custom_call.1} parent=43 // pred_check
          %p1766 = pneg %p1765
        $region74: #{tpu_custom_call.1} parent=43 // pred_check_branch
          %1768 = sbr.rel (%p1766) target = $region76
        $region75: #{tpu_custom_call.1} parent=43 // pred_region
          %v1771 = vrot.slane %v1763, 7
          %vm1772 = vcmask 1044484
          %v1773 = vsel %vm1772, %v1771, %v1762
          %s1775 = smul.u32 %s1764, 2
          %s1776 = scalar_lea.vmem [#allocation4], %s1775
          %vm1777 = vcmask 258051
          %1778 = vst.msk [vmem:[%s1776 - $0x3] sm:$0x18] %vm1777, %v1773
        $region76: #{tpu_custom_call.1} parent=43 // pred_fallthru
          _
        %v1780 = vrot.slane %v1762, 3
        %v1781 = vsel %vm458, %v1780, 0
        %1783 = vmatprep.subr.mxu0 0.0
        %1784 = vmatpush1.msra.mxu0 0.0
        %1785 = vmatprep.subr.mxu0 0.0
        %1786 = vmatpush1.msra.mxu0 0.0
        %1787 = vmatprep.subr.mxu0 0.0
        %1788 = vmatpush1.msra.mxu0 0.0
        %1789 = vmatprep.subr.mxu0 0.0
        %1790 = vmatpush1.msra.mxu0 0.0
        %1791 = vmatprep.subr.mxu0 0.0
        %1792 = vmatpush1.msra.mxu0 0.0
        %1793 = vmatprep.subr.mxu0 0.0
        %1794 = vmatpush1.msra.mxu0 0.0
        %1795 = vmatprep.subr.mxu0 0.0
        %1796 = vmatpush1.msra.mxu0 0.0
        %1797 = vmatprep.subr.mxu0 0.0
        %1798 = vmatpush1.msra.mxu0 0.0
        %1799 = vmatprep.subr.mxu0 0.0
        %1800 = vmatpush1.msra.mxu0 0.0
        %1801 = vmatprep.subr.mxu0 0.0
        %1802 = vmatpush1.msra.mxu0 0.0
        %1803 = vmatprep.subr.mxu0 0.0
        %1804 = vmatpush1.msra.mxu0 0.0
        %1805 = vmatprep.subr.mxu0 0.0
        %1806 = vmatpush1.msra.mxu0 0.0
        %1807 = vmatprep.subr.mxu0 0.0
        %1808 = vmatpush1.msra.mxu0 %v418
        %1809 = vmatprep.subr.mxu0 0.0
        %1810 = vmatpush1.msra.mxu0 %v417
        %1811 = vmatprep.subr.mxu0 0.0
        %1812 = vmatpush1.msra.mxu0 %v416
        %1813 = vmatprep.subr.mxu0 0.0
        %1814 = vmatpush1.msra.mxu0 %v415
        %1815 = vmatprep.subr.mxu0 0.0
        %1816 = vmatpush2.msra.mxu0 0.0
        %1817 = vmatprep.subr.mxu0 0.0
        %1818 = vmatpush2.msra.mxu0 0.0
        %1819 = vmatprep.subr.mxu0 0.0
        %1820 = vmatpush2.msra.mxu0 0.0
        %1821 = vmatprep.subr.mxu0 0.0
        %1822 = vmatpush2.msra.mxu0 0.0
        %1823 = vmatprep.subr.mxu0 0.0
        %1824 = vmatpush2.msra.mxu0 0.0
        %1825 = vmatprep.subr.mxu0 0.0
        %1826 = vmatpush2.msra.mxu0 0.0
        %1827 = vmatprep.subr.mxu0 0.0
        %1828 = vmatpush2.msra.mxu0 0.0
        %1829 = vmatprep.subr.mxu0 0.0
        %1830 = vmatpush2.msra.mxu0 0.0
        %1831 = vmatprep.subr.mxu0 0.0
        %1832 = vmatpush2.msra.mxu0 0.0
        %1833 = vmatprep.subr.mxu0 0.0
        %1834 = vmatpush2.msra.mxu0 0.0
        %1835 = vmatprep.subr.mxu0 0.0
        %1836 = vmatpush2.msra.mxu0 0.0
        %1837 = vmatprep.subr.mxu0 0.0
        %1838 = vmatpush2.msra.mxu0 0.0
        %1839 = vmatprep.subr.mxu0 0.0
        %1840 = vmatpush2.msra.mxu0 0.0
        %1841 = vmatprep.subr.mxu0 0.0
        %1842 = vmatpush2.msra.mxu0 0.0
        %1843 = vmatprep.subr.mxu0 0.0
        %1844 = vmatpush2.msra.mxu0 0.0
        %1845 = vmatprep.subr.mxu0 0.0
        %1846 = vmatpush2.msra.mxu0 0.0
        %1847 = vmatprep.mubr.f32.mxu0 0.0
        %1848 = vmatmul.mubr.f32.gmra.mxu0 %v1781
        %v1849 = vpop.f32.mrf.mxu0
        %v1850 = vadd.f32 0.0, %v1849
        %v1851 = vpop.f32.mrf.mxu0
        %1852 = vdwg.mxu0
        %v1854 = vrot.slane %v1763, 3
        %v1855 = vsel %vm458, %v1854, 0
        %1857 = vmatprep.subr.mxu0 0.0
        %1858 = vmatpush1.msra.mxu0 0.0
        %1859 = vmatprep.subr.mxu0 0.0
        %1860 = vmatpush1.msra.mxu0 0.0
        %1861 = vmatprep.subr.mxu0 0.0
        %1862 = vmatpush1.msra.mxu0 0.0
        %1863 = vmatprep.subr.mxu0 0.0
        %1864 = vmatpush1.msra.mxu0 0.0
        %1865 = vmatprep.subr.mxu0 0.0
        %1866 = vmatpush1.msra.mxu0 0.0
        %1867 = vmatprep.subr.mxu0 0.0
        %1868 = vmatpush1.msra.mxu0 0.0
        %1869 = vmatprep.subr.mxu0 0.0
        %1870 = vmatpush1.msra.mxu0 0.0
        %1871 = vmatprep.subr.mxu0 0.0
        %1872 = vmatpush1.msra.mxu0 0.0
        %1873 = vmatprep.subr.mxu0 0.0
        %1874 = vmatpush1.msra.mxu0 0.0
        %1875 = vmatprep.subr.mxu0 0.0
        %1876 = vmatpush1.msra.mxu0 0.0
        %1877 = vmatprep.subr.mxu0 0.0
        %1878 = vmatpush1.msra.mxu0 0.0
        %1879 = vmatprep.subr.mxu0 0.0
        %1880 = vmatpush1.msra.mxu0 0.0
        %1881 = vmatprep.subr.mxu0 0.0
        %1882 = vmatpush1.msra.mxu0 %v422
        %1883 = vmatprep.subr.mxu0 0.0
        %1884 = vmatpush1.msra.mxu0 %v421
        %1885 = vmatprep.subr.mxu0 0.0
        %1886 = vmatpush1.msra.mxu0 %v420
        %1887 = vmatprep.subr.mxu0 0.0
        %1888 = vmatpush1.msra.mxu0 %v419
        %1889 = vmatprep.subr.mxu0 0.0
        %1890 = vmatpush2.msra.mxu0 0.0
        %1891 = vmatprep.subr.mxu0 0.0
        %1892 = vmatpush2.msra.mxu0 0.0
        %1893 = vmatprep.subr.mxu0 0.0
        %1894 = vmatpush2.msra.mxu0 0.0
        %1895 = vmatprep.subr.mxu0 0.0
        %1896 = vmatpush2.msra.mxu0 0.0
        %1897 = vmatprep.subr.mxu0 0.0
        %1898 = vmatpush2.msra.mxu0 0.0
        %1899 = vmatprep.subr.mxu0 0.0
        %1900 = vmatpush2.msra.mxu0 0.0
        %1901 = vmatprep.subr.mxu0 0.0
        %1902 = vmatpush2.msra.mxu0 0.0
        %1903 = vmatprep.subr.mxu0 0.0
        %1904 = vmatpush2.msra.mxu0 0.0
        %1905 = vmatprep.subr.mxu0 0.0
        %1906 = vmatpush2.msra.mxu0 0.0
        %1907 = vmatprep.subr.mxu0 0.0
        %1908 = vmatpush2.msra.mxu0 0.0
        %1909 = vmatprep.subr.mxu0 0.0
        %1910 = vmatpush2.msra.mxu0 0.0
        %1911 = vmatprep.subr.mxu0 0.0
        %1912 = vmatpush2.msra.mxu0 0.0
        %1913 = vmatprep.subr.mxu0 0.0
        %1914 = vmatpush2.msra.mxu0 0.0
        %1915 = vmatprep.subr.mxu0 0.0
        %1916 = vmatpush2.msra.mxu0 0.0
        %1917 = vmatprep.subr.mxu0 0.0
        %1918 = vmatpush2.msra.mxu0 0.0
        %1919 = vmatprep.subr.mxu0 0.0
        %1920 = vmatpush2.msra.mxu0 0.0
        %1921 = vmatprep.mubr.f32.mxu0 0.0
        %1922 = vmatmul.mubr.f32.gmra.mxu0 %v1855
        %v1923 = vpop.f32.mrf.mxu0
        %v1924 = vadd.f32 0.0, %v1923
        %v1925 = vpop.f32.mrf.mxu0
        %1926 = vdwg.mxu0
        %1929 = vrot.lane.b32.xlu0 %v1850, 96
        %v1930 = vpop.permute.xlu0 %1929
        %1931 = vrot.lane.b32.xlu0 %v1924, 96
        %v1932 = vpop.permute.xlu0 %1931
        %1935 = vrot.lane.b32.xlu0 %v1850, 64
        %v1936 = vpop.permute.xlu0 %1935
        %1937 = vrot.lane.b32.xlu0 %v1924, 64
        %v1938 = vpop.permute.xlu0 %1937
        %1941 = vrot.lane.b32.xlu0 %v1850, 32
        %v1942 = vpop.permute.xlu0 %1941
        %1943 = vrot.lane.b32.xlu0 %v1924, 32
        %v1944 = vpop.permute.xlu0 %1943
        %v1947 = vcombine.low %v1850, %v1936
        %v1949 = vunpack.c.l.s4 1983009808
        %v1950 = vunpack.c.0.s8 %v1949
        %v1951 = vlaneseq
        %v1952 = vshrl.u32 %v1951, 7
        %v1953 = vsub.s32 %v1950, %v1952
        %v1954 = vrot.slane %v1947, %v1953
        %v1955 = vcombine.low %v1930, %v1942
        %v1957 = vunpack.c.l.s4 1983009808
        %v1958 = vunpack.c.0.s8 %v1957
        %v1959 = vlaneseq
        %v1960 = vshrl.u32 %v1959, 7
        %v1961 = vsub.s32 %v1958, %v1960
        %v1962 = vrot.slane %v1955, %v1961
        %v1963 = vcombine.low %v1954, %v1962
        %v1965 = vunpack.c.l.s4 1934713408
        %v1966 = vunpack.c.0.s8 %v1965
        %v1967 = vlaneseq
        %v1968 = vshrl.u32 %v1967, 7
        %v1969 = vsub.s32 %v1966, %v1968
        %v1970 = vrot.slane %v1963, %v1969
        %v1971 = vcombine.low %v1924, %v1938
        %v1973 = vunpack.c.l.s4 1983009808
        %v1974 = vunpack.c.0.s8 %v1973
        %v1975 = vlaneseq
        %v1976 = vshrl.u32 %v1975, 7
        %v1977 = vsub.s32 %v1974, %v1976
        %v1978 = vrot.slane %v1971, %v1977
        %v1979 = vcombine.low %v1932, %v1944
        %v1981 = vunpack.c.l.s4 1983009808
        %v1982 = vunpack.c.0.s8 %v1981
        %v1983 = vlaneseq
        %v1984 = vshrl.u32 %v1983, 7
        %v1985 = vsub.s32 %v1982, %v1984
        %v1986 = vrot.slane %v1979, %v1985
        %v1987 = vcombine.low %v1978, %v1986
        %v1989 = vunpack.c.l.s4 1934713408
        %v1990 = vunpack.c.0.s8 %v1989
        %v1991 = vlaneseq
        %v1992 = vshrl.u32 %v1991, 7
        %v1993 = vsub.s32 %v1990, %v1992
        %v1994 = vrot.slane %v1987, %v1993
        %s1995 = scalar_lea.vmem %s342, 16 [#allocation5]
        %v1996 = vld [vmem:[%s1995] sm:$0xf]
        %v1997 = vld [vmem:[%s1995 + $0x4] sm:$0xf]
        %v1998 = vadd.f32 %v1970, %v1996
        %v1999 = vadd.f32 %v1994, %v1997
        %v2000 = vsel %vm675, %v1998, 0.0
        %2001 = vadd.xlane.f32.xlu0 %v2000
        %v2002 = vpop.xlane.xlu0 %2001
        %v2003 = vsel %vm675, %v1999, 0.0
        %2004 = vadd.xlane.f32.xlu0 %v2003
        %v2005 = vpop.xlane.xlu0 %2004
        %v2006 = vmul.f32 %v2002, %v682
        %v2007 = vmul.f32 %v2005, %v682
        %v2008 = vsub.f32 %v1998, %v2006
        %v2009 = vsub.f32 %v1999, %v2007
        %v2010 = vmul.f32 %v2008, %v2008
        %v2011 = vmul.f32 %v2009, %v2009
        %v2012 = vsel %vm675, %v2010, 0.0
        %2013 = vadd.xlane.f32.xlu0 %v2012
        %v2014 = vpop.xlane.xlu0 %2013
        %v2015 = vsel %vm675, %v2011, 0.0
        %2016 = vadd.xlane.f32.xlu0 %v2015
        %v2017 = vpop.xlane.xlu0 %2016
        %v2018 = vmul.f32 %v2014, %v682
        %v2019 = vmul.f32 %v2017, %v682
        %v2020 = vadd.f32 %v2018, 1e-05
        %v2021 = vadd.f32 %v2019, 1e-05
        %v2022 = vrsqrt.pop %v2020
        %v2023 = vrsqrt.pop %v2021
        %v2024 = vmul.f32 %v2008, %v2022
        %v2025 = vmul.f32 %v2009, %v2023
        %v2026 = vxor.u32 %v2024, 2147483648
        %v2027 = vxor.u32 %v2025, 2147483648
        %v2028 = vmul.f32 %v2026, 1.442695
        %v2029 = vpow.pop %v2028
        %v2030 = vmul.f32 %v2027, 1.442695
        %v2031 = vpow.pop %v2030
        %v2032 = vadd.f32 %v2029, 1.0
        %v2033 = vadd.f32 %v2031, 1.0
        %v2034 = vrcp.pop %v2032
        %v2035 = vmul.f32 1.0, %v2034
        %v2036 = vrcp.pop %v2033
        %v2037 = vmul.f32 1.0, %v2036
        %v2038 = vtanh.pop %v2024
        %v2039 = vtanh.pop %v2025
        %v2040 = vmul.f32 %v2035, %v1718
        %v2041 = vmul.f32 %v2037, %v1719
        %v2044 = vrot.slane %v2038, 2
        %v2045 = vrot.slane %v2039, 2
        %v2048 = vmul.f32 %v2035, %v2044
        %v2049 = vmul.f32 %v2037, %v2045
        %v2052 = vrot.slane %v2048, 7
        %v2053 = vrot.slane %v2049, 7
        %v2056 = vadd.f32 %v2040, %v2052
        %v2057 = vadd.f32 %v2041, %v2053
        %v2060 = vrot.slane %v2057, 7
        %v2061 = vsel %vm742, %v2060, %v2056
        %v2063 = vsel %vm745, %v2061, 0.0
        %2064 = vadd.xlane.f32.xlu0 %v2063
        %v2065 = vpop.xlane.xlu0 %2064
        %v2066 = vmul.f32 %v2065, %v682
        %v2068 = vrot.slane %v2066, 1
        %v2071 = vsub.f32 %v2056, %v2066
        %v2072 = vsub.f32 %v2057, %v2068
        %v2073 = vmul.f32 %v2071, %v2071
        %v2074 = vmul.f32 %v2072, %v2072
        %v2077 = vrot.slane %v2074, 7
        %v2078 = vsel %vm742, %v2077, %v2073
        %v2080 = vsel %vm745, %v2078, 0.0
        %2081 = vadd.xlane.f32.xlu0 %v2080
        %v2082 = vpop.xlane.xlu0 %2081
        %v2083 = vmul.f32 %v2082, %v682
        %v2084 = vadd.f32 %v2083, 1e-05
        %v2085 = vrsqrt.pop %v2084
        %v2087 = vrot.slane %v2085, 1
        %v2090 = vmul.f32 %v2071, %v2085
        %v2091 = vmul.f32 %v2072, %v2087
        %v2092 = vtanh.pop %v2090
        %v2093 = vtanh.pop %v2091
        %v2096 = vrot.slane %v2092, 6
        %v2097 = vrot.slane %v2093, 6
        %v2100 = vmul.f32 %v2035, %v2096
        %v2101 = vmul.f32 %v2037, %v2097
        %v2103 = vrot.slane %v2100, 3
        %v2104 = vsel %vm458, %v2103, 0
        %2106 = vmatprep.subr.mxu0 0.0
        %2107 = vmatpush1.msra.mxu0 0.0
        %2108 = vmatprep.subr.mxu0 0.0
        %2109 = vmatpush1.msra.mxu0 0.0
        %2110 = vmatprep.subr.mxu0 0.0
        %2111 = vmatpush1.msra.mxu0 0.0
        %2112 = vmatprep.subr.mxu0 0.0
        %2113 = vmatpush1.msra.mxu0 0.0
        %2114 = vmatprep.subr.mxu0 0.0
        %2115 = vmatpush1.msra.mxu0 0.0
        %2116 = vmatprep.subr.mxu0 0.0
        %2117 = vmatpush1.msra.mxu0 0.0
        %2118 = vmatprep.subr.mxu0 0.0
        %2119 = vmatpush1.msra.mxu0 0.0
        %2120 = vmatprep.subr.mxu0 0.0
        %2121 = vmatpush1.msra.mxu0 0.0
        %2122 = vmatprep.subr.mxu0 0.0
        %2123 = vmatpush1.msra.mxu0 0.0
        %2124 = vmatprep.subr.mxu0 0.0
        %2125 = vmatpush1.msra.mxu0 0.0
        %2126 = vmatprep.subr.mxu0 0.0
        %2127 = vmatpush1.msra.mxu0 0.0
        %2128 = vmatprep.subr.mxu0 0.0
        %2129 = vmatpush1.msra.mxu0 0.0
        %2130 = vmatprep.subr.mxu0 0.0
        %2131 = vmatpush1.msra.mxu0 %v426
        %2132 = vmatprep.subr.mxu0 0.0
        %2133 = vmatpush1.msra.mxu0 %v425
        %2134 = vmatprep.subr.mxu0 0.0
        %2135 = vmatpush1.msra.mxu0 %v424
        %2136 = vmatprep.subr.mxu0 0.0
        %2137 = vmatpush1.msra.mxu0 %v423
        %2138 = vmatprep.subr.mxu0 0.0
        %2139 = vmatpush2.msra.mxu0 0.0
        %2140 = vmatprep.subr.mxu0 0.0
        %2141 = vmatpush2.msra.mxu0 0.0
        %2142 = vmatprep.subr.mxu0 0.0
        %2143 = vmatpush2.msra.mxu0 0.0
        %2144 = vmatprep.subr.mxu0 0.0
        %2145 = vmatpush2.msra.mxu0 0.0
        %2146 = vmatprep.subr.mxu0 0.0
        %2147 = vmatpush2.msra.mxu0 0.0
        %2148 = vmatprep.subr.mxu0 0.0
        %2149 = vmatpush2.msra.mxu0 0.0
        %2150 = vmatprep.subr.mxu0 0.0
        %2151 = vmatpush2.msra.mxu0 0.0
        %2152 = vmatprep.subr.mxu0 0.0
        %2153 = vmatpush2.msra.mxu0 0.0
        %2154 = vmatprep.subr.mxu0 0.0
        %2155 = vmatpush2.msra.mxu0 0.0
        %2156 = vmatprep.subr.mxu0 0.0
        %2157 = vmatpush2.msra.mxu0 0.0
        %2158 = vmatprep.subr.mxu0 0.0
        %2159 = vmatpush2.msra.mxu0 0.0
        %2160 = vmatprep.subr.mxu0 0.0
        %2161 = vmatpush2.msra.mxu0 0.0
        %2162 = vmatprep.subr.mxu0 0.0
        %2163 = vmatpush2.msra.mxu0 0.0
        %2164 = vmatprep.subr.mxu0 0.0
        %2165 = vmatpush2.msra.mxu0 0.0
        %2166 = vmatprep.subr.mxu0 0.0
        %2167 = vmatpush2.msra.mxu0 0.0
        %2168 = vmatprep.subr.mxu0 0.0
        %2169 = vmatpush2.msra.mxu0 0.0
        %2170 = vmatprep.mubr.f32.mxu0 0.0
        %2171 = vmatmul.mubr.f32.gmra.mxu0 %v2104
        %v2172 = vpop.f32.mrf.mxu0
        %v2173 = vadd.f32 0.0, %v2172
        %v2174 = vpop.f32.mrf.mxu0
        %2175 = vdwg.mxu0
        %v2177 = vrot.slane %v2101, 3
        %v2178 = vsel %vm458, %v2177, 0
        %2180 = vmatprep.subr.mxu0 0.0
        %2181 = vmatpush1.msra.mxu0 0.0
        %2182 = vmatprep.subr.mxu0 0.0
        %2183 = vmatpush1.msra.mxu0 0.0
        %2184 = vmatprep.subr.mxu0 0.0
        %2185 = vmatpush1.msra.mxu0 0.0
        %2186 = vmatprep.subr.mxu0 0.0
        %2187 = vmatpush1.msra.mxu0 0.0
        %2188 = vmatprep.subr.mxu0 0.0
        %2189 = vmatpush1.msra.mxu0 0.0
        %2190 = vmatprep.subr.mxu0 0.0
        %2191 = vmatpush1.msra.mxu0 0.0
        %2192 = vmatprep.subr.mxu0 0.0
        %2193 = vmatpush1.msra.mxu0 0.0
        %2194 = vmatprep.subr.mxu0 0.0
        %2195 = vmatpush1.msra.mxu0 0.0
        %2196 = vmatprep.subr.mxu0 0.0
        %2197 = vmatpush1.msra.mxu0 0.0
        %2198 = vmatprep.subr.mxu0 0.0
        %2199 = vmatpush1.msra.mxu0 0.0
        %2200 = vmatprep.subr.mxu0 0.0
        %2201 = vmatpush1.msra.mxu0 0.0
        %2202 = vmatprep.subr.mxu0 0.0
        %2203 = vmatpush1.msra.mxu0 0.0
        %2204 = vmatprep.subr.mxu0 0.0
        %2205 = vmatpush1.msra.mxu0 %v430
        %2206 = vmatprep.subr.mxu0 0.0
        %2207 = vmatpush1.msra.mxu0 %v429
        %2208 = vmatprep.subr.mxu0 0.0
        %2209 = vmatpush1.msra.mxu0 %v428
        %2210 = vmatprep.subr.mxu0 0.0
        %2211 = vmatpush1.msra.mxu0 %v427
        %2212 = vmatprep.subr.mxu0 0.0
        %2213 = vmatpush2.msra.mxu0 0.0
        %2214 = vmatprep.subr.mxu0 0.0
        %2215 = vmatpush2.msra.mxu0 0.0
        %2216 = vmatprep.subr.mxu0 0.0
        %2217 = vmatpush2.msra.mxu0 0.0
        %2218 = vmatprep.subr.mxu0 0.0
        %2219 = vmatpush2.msra.mxu0 0.0
        %2220 = vmatprep.subr.mxu0 0.0
        %2221 = vmatpush2.msra.mxu0 0.0
        %2222 = vmatprep.subr.mxu0 0.0
        %2223 = vmatpush2.msra.mxu0 0.0
        %2224 = vmatprep.subr.mxu0 0.0
        %2225 = vmatpush2.msra.mxu0 0.0
        %2226 = vmatprep.subr.mxu0 0.0
        %2227 = vmatpush2.msra.mxu0 0.0
        %2228 = vmatprep.subr.mxu0 0.0
        %2229 = vmatpush2.msra.mxu0 0.0
        %2230 = vmatprep.subr.mxu0 0.0
        %2231 = vmatpush2.msra.mxu0 0.0
        %2232 = vmatprep.subr.mxu0 0.0
        %2233 = vmatpush2.msra.mxu0 0.0
        %2234 = vmatprep.subr.mxu0 0.0
        %2235 = vmatpush2.msra.mxu0 0.0
        %2236 = vmatprep.subr.mxu0 0.0
        %2237 = vmatpush2.msra.mxu0 0.0
        %2238 = vmatprep.subr.mxu0 0.0
        %2239 = vmatpush2.msra.mxu0 0.0
        %2240 = vmatprep.subr.mxu0 0.0
        %2241 = vmatpush2.msra.mxu0 0.0
        %2242 = vmatprep.subr.mxu0 0.0
        %2243 = vmatpush2.msra.mxu0 0.0
        %2244 = vmatprep.mubr.f32.mxu0 0.0
        %2245 = vmatmul.mubr.f32.gmra.mxu0 %v2178
        %v2246 = vpop.f32.mrf.mxu0
        %v2247 = vadd.f32 0.0, %v2246
        %v2248 = vpop.f32.mrf.mxu0
        %2249 = vdwg.mxu0
        %2252 = vrot.lane.b32.xlu0 %v2173, 96
        %v2253 = vpop.permute.xlu0 %2252
        %2254 = vrot.lane.b32.xlu0 %v2247, 96
        %v2255 = vpop.permute.xlu0 %2254
        %2258 = vrot.lane.b32.xlu0 %v2173, 64
        %v2259 = vpop.permute.xlu0 %2258
        %2260 = vrot.lane.b32.xlu0 %v2247, 64
        %v2261 = vpop.permute.xlu0 %2260
        %2264 = vrot.lane.b32.xlu0 %v2173, 32
        %v2265 = vpop.permute.xlu0 %2264
        %2266 = vrot.lane.b32.xlu0 %v2247, 32
        %v2267 = vpop.permute.xlu0 %2266
        %v2270 = vcombine.low %v2173, %v2259
        %v2272 = vunpack.c.l.s4 1983009808
        %v2273 = vunpack.c.0.s8 %v2272
        %v2274 = vlaneseq
        %v2275 = vshrl.u32 %v2274, 7
        %v2276 = vsub.s32 %v2273, %v2275
        %v2277 = vrot.slane %v2270, %v2276
        %v2278 = vcombine.low %v2253, %v2265
        %v2280 = vunpack.c.l.s4 1983009808
        %v2281 = vunpack.c.0.s8 %v2280
        %v2282 = vlaneseq
        %v2283 = vshrl.u32 %v2282, 7
        %v2284 = vsub.s32 %v2281, %v2283
        %v2285 = vrot.slane %v2278, %v2284
        %v2286 = vcombine.low %v2277, %v2285
        %v2288 = vunpack.c.l.s4 1934713408
        %v2289 = vunpack.c.0.s8 %v2288
        %v2290 = vlaneseq
        %v2291 = vshrl.u32 %v2290, 7
        %v2292 = vsub.s32 %v2289, %v2291
        %v2293 = vrot.slane %v2286, %v2292
        %v2294 = vcombine.low %v2247, %v2261
        %v2296 = vunpack.c.l.s4 1983009808
        %v2297 = vunpack.c.0.s8 %v2296
        %v2298 = vlaneseq
        %v2299 = vshrl.u32 %v2298, 7
        %v2300 = vsub.s32 %v2297, %v2299
        %v2301 = vrot.slane %v2294, %v2300
        %v2302 = vcombine.low %v2255, %v2267
        %v2304 = vunpack.c.l.s4 1983009808
        %v2305 = vunpack.c.0.s8 %v2304
        %v2306 = vlaneseq
        %v2307 = vshrl.u32 %v2306, 7
        %v2308 = vsub.s32 %v2305, %v2307
        %v2309 = vrot.slane %v2302, %v2308
        %v2310 = vcombine.low %v2301, %v2309
        %v2312 = vunpack.c.l.s4 1934713408
        %v2313 = vunpack.c.0.s8 %v2312
        %v2314 = vlaneseq
        %v2315 = vshrl.u32 %v2314, 7
        %v2316 = vsub.s32 %v2313, %v2315
        %v2317 = vrot.slane %v2310, %v2316
        %v2318 = vadd.f32 %v2293, %v431
        %v2319 = vadd.f32 %v2317, %v432
        %v2320 = vsel %vm675, %v2318, 0.0
        %2321 = vadd.xlane.f32.xlu0 %v2320
        %v2322 = vpop.xlane.xlu0 %2321
        %v2323 = vsel %vm675, %v2319, 0.0
        %2324 = vadd.xlane.f32.xlu0 %v2323
        %v2325 = vpop.xlane.xlu0 %2324
        %v2326 = vmul.f32 %v2322, %v682
        %v2327 = vmul.f32 %v2325, %v682
        %v2328 = vsub.f32 %v2318, %v2326
        %v2329 = vsub.f32 %v2319, %v2327
        %v2330 = vmul.f32 %v2328, %v2328
        %v2331 = vmul.f32 %v2329, %v2329
        %v2332 = vsel %vm675, %v2330, 0.0
        %2333 = vadd.xlane.f32.xlu0 %v2332
        %v2334 = vpop.xlane.xlu0 %2333
        %v2335 = vsel %vm675, %v2331, 0.0
        %2336 = vadd.xlane.f32.xlu0 %v2335
        %v2337 = vpop.xlane.xlu0 %2336
        %v2338 = vmul.f32 %v2334, %v682
        %v2339 = vmul.f32 %v2337, %v682
        %v2340 = vadd.f32 %v2338, 1e-05
        %v2341 = vadd.f32 %v2339, 1e-05
        %v2342 = vrsqrt.pop %v2340
        %v2343 = vrsqrt.pop %v2341
        %v2344 = vmul.f32 %v2328, %v2342
        %v2345 = vmul.f32 %v2329, %v2343
        %v2346 = vxor.u32 %v2344, 2147483648
        %v2347 = vxor.u32 %v2345, 2147483648
        %v2348 = vmul.f32 %v2346, 1.442695
        %v2349 = vpow.pop %v2348
        %v2350 = vmul.f32 %v2347, 1.442695
        %v2351 = vpow.pop %v2350
        %v2352 = vadd.f32 %v2349, 1.0
        %v2353 = vadd.f32 %v2351, 1.0
        %v2354 = vrcp.pop %v2352
        %v2355 = vmul.f32 1.0, %v2354
        %v2356 = vrcp.pop %v2353
        %v2357 = vmul.f32 1.0, %v2356
        %v2358 = vtanh.pop %v2344
        %v2359 = vtanh.pop %v2345
        %v2360 = vmul.f32 %v2355, %v2056
        %v2361 = vmul.f32 %v2357, %v2057
        %v2364 = vrot.slane %v2358, 2
        %v2365 = vrot.slane %v2359, 2
        %v2368 = vmul.f32 %v2355, %v2364
        %v2369 = vmul.f32 %v2357, %v2365
        %v2372 = vrot.slane %v2368, 7
        %v2373 = vrot.slane %v2369, 7
        %v2376 = vadd.f32 %v2360, %v2372
        %v2377 = vadd.f32 %v2361, %v2373
        %v2380 = vrot.slane %v2377, 7
        %v2381 = vsel %vm742, %v2380, %v2376
        %v2383 = vsel %vm745, %v2381, 0.0
        %2384 = vadd.xlane.f32.xlu0 %v2383
        %v2385 = vpop.xlane.xlu0 %2384
        %v2386 = vmul.f32 %v2385, %v682
        %v2388 = vrot.slane %v2386, 1
        %v2391 = vsub.f32 %v2376, %v2386
        %v2392 = vsub.f32 %v2377, %v2388
        %v2393 = vmul.f32 %v2391, %v2391
        %v2394 = vmul.f32 %v2392, %v2392
        %v2397 = vrot.slane %v2394, 7
        %v2398 = vsel %vm742, %v2397, %v2393
        %v2400 = vsel %vm745, %v2398, 0.0
        %2401 = vadd.xlane.f32.xlu0 %v2400
        %v2402 = vpop.xlane.xlu0 %2401
        %v2403 = vmul.f32 %v2402, %v682
        %v2404 = vadd.f32 %v2403, 1e-05
        %v2405 = vrsqrt.pop %v2404
        %v2407 = vrot.slane %v2405, 1
        %v2410 = vmul.f32 %v2391, %v2405
        %v2411 = vmul.f32 %v2392, %v2407
        %v2412 = vtanh.pop %v2410
        %v2413 = vtanh.pop %v2411
        %v2416 = vrot.slane %v2412, 6
        %v2417 = vrot.slane %v2413, 6
        %v2420 = vmul.f32 %v2355, %v2416
        %v2421 = vmul.f32 %v2357, %v2417
        %s2422 = sadd.s32 %s1105, 4294967288
        %p2423 = scmp.ge.s32.totalorder %s2422, 0
        // Predicated region
        $region77: #{tpu_custom_call.1} parent=43 // pred_check
          %p2424 = pneg %p2423
        $region78: #{tpu_custom_call.1} parent=43 // pred_check_branch
          %2426 = sbr.rel (%p2424) target = $region80
        $region79: #{tpu_custom_call.1} parent=43 // pred_region
          %v2429 = vrot.slane %v2421, 7
          %vm2430 = vcmask 1044484
          %v2431 = vsel %vm2430, %v2429, %v2420
          %s2433 = smul.u32 %s2422, 2
          %s2434 = scalar_lea.vmem [#allocation4], %s2433
          %vm2435 = vcmask 258051
          %2436 = vst.msk [vmem:[%s2434 - $0x3] sm:$0x18] %vm2435, %v2431
        $region80: #{tpu_custom_call.1} parent=43 // pred_fallthru
          _
        %v2438 = vrot.slane %v2420, 3
        %v2439 = vsel %vm458, %v2438, 0
        %2441 = vmatprep.subr.mxu0 0.0
        %2442 = vmatpush1.msra.mxu0 0.0
        %2443 = vmatprep.subr.mxu0 0.0
        %2444 = vmatpush1.msra.mxu0 0.0
        %2445 = vmatprep.subr.mxu0 0.0
        %2446 = vmatpush1.msra.mxu0 0.0
        %2447 = vmatprep.subr.mxu0 0.0
        %2448 = vmatpush1.msra.mxu0 0.0
        %2449 = vmatprep.subr.mxu0 0.0
        %2450 = vmatpush1.msra.mxu0 0.0
        %2451 = vmatprep.subr.mxu0 0.0
        %2452 = vmatpush1.msra.mxu0 0.0
        %2453 = vmatprep.subr.mxu0 0.0
        %2454 = vmatpush1.msra.mxu0 0.0
        %2455 = vmatprep.subr.mxu0 0.0
        %2456 = vmatpush1.msra.mxu0 0.0
        %2457 = vmatprep.subr.mxu0 0.0
        %2458 = vmatpush1.msra.mxu0 0.0
        %2459 = vmatprep.subr.mxu0 0.0
        %2460 = vmatpush1.msra.mxu0 0.0
        %2461 = vmatprep.subr.mxu0 0.0
        %2462 = vmatpush1.msra.mxu0 0.0
        %2463 = vmatprep.subr.mxu0 0.0
        %2464 = vmatpush1.msra.mxu0 0.0
        %2465 = vmatprep.subr.mxu0 0.0
        %2466 = vmatpush1.msra.mxu0 %v418
        %2467 = vmatprep.subr.mxu0 0.0
        %2468 = vmatpush1.msra.mxu0 %v417
        %2469 = vmatprep.subr.mxu0 0.0
        %2470 = vmatpush1.msra.mxu0 %v416
        %2471 = vmatprep.subr.mxu0 0.0
        %2472 = vmatpush1.msra.mxu0 %v415
        %2473 = vmatprep.subr.mxu0 0.0
        %2474 = vmatpush2.msra.mxu0 0.0
        %2475 = vmatprep.subr.mxu0 0.0
        %2476 = vmatpush2.msra.mxu0 0.0
        %2477 = vmatprep.subr.mxu0 0.0
        %2478 = vmatpush2.msra.mxu0 0.0
        %2479 = vmatprep.subr.mxu0 0.0
        %2480 = vmatpush2.msra.mxu0 0.0
        %2481 = vmatprep.subr.mxu0 0.0
        %2482 = vmatpush2.msra.mxu0 0.0
        %2483 = vmatprep.subr.mxu0 0.0
        %2484 = vmatpush2.msra.mxu0 0.0
        %2485 = vmatprep.subr.mxu0 0.0
        %2486 = vmatpush2.msra.mxu0 0.0
        %2487 = vmatprep.subr.mxu0 0.0
        %2488 = vmatpush2.msra.mxu0 0.0
        %2489 = vmatprep.subr.mxu0 0.0
        %2490 = vmatpush2.msra.mxu0 0.0
        %2491 = vmatprep.subr.mxu0 0.0
        %2492 = vmatpush2.msra.mxu0 0.0
        %2493 = vmatprep.subr.mxu0 0.0
        %2494 = vmatpush2.msra.mxu0 0.0
        %2495 = vmatprep.subr.mxu0 0.0
        %2496 = vmatpush2.msra.mxu0 0.0
        %2497 = vmatprep.subr.mxu0 0.0
        %2498 = vmatpush2.msra.mxu0 0.0
        %2499 = vmatprep.subr.mxu0 0.0
        %2500 = vmatpush2.msra.mxu0 0.0
        %2501 = vmatprep.subr.mxu0 0.0
        %2502 = vmatpush2.msra.mxu0 0.0
        %2503 = vmatprep.subr.mxu0 0.0
        %2504 = vmatpush2.msra.mxu0 0.0
        %2505 = vmatprep.mubr.f32.mxu0 0.0
        %2506 = vmatmul.mubr.f32.gmra.mxu0 %v2439
        %v2507 = vpop.f32.mrf.mxu0
        %v2508 = vadd.f32 0.0, %v2507
        %v2509 = vpop.f32.mrf.mxu0
        %2510 = vdwg.mxu0
        %v2512 = vrot.slane %v2421, 3
        %v2513 = vsel %vm458, %v2512, 0
        %2515 = vmatprep.subr.mxu0 0.0
        %2516 = vmatpush1.msra.mxu0 0.0
        %2517 = vmatprep.subr.mxu0 0.0
        %2518 = vmatpush1.msra.mxu0 0.0
        %2519 = vmatprep.subr.mxu0 0.0
        %2520 = vmatpush1.msra.mxu0 0.0
        %2521 = vmatprep.subr.mxu0 0.0
        %2522 = vmatpush1.msra.mxu0 0.0
        %2523 = vmatprep.subr.mxu0 0.0
        %2524 = vmatpush1.msra.mxu0 0.0
        %2525 = vmatprep.subr.mxu0 0.0
        %2526 = vmatpush1.msra.mxu0 0.0
        %2527 = vmatprep.subr.mxu0 0.0
        %2528 = vmatpush1.msra.mxu0 0.0
        %2529 = vmatprep.subr.mxu0 0.0
        %2530 = vmatpush1.msra.mxu0 0.0
        %2531 = vmatprep.subr.mxu0 0.0
        %2532 = vmatpush1.msra.mxu0 0.0
        %2533 = vmatprep.subr.mxu0 0.0
        %2534 = vmatpush1.msra.mxu0 0.0
        %2535 = vmatprep.subr.mxu0 0.0
        %2536 = vmatpush1.msra.mxu0 0.0
        %2537 = vmatprep.subr.mxu0 0.0
        %2538 = vmatpush1.msra.mxu0 0.0
        %2539 = vmatprep.subr.mxu0 0.0
        %2540 = vmatpush1.msra.mxu0 %v422
        %2541 = vmatprep.subr.mxu0 0.0
        %2542 = vmatpush1.msra.mxu0 %v421
        %2543 = vmatprep.subr.mxu0 0.0
        %2544 = vmatpush1.msra.mxu0 %v420
        %2545 = vmatprep.subr.mxu0 0.0
        %2546 = vmatpush1.msra.mxu0 %v419
        %2547 = vmatprep.subr.mxu0 0.0
        %2548 = vmatpush2.msra.mxu0 0.0
        %2549 = vmatprep.subr.mxu0 0.0
        %2550 = vmatpush2.msra.mxu0 0.0
        %2551 = vmatprep.subr.mxu0 0.0
        %2552 = vmatpush2.msra.mxu0 0.0
        %2553 = vmatprep.subr.mxu0 0.0
        %2554 = vmatpush2.msra.mxu0 0.0
        %2555 = vmatprep.subr.mxu0 0.0
        %2556 = vmatpush2.msra.mxu0 0.0
        %2557 = vmatprep.subr.mxu0 0.0
        %2558 = vmatpush2.msra.mxu0 0.0
        %2559 = vmatprep.subr.mxu0 0.0
        %2560 = vmatpush2.msra.mxu0 0.0
        %2561 = vmatprep.subr.mxu0 0.0
        %2562 = vmatpush2.msra.mxu0 0.0
        %2563 = vmatprep.subr.mxu0 0.0
        %2564 = vmatpush2.msra.mxu0 0.0
        %2565 = vmatprep.subr.mxu0 0.0
        %2566 = vmatpush2.msra.mxu0 0.0
        %2567 = vmatprep.subr.mxu0 0.0
        %2568 = vmatpush2.msra.mxu0 0.0
        %2569 = vmatprep.subr.mxu0 0.0
        %2570 = vmatpush2.msra.mxu0 0.0
        %2571 = vmatprep.subr.mxu0 0.0
        %2572 = vmatpush2.msra.mxu0 0.0
        %2573 = vmatprep.subr.mxu0 0.0
        %2574 = vmatpush2.msra.mxu0 0.0
        %2575 = vmatprep.subr.mxu0 0.0
        %2576 = vmatpush2.msra.mxu0 0.0
        %2577 = vmatprep.subr.mxu0 0.0
        %2578 = vmatpush2.msra.mxu0 0.0
        %2579 = vmatprep.mubr.f32.mxu0 0.0
        %2580 = vmatmul.mubr.f32.gmra.mxu0 %v2513
        %v2581 = vpop.f32.mrf.mxu0
        %v2582 = vadd.f32 0.0, %v2581
        %v2583 = vpop.f32.mrf.mxu0
        %2584 = vdwg.mxu0
        %2587 = vrot.lane.b32.xlu0 %v2508, 96
        %v2588 = vpop.permute.xlu0 %2587
        %2589 = vrot.lane.b32.xlu0 %v2582, 96
        %v2590 = vpop.permute.xlu0 %2589
        %2593 = vrot.lane.b32.xlu0 %v2508, 64
        %v2594 = vpop.permute.xlu0 %2593
        %2595 = vrot.lane.b32.xlu0 %v2582, 64
        %v2596 = vpop.permute.xlu0 %2595
        %2599 = vrot.lane.b32.xlu0 %v2508, 32
        %v2600 = vpop.permute.xlu0 %2599
        %2601 = vrot.lane.b32.xlu0 %v2582, 32
        %v2602 = vpop.permute.xlu0 %2601
        %v2605 = vcombine.low %v2508, %v2594
        %v2607 = vunpack.c.l.s4 1983009808
        %v2608 = vunpack.c.0.s8 %v2607
        %v2609 = vlaneseq
        %v2610 = vshrl.u32 %v2609, 7
        %v2611 = vsub.s32 %v2608, %v2610
        %v2612 = vrot.slane %v2605, %v2611
        %v2613 = vcombine.low %v2588, %v2600
        %v2615 = vunpack.c.l.s4 1983009808
        %v2616 = vunpack.c.0.s8 %v2615
        %v2617 = vlaneseq
        %v2618 = vshrl.u32 %v2617, 7
        %v2619 = vsub.s32 %v2616, %v2618
        %v2620 = vrot.slane %v2613, %v2619
        %v2621 = vcombine.low %v2612, %v2620
        %v2623 = vunpack.c.l.s4 1934713408
        %v2624 = vunpack.c.0.s8 %v2623
        %v2625 = vlaneseq
        %v2626 = vshrl.u32 %v2625, 7
        %v2627 = vsub.s32 %v2624, %v2626
        %v2628 = vrot.slane %v2621, %v2627
        %v2629 = vcombine.low %v2582, %v2596
        %v2631 = vunpack.c.l.s4 1983009808
        %v2632 = vunpack.c.0.s8 %v2631
        %v2633 = vlaneseq
        %v2634 = vshrl.u32 %v2633, 7
        %v2635 = vsub.s32 %v2632, %v2634
        %v2636 = vrot.slane %v2629, %v2635
        %v2637 = vcombine.low %v2590, %v2602
        %v2639 = vunpack.c.l.s4 1983009808
        %v2640 = vunpack.c.0.s8 %v2639
        %v2641 = vlaneseq
        %v2642 = vshrl.u32 %v2641, 7
        %v2643 = vsub.s32 %v2640, %v2642
        %v2644 = vrot.slane %v2637, %v2643
        %v2645 = vcombine.low %v2636, %v2644
        %v2647 = vunpack.c.l.s4 1934713408
        %v2648 = vunpack.c.0.s8 %v2647
        %v2649 = vlaneseq
        %v2650 = vshrl.u32 %v2649, 7
        %v2651 = vsub.s32 %v2648, %v2650
        %v2652 = vrot.slane %v2645, %v2651
        %s2653 = scalar_lea.vmem %s342, 24 [#allocation5]
        %v2654 = vld [vmem:[%s2653] sm:$0xf]
        %v2655 = vld [vmem:[%s2653 + $0x4] sm:$0xf]
        %v2656 = vadd.f32 %v2628, %v2654
        %v2657 = vadd.f32 %v2652, %v2655
        %v2658 = vsel %vm675, %v2656, 0.0
        %2659 = vadd.xlane.f32.xlu0 %v2658
        %v2660 = vpop.xlane.xlu0 %2659
        %v2661 = vsel %vm675, %v2657, 0.0
        %2662 = vadd.xlane.f32.xlu0 %v2661
        %v2663 = vpop.xlane.xlu0 %2662
        %v2664 = vmul.f32 %v2660, %v682
        %v2665 = vmul.f32 %v2663, %v682
        %v2666 = vsub.f32 %v2656, %v2664
        %v2667 = vsub.f32 %v2657, %v2665
        %v2668 = vmul.f32 %v2666, %v2666
        %v2669 = vmul.f32 %v2667, %v2667
        %v2670 = vsel %vm675, %v2668, 0.0
        %2671 = vadd.xlane.f32.xlu0 %v2670
        %v2672 = vpop.xlane.xlu0 %2671
        %v2673 = vsel %vm675, %v2669, 0.0
        %2674 = vadd.xlane.f32.xlu0 %v2673
        %v2675 = vpop.xlane.xlu0 %2674
        %v2676 = vmul.f32 %v2672, %v682
        %v2677 = vmul.f32 %v2675, %v682
        %v2678 = vadd.f32 %v2676, 1e-05
        %v2679 = vadd.f32 %v2677, 1e-05
        %v2680 = vrsqrt.pop %v2678
        %v2681 = vrsqrt.pop %v2679
        %v2682 = vmul.f32 %v2666, %v2680
        %v2683 = vmul.f32 %v2667, %v2681
        %v2684 = vxor.u32 %v2682, 2147483648
        %v2685 = vxor.u32 %v2683, 2147483648
        %v2686 = vmul.f32 %v2684, 1.442695
        %v2687 = vpow.pop %v2686
        %v2688 = vmul.f32 %v2685, 1.442695
        %v2689 = vpow.pop %v2688
        %v2690 = vadd.f32 %v2687, 1.0
        %v2691 = vadd.f32 %v2689, 1.0
        %v2692 = vrcp.pop %v2690
        %v2693 = vmul.f32 1.0, %v2692
        %v2694 = vrcp.pop %v2691
        %v2695 = vmul.f32 1.0, %v2694
        %v2696 = vtanh.pop %v2682
        %v2697 = vtanh.pop %v2683
        %v2698 = vmul.f32 %v2693, %v2376
        %v2699 = vmul.f32 %v2695, %v2377
        %v2702 = vrot.slane %v2696, 2
        %v2703 = vrot.slane %v2697, 2
        %v2706 = vmul.f32 %v2693, %v2702
        %v2707 = vmul.f32 %v2695, %v2703
        %v2710 = vrot.slane %v2706, 7
        %v2711 = vrot.slane %v2707, 7
        %v2714 = vadd.f32 %v2698, %v2710
        %v2715 = vadd.f32 %v2699, %v2711
        %v2718 = vrot.slane %v2715, 7
        %v2719 = vsel %vm742, %v2718, %v2714
        %v2721 = vsel %vm745, %v2719, 0.0
        %2722 = vadd.xlane.f32.xlu0 %v2721
        %v2723 = vpop.xlane.xlu0 %2722
        %v2724 = vmul.f32 %v2723, %v682
        %v2726 = vrot.slane %v2724, 1
        %v2729 = vsub.f32 %v2714, %v2724
        %v2730 = vsub.f32 %v2715, %v2726
        %v2731 = vmul.f32 %v2729, %v2729
        %v2732 = vmul.f32 %v2730, %v2730
        %v2735 = vrot.slane %v2732, 7
        %v2736 = vsel %vm742, %v2735, %v2731
        %v2738 = vsel %vm745, %v2736, 0.0
        %2739 = vadd.xlane.f32.xlu0 %v2738
        %v2740 = vpop.xlane.xlu0 %2739
        %v2741 = vmul.f32 %v2740, %v682
        %v2742 = vadd.f32 %v2741, 1e-05
        %v2743 = vrsqrt.pop %v2742
        %v2745 = vrot.slane %v2743, 1
        %v2748 = vmul.f32 %v2729, %v2743
        %v2749 = vmul.f32 %v2730, %v2745
        %v2750 = vtanh.pop %v2748
        %v2751 = vtanh.pop %v2749
        %v2754 = vrot.slane %v2750, 6
        %v2755 = vrot.slane %v2751, 6
        %v2758 = vmul.f32 %v2693, %v2754
        %v2759 = vmul.f32 %v2695, %v2755
        %v2761 = vrot.slane %v2758, 3
        %v2762 = vsel %vm458, %v2761, 0
        %2764 = vmatprep.subr.mxu0 0.0
        %2765 = vmatpush1.msra.mxu0 0.0
        %2766 = vmatprep.subr.mxu0 0.0
        %2767 = vmatpush1.msra.mxu0 0.0
        %2768 = vmatprep.subr.mxu0 0.0
        %2769 = vmatpush1.msra.mxu0 0.0
        %2770 = vmatprep.subr.mxu0 0.0
        %2771 = vmatpush1.msra.mxu0 0.0
        %2772 = vmatprep.subr.mxu0 0.0
        %2773 = vmatpush1.msra.mxu0 0.0
        %2774 = vmatprep.subr.mxu0 0.0
        %2775 = vmatpush1.msra.mxu0 0.0
        %2776 = vmatprep.subr.mxu0 0.0
        %2777 = vmatpush1.msra.mxu0 0.0
        %2778 = vmatprep.subr.mxu0 0.0
        %2779 = vmatpush1.msra.mxu0 0.0
        %2780 = vmatprep.subr.mxu0 0.0
        %2781 = vmatpush1.msra.mxu0 0.0
        %2782 = vmatprep.subr.mxu0 0.0
        %2783 = vmatpush1.msra.mxu0 0.0
        %2784 = vmatprep.subr.mxu0 0.0
        %2785 = vmatpush1.msra.mxu0 0.0
        %2786 = vmatprep.subr.mxu0 0.0
        %2787 = vmatpush1.msra.mxu0 0.0
        %2788 = vmatprep.subr.mxu0 0.0
        %2789 = vmatpush1.msra.mxu0 %v426
        %2790 = vmatprep.subr.mxu0 0.0
        %2791 = vmatpush1.msra.mxu0 %v425
        %2792 = vmatprep.subr.mxu0 0.0
        %2793 = vmatpush1.msra.mxu0 %v424
        %2794 = vmatprep.subr.mxu0 0.0
        %2795 = vmatpush1.msra.mxu0 %v423
        %2796 = vmatprep.subr.mxu0 0.0
        %2797 = vmatpush2.msra.mxu0 0.0
        %2798 = vmatprep.subr.mxu0 0.0
        %2799 = vmatpush2.msra.mxu0 0.0
        %2800 = vmatprep.subr.mxu0 0.0
        %2801 = vmatpush2.msra.mxu0 0.0
        %2802 = vmatprep.subr.mxu0 0.0
        %2803 = vmatpush2.msra.mxu0 0.0
        %2804 = vmatprep.subr.mxu0 0.0
        %2805 = vmatpush2.msra.mxu0 0.0
        %2806 = vmatprep.subr.mxu0 0.0
        %2807 = vmatpush2.msra.mxu0 0.0
        %2808 = vmatprep.subr.mxu0 0.0
        %2809 = vmatpush2.msra.mxu0 0.0
        %2810 = vmatprep.subr.mxu0 0.0
        %2811 = vmatpush2.msra.mxu0 0.0
        %2812 = vmatprep.subr.mxu0 0.0
        %2813 = vmatpush2.msra.mxu0 0.0
        %2814 = vmatprep.subr.mxu0 0.0
        %2815 = vmatpush2.msra.mxu0 0.0
        %2816 = vmatprep.subr.mxu0 0.0
        %2817 = vmatpush2.msra.mxu0 0.0
        %2818 = vmatprep.subr.mxu0 0.0
        %2819 = vmatpush2.msra.mxu0 0.0
        %2820 = vmatprep.subr.mxu0 0.0
        %2821 = vmatpush2.msra.mxu0 0.0
        %2822 = vmatprep.subr.mxu0 0.0
        %2823 = vmatpush2.msra.mxu0 0.0
        %2824 = vmatprep.subr.mxu0 0.0
        %2825 = vmatpush2.msra.mxu0 0.0
        %2826 = vmatprep.subr.mxu0 0.0
        %2827 = vmatpush2.msra.mxu0 0.0
        %2828 = vmatprep.mubr.f32.mxu0 0.0
        %2829 = vmatmul.mubr.f32.gmra.mxu0 %v2762
        %v2830 = vpop.f32.mrf.mxu0
        %v2831 = vadd.f32 0.0, %v2830
        %v2832 = vpop.f32.mrf.mxu0
        %2833 = vdwg.mxu0
        %v2835 = vrot.slane %v2759, 3
        %v2836 = vsel %vm458, %v2835, 0
        %2838 = vmatprep.subr.mxu0 0.0
        %2839 = vmatpush1.msra.mxu0 0.0
        %2840 = vmatprep.subr.mxu0 0.0
        %2841 = vmatpush1.msra.mxu0 0.0
        %2842 = vmatprep.subr.mxu0 0.0
        %2843 = vmatpush1.msra.mxu0 0.0
        %2844 = vmatprep.subr.mxu0 0.0
        %2845 = vmatpush1.msra.mxu0 0.0
        %2846 = vmatprep.subr.mxu0 0.0
        %2847 = vmatpush1.msra.mxu0 0.0
        %2848 = vmatprep.subr.mxu0 0.0
        %2849 = vmatpush1.msra.mxu0 0.0
        %2850 = vmatprep.subr.mxu0 0.0
        %2851 = vmatpush1.msra.mxu0 0.0
        %2852 = vmatprep.subr.mxu0 0.0
        %2853 = vmatpush1.msra.mxu0 0.0
        %2854 = vmatprep.subr.mxu0 0.0
        %2855 = vmatpush1.msra.mxu0 0.0
        %2856 = vmatprep.subr.mxu0 0.0
        %2857 = vmatpush1.msra.mxu0 0.0
        %2858 = vmatprep.subr.mxu0 0.0
        %2859 = vmatpush1.msra.mxu0 0.0
        %2860 = vmatprep.subr.mxu0 0.0
        %2861 = vmatpush1.msra.mxu0 0.0
        %2862 = vmatprep.subr.mxu0 0.0
        %2863 = vmatpush1.msra.mxu0 %v430
        %2864 = vmatprep.subr.mxu0 0.0
        %2865 = vmatpush1.msra.mxu0 %v429
        %2866 = vmatprep.subr.mxu0 0.0
        %2867 = vmatpush1.msra.mxu0 %v428
        %2868 = vmatprep.subr.mxu0 0.0
        %2869 = vmatpush1.msra.mxu0 %v427
        %2870 = vmatprep.subr.mxu0 0.0
        %2871 = vmatpush2.msra.mxu0 0.0
        %2872 = vmatprep.subr.mxu0 0.0
        %2873 = vmatpush2.msra.mxu0 0.0
        %2874 = vmatprep.subr.mxu0 0.0
        %2875 = vmatpush2.msra.mxu0 0.0
        %2876 = vmatprep.subr.mxu0 0.0
        %2877 = vmatpush2.msra.mxu0 0.0
        %2878 = vmatprep.subr.mxu0 0.0
        %2879 = vmatpush2.msra.mxu0 0.0
        %2880 = vmatprep.subr.mxu0 0.0
        %2881 = vmatpush2.msra.mxu0 0.0
        %2882 = vmatprep.subr.mxu0 0.0
        %2883 = vmatpush2.msra.mxu0 0.0
        %2884 = vmatprep.subr.mxu0 0.0
        %2885 = vmatpush2.msra.mxu0 0.0
        %2886 = vmatprep.subr.mxu0 0.0
        %2887 = vmatpush2.msra.mxu0 0.0
        %2888 = vmatprep.subr.mxu0 0.0
        %2889 = vmatpush2.msra.mxu0 0.0
        %2890 = vmatprep.subr.mxu0 0.0
        %2891 = vmatpush2.msra.mxu0 0.0
        %2892 = vmatprep.subr.mxu0 0.0
        %2893 = vmatpush2.msra.mxu0 0.0
        %2894 = vmatprep.subr.mxu0 0.0
        %2895 = vmatpush2.msra.mxu0 0.0
        %2896 = vmatprep.subr.mxu0 0.0
        %2897 = vmatpush2.msra.mxu0 0.0
        %2898 = vmatprep.subr.mxu0 0.0
        %2899 = vmatpush2.msra.mxu0 0.0
        %2900 = vmatprep.subr.mxu0 0.0
        %2901 = vmatpush2.msra.mxu0 0.0
        %2902 = vmatprep.mubr.f32.mxu0 0.0
        %2903 = vmatmul.mubr.f32.gmra.mxu0 %v2836
        %v2904 = vpop.f32.mrf.mxu0
        %v2905 = vadd.f32 0.0, %v2904
        %v2906 = vpop.f32.mrf.mxu0
        %2907 = vdwg.mxu0
        %2910 = vrot.lane.b32.xlu0 %v2831, 96
        %v2911 = vpop.permute.xlu0 %2910
        %2912 = vrot.lane.b32.xlu0 %v2905, 96
        %v2913 = vpop.permute.xlu0 %2912
        %2916 = vrot.lane.b32.xlu0 %v2831, 64
        %v2917 = vpop.permute.xlu0 %2916
        %2918 = vrot.lane.b32.xlu0 %v2905, 64
        %v2919 = vpop.permute.xlu0 %2918
        %2922 = vrot.lane.b32.xlu0 %v2831, 32
        %v2923 = vpop.permute.xlu0 %2922
        %2924 = vrot.lane.b32.xlu0 %v2905, 32
        %v2925 = vpop.permute.xlu0 %2924
        %v2928 = vcombine.low %v2831, %v2917
        %v2930 = vunpack.c.l.s4 1983009808
        %v2931 = vunpack.c.0.s8 %v2930
        %v2932 = vlaneseq
        %v2933 = vshrl.u32 %v2932, 7
        %v2934 = vsub.s32 %v2931, %v2933
        %v2935 = vrot.slane %v2928, %v2934
        %v2936 = vcombine.low %v2911, %v2923
        %v2938 = vunpack.c.l.s4 1983009808
        %v2939 = vunpack.c.0.s8 %v2938
        %v2940 = vlaneseq
        %v2941 = vshrl.u32 %v2940, 7
        %v2942 = vsub.s32 %v2939, %v2941
        %v2943 = vrot.slane %v2936, %v2942
        %v2944 = vcombine.low %v2935, %v2943
        %v2946 = vunpack.c.l.s4 1934713408
        %v2947 = vunpack.c.0.s8 %v2946
        %v2948 = vlaneseq
        %v2949 = vshrl.u32 %v2948, 7
        %v2950 = vsub.s32 %v2947, %v2949
        %v2951 = vrot.slane %v2944, %v2950
        %v2952 = vcombine.low %v2905, %v2919
        %v2954 = vunpack.c.l.s4 1983009808
        %v2955 = vunpack.c.0.s8 %v2954
        %v2956 = vlaneseq
        %v2957 = vshrl.u32 %v2956, 7
        %v2958 = vsub.s32 %v2955, %v2957
        %v2959 = vrot.slane %v2952, %v2958
        %v2960 = vcombine.low %v2913, %v2925
        %v2962 = vunpack.c.l.s4 1983009808
        %v2963 = vunpack.c.0.s8 %v2962
        %v2964 = vlaneseq
        %v2965 = vshrl.u32 %v2964, 7
        %v2966 = vsub.s32 %v2963, %v2965
        %v2967 = vrot.slane %v2960, %v2966
        %v2968 = vcombine.low %v2959, %v2967
        %v2970 = vunpack.c.l.s4 1934713408
        %v2971 = vunpack.c.0.s8 %v2970
        %v2972 = vlaneseq
        %v2973 = vshrl.u32 %v2972, 7
        %v2974 = vsub.s32 %v2971, %v2973
        %v2975 = vrot.slane %v2968, %v2974
        %v2976 = vadd.f32 %v2951, %v431
        %v2977 = vadd.f32 %v2975, %v432
        %v2978 = vsel %vm675, %v2976, 0.0
        %2979 = vadd.xlane.f32.xlu0 %v2978
        %v2980 = vpop.xlane.xlu0 %2979
        %v2981 = vsel %vm675, %v2977, 0.0
        %2982 = vadd.xlane.f32.xlu0 %v2981
        %v2983 = vpop.xlane.xlu0 %2982
        %v2984 = vmul.f32 %v2980, %v682
        %v2985 = vmul.f32 %v2983, %v682
        %v2986 = vsub.f32 %v2976, %v2984
        %v2987 = vsub.f32 %v2977, %v2985
        %v2988 = vmul.f32 %v2986, %v2986
        %v2989 = vmul.f32 %v2987, %v2987
        %v2990 = vsel %vm675, %v2988, 0.0
        %2991 = vadd.xlane.f32.xlu0 %v2990
        %v2992 = vpop.xlane.xlu0 %2991
        %v2993 = vsel %vm675, %v2989, 0.0
        %2994 = vadd.xlane.f32.xlu0 %v2993
        %v2995 = vpop.xlane.xlu0 %2994
        %v2996 = vmul.f32 %v2992, %v682
        %v2997 = vmul.f32 %v2995, %v682
        %v2998 = vadd.f32 %v2996, 1e-05
        %v2999 = vadd.f32 %v2997, 1e-05
        %v3000 = vrsqrt.pop %v2998
        %v3001 = vrsqrt.pop %v2999
        %v3002 = vmul.f32 %v2986, %v3000
        %v3003 = vmul.f32 %v2987, %v3001
        %v3004 = vxor.u32 %v3002, 2147483648
        %v3005 = vxor.u32 %v3003, 2147483648
        %v3006 = vmul.f32 %v3004, 1.442695
        %v3007 = vpow.pop %v3006
        %v3008 = vmul.f32 %v3005, 1.442695
        %v3009 = vpow.pop %v3008
        %v3010 = vadd.f32 %v3007, 1.0
        %v3011 = vadd.f32 %v3009, 1.0
        %v3012 = vrcp.pop %v3010
        %v3013 = vmul.f32 1.0, %v3012
        %v3014 = vrcp.pop %v3011
        %v3015 = vmul.f32 1.0, %v3014
        %v3016 = vtanh.pop %v3002
        %v3017 = vtanh.pop %v3003
        %v3018 = vmul.f32 %v3013, %v2714
        %v3019 = vmul.f32 %v3015, %v2715
        %v3022 = vrot.slane %v3016, 2
        %v3023 = vrot.slane %v3017, 2
        %v3026 = vmul.f32 %v3013, %v3022
        %v3027 = vmul.f32 %v3015, %v3023
        %v3030 = vrot.slane %v3026, 7
        %v3031 = vrot.slane %v3027, 7
        %v3034 = vadd.f32 %v3018, %v3030
        %v3035 = vadd.f32 %v3019, %v3031
        %v3038 = vrot.slane %v3035, 7
        %v3039 = vsel %vm742, %v3038, %v3034
        %v3041 = vsel %vm745, %v3039, 0.0
        %3042 = vadd.xlane.f32.xlu0 %v3041
        %v3043 = vpop.xlane.xlu0 %3042
        %v3044 = vmul.f32 %v3043, %v682
        %v3046 = vrot.slane %v3044, 1
        %v3049 = vsub.f32 %v3034, %v3044
        %v3050 = vsub.f32 %v3035, %v3046
        %v3051 = vmul.f32 %v3049, %v3049
        %v3052 = vmul.f32 %v3050, %v3050
        %v3055 = vrot.slane %v3052, 7
        %v3056 = vsel %vm742, %v3055, %v3051
        %v3058 = vsel %vm745, %v3056, 0.0
        %3059 = vadd.xlane.f32.xlu0 %v3058
        %v3060 = vpop.xlane.xlu0 %3059
        %v3061 = vmul.f32 %v3060, %v682
        %v3062 = vadd.f32 %v3061, 1e-05
        %v3063 = vrsqrt.pop %v3062
        %v3065 = vrot.slane %v3063, 1
        %v3068 = vmul.f32 %v3049, %v3063
        %v3069 = vmul.f32 %v3050, %v3065
        %v3070 = vtanh.pop %v3068
        %v3071 = vtanh.pop %v3069
        %v3074 = vrot.slane %v3070, 6
        %v3075 = vrot.slane %v3071, 6
        %v3078 = vmul.f32 %v3013, %v3074
        %v3079 = vmul.f32 %v3015, %v3075
        %s3080 = sadd.s32 %s1105, 4294967289
        %p3081 = scmp.ge.s32.totalorder %s3080, 0
        // Predicated region
        $region81: #{tpu_custom_call.1} parent=43 // pred_check
          %p3082 = pneg %p3081
        $region82: #{tpu_custom_call.1} parent=43 // pred_check_branch
          %3084 = sbr.rel (%p3082) target = $region84
        $region83: #{tpu_custom_call.1} parent=43 // pred_region
          %v3087 = vrot.slane %v3079, 7
          %vm3088 = vcmask 1044484
          %v3089 = vsel %vm3088, %v3087, %v3078
          %s3091 = smul.u32 %s3080, 2
          %s3092 = scalar_lea.vmem [#allocation4], %s3091
          %vm3093 = vcmask 258051
          %3094 = vst.msk [vmem:[%s3092 - $0x3] sm:$0x18] %vm3093, %v3089
        $region84: #{tpu_custom_call.1} parent=43 // pred_fallthru
          _
        %v3097 = vrot.slane %v3079, 7
        %vm3098 = vcmask 1044484
        %v3099 = vsel %vm3098, %v3097, %v3078
        %vm3101 = vcmask 258051
        %3102 = vst.msk [vmem:[#allocation2 - $0x3] sm:$0x18] %vm3101, %v3099
        %3103 = vst.msk [vmem:[#allocation3 - $0x1] sm:$0x6] %vm745, %v3039
        %p3104 = scmp.eq.s32.totalorder %s27, 3
        // Predicated region
        $region85: #{tpu_custom_call.1} parent=43 // pred_check
          %p3105 = pneg %p3104
        $region86: #{tpu_custom_call.1} parent=43 // pred_check_branch
          %3107 = sbr.rel (%p3105) target = $region88
        $region87: #{tpu_custom_call.1} parent=43 // pred_region
          %v3108 = vld [vmem:[#allocation4] sm:$0x3]
          %v3109 = vld [vmem:[#allocation4 + $0x2] sm:$0x3]
          %v3110 = vld [vmem:[#allocation4 + $0x4] sm:$0x3]
          %v3111 = vld [vmem:[#allocation4 + $0x6] sm:$0x3]
          %v3112 = vld [vmem:[#allocation12] sm:$0xff]
          %v3113 = vld [vmem:[#allocation12 + $0x8] sm:$0xff]
          %v3114 = vld [vmem:[#allocation12 + $0x10] sm:$0xff]
          %v3115 = vld [vmem:[#allocation12 + $0x18] sm:$0xff]
          %v3116 = vld [vmem:[#allocation12 + $0x20] sm:$0xff]
          %v3117 = vld [vmem:[#allocation12 + $0x28] sm:$0xff]
          %v3118 = vld [vmem:[#allocation12 + $0x30] sm:$0xff]
          %v3119 = vld [vmem:[#allocation12 + $0x38] sm:$0xff]
          %v3120 = vld [vmem:[%s400] sm:$0x1]
          %v3121 = vld [vmem:[%s400 + $0x1] sm:$0x1]
          %v3124 = vlaneseq
          %v3125 = vshrl.u32 %v3124, 7
          %v3126 = vsub.s32 0, %v3125
          %v3127 = vrot.slane %v3120, %v3126
          %v3128 = vlaneseq
          %v3129 = vshrl.u32 %v3128, 7
          %v3130 = vsub.s32 0, %v3129
          %v3131 = vrot.slane %v3121, %v3130
          %v3134 = vcombine.low %v3108, %v3110
          %v3136 = vunpack.c.l.s4 1983009808
          %v3137 = vunpack.c.0.s8 %v3136
          %v3138 = vlaneseq
          %v3139 = vshrl.u32 %v3138, 7
          %v3140 = vsub.s32 %v3137, %v3139
          %v3141 = vrot.slane %v3134, %v3140
          %v3142 = vcombine.low %v3109, %v3111
          %v3144 = vunpack.c.l.s4 1983009808
          %v3145 = vunpack.c.0.s8 %v3144
          %v3146 = vlaneseq
          %v3147 = vshrl.u32 %v3146, 7
          %v3148 = vsub.s32 %v3145, %v3147
          %v3149 = vrot.slane %v3142, %v3148
          %v3150 = vld [vmem:[#allocation4 + $0x8] sm:$0x3]
          %v3151 = vld [vmem:[#allocation4 + $0xa] sm:$0x3]
          %v3152 = vcombine.low %v3141, %v3149
          %v3154 = vunpack.c.l.s4 1934713408
          %v3155 = vunpack.c.0.s8 %v3154
          %v3156 = vlaneseq
          %v3157 = vshrl.u32 %v3156, 7
          %v3158 = vsub.s32 %v3155, %v3157
          %v3159 = vrot.slane %v3152, %v3158
          %v3160 = vcombine.low %v3150, %v3151
          %v3162 = vunpack.c.l.s4 1934713408
          %v3163 = vunpack.c.0.s8 %v3162
          %v3164 = vlaneseq
          %v3165 = vshrl.u32 %v3164, 7
          %v3166 = vsub.s32 %v3163, %v3165
          %v3167 = vrot.slane %v3160, %v3166
          %v3168 = vcombine.low %v3159, %v3167
          %v3169 = vcombine.high %v3159, %v3167
          %v3171 = vsel %vm458, %v3168, 0
          %3173 = vmatprep.subr.mxu0 0.0
          %3174 = vmatpush1.msra.mxu0 0.0
          %3175 = vmatprep.subr.mxu0 0.0
          %3176 = vmatpush1.msra.mxu0 0.0
          %3177 = vmatprep.subr.mxu0 0.0
          %3178 = vmatpush1.msra.mxu0 0.0
          %3179 = vmatprep.subr.mxu0 0.0
          %3180 = vmatpush1.msra.mxu0 0.0
          %3181 = vmatprep.subr.mxu0 0.0
          %3182 = vmatpush1.msra.mxu0 0.0
          %3183 = vmatprep.subr.mxu0 0.0
          %3184 = vmatpush1.msra.mxu0 0.0
          %3185 = vmatprep.subr.mxu0 0.0
          %3186 = vmatpush1.msra.mxu0 0.0
          %3187 = vmatprep.subr.mxu0 0.0
          %3188 = vmatpush1.msra.mxu0 0.0
          %3189 = vmatprep.subr.mxu0 0.0
          %3190 = vmatpush1.msra.mxu0 0.0
          %3191 = vmatprep.subr.mxu0 0.0
          %3192 = vmatpush1.msra.mxu0 0.0
          %3193 = vmatprep.subr.mxu0 0.0
          %3194 = vmatpush1.msra.mxu0 0.0
          %3195 = vmatprep.subr.mxu0 0.0
          %3196 = vmatpush1.msra.mxu0 0.0
          %3197 = vmatprep.subr.mxu0 0.0
          %3198 = vmatpush1.msra.mxu0 %v3115
          %3199 = vmatprep.subr.mxu0 0.0
          %3200 = vmatpush1.msra.mxu0 %v3114
          %3201 = vmatprep.subr.mxu0 0.0
          %3202 = vmatpush1.msra.mxu0 %v3113
          %3203 = vmatprep.subr.mxu0 0.0
          %3204 = vmatpush1.msra.mxu0 %v3112
          %3205 = vmatprep.subr.mxu0 0.0
          %3206 = vmatpush2.msra.mxu0 0.0
          %3207 = vmatprep.subr.mxu0 0.0
          %3208 = vmatpush2.msra.mxu0 0.0
          %3209 = vmatprep.subr.mxu0 0.0
          %3210 = vmatpush2.msra.mxu0 0.0
          %3211 = vmatprep.subr.mxu0 0.0
          %3212 = vmatpush2.msra.mxu0 0.0
          %3213 = vmatprep.subr.mxu0 0.0
          %3214 = vmatpush2.msra.mxu0 0.0
          %3215 = vmatprep.subr.mxu0 0.0
          %3216 = vmatpush2.msra.mxu0 0.0
          %3217 = vmatprep.subr.mxu0 0.0
          %3218 = vmatpush2.msra.mxu0 0.0
          %3219 = vmatprep.subr.mxu0 0.0
          %3220 = vmatpush2.msra.mxu0 0.0
          %3221 = vmatprep.subr.mxu0 0.0
          %3222 = vmatpush2.msra.mxu0 0.0
          %3223 = vmatprep.subr.mxu0 0.0
          %3224 = vmatpush2.msra.mxu0 0.0
          %3225 = vmatprep.subr.mxu0 0.0
          %3226 = vmatpush2.msra.mxu0 0.0
          %3227 = vmatprep.subr.mxu0 0.0
          %3228 = vmatpush2.msra.mxu0 0.0
          %3229 = vmatprep.subr.mxu0 0.0
          %3230 = vmatpush2.msra.mxu0 0.0
          %3231 = vmatprep.subr.mxu0 0.0
          %3232 = vmatpush2.msra.mxu0 0.0
          %3233 = vmatprep.subr.mxu0 0.0
          %3234 = vmatpush2.msra.mxu0 0.0
          %3235 = vmatprep.subr.mxu0 0.0
          %3236 = vmatpush2.msra.mxu0 0.0
          %3237 = vmatprep.mubr.f32.mxu0 0.0
          %3238 = vmatmul.mubr.f32.gmra.mxu0 %v3171
          %v3239 = vpop.f32.mrf.mxu0
          %v3240 = vadd.f32 %v3127, %v3239
          %v3241 = vpop.f32.mrf.mxu0
          %3242 = vdwg.mxu0
          %v3244 = vsel %vm458, %v3169, 0
          %3246 = vmatprep.subr.mxu0 0.0
          %3247 = vmatpush1.msra.mxu0 0.0
          %3248 = vmatprep.subr.mxu0 0.0
          %3249 = vmatpush1.msra.mxu0 0.0
          %3250 = vmatprep.subr.mxu0 0.0
          %3251 = vmatpush1.msra.mxu0 0.0
          %3252 = vmatprep.subr.mxu0 0.0
          %3253 = vmatpush1.msra.mxu0 0.0
          %3254 = vmatprep.subr.mxu0 0.0
          %3255 = vmatpush1.msra.mxu0 0.0
          %3256 = vmatprep.subr.mxu0 0.0
          %3257 = vmatpush1.msra.mxu0 0.0
          %3258 = vmatprep.subr.mxu0 0.0
          %3259 = vmatpush1.msra.mxu0 0.0
          %3260 = vmatprep.subr.mxu0 0.0
          %3261 = vmatpush1.msra.mxu0 0.0
          %3262 = vmatprep.subr.mxu0 0.0
          %3263 = vmatpush1.msra.mxu0 0.0
          %3264 = vmatprep.subr.mxu0 0.0
          %3265 = vmatpush1.msra.mxu0 0.0
          %3266 = vmatprep.subr.mxu0 0.0
          %3267 = vmatpush1.msra.mxu0 0.0
          %3268 = vmatprep.subr.mxu0 0.0
          %3269 = vmatpush1.msra.mxu0 0.0
          %3270 = vmatprep.subr.mxu0 0.0
          %3271 = vmatpush1.msra.mxu0 %v3119
          %3272 = vmatprep.subr.mxu0 0.0
          %3273 = vmatpush1.msra.mxu0 %v3118
          %3274 = vmatprep.subr.mxu0 0.0
          %3275 = vmatpush1.msra.mxu0 %v3117
          %3276 = vmatprep.subr.mxu0 0.0
          %3277 = vmatpush1.msra.mxu0 %v3116
          %3278 = vmatprep.subr.mxu0 0.0
          %3279 = vmatpush2.msra.mxu0 0.0
          %3280 = vmatprep.subr.mxu0 0.0
          %3281 = vmatpush2.msra.mxu0 0.0
          %3282 = vmatprep.subr.mxu0 0.0
          %3283 = vmatpush2.msra.mxu0 0.0
          %3284 = vmatprep.subr.mxu0 0.0
          %3285 = vmatpush2.msra.mxu0 0.0
          %3286 = vmatprep.subr.mxu0 0.0
          %3287 = vmatpush2.msra.mxu0 0.0
          %3288 = vmatprep.subr.mxu0 0.0
          %3289 = vmatpush2.msra.mxu0 0.0
          %3290 = vmatprep.subr.mxu0 0.0
          %3291 = vmatpush2.msra.mxu0 0.0
          %3292 = vmatprep.subr.mxu0 0.0
          %3293 = vmatpush2.msra.mxu0 0.0
          %3294 = vmatprep.subr.mxu0 0.0
          %3295 = vmatpush2.msra.mxu0 0.0
          %3296 = vmatprep.subr.mxu0 0.0
          %3297 = vmatpush2.msra.mxu0 0.0
          %3298 = vmatprep.subr.mxu0 0.0
          %3299 = vmatpush2.msra.mxu0 0.0
          %3300 = vmatprep.subr.mxu0 0.0
          %3301 = vmatpush2.msra.mxu0 0.0
          %3302 = vmatprep.subr.mxu0 0.0
          %3303 = vmatpush2.msra.mxu0 0.0
          %3304 = vmatprep.subr.mxu0 0.0
          %3305 = vmatpush2.msra.mxu0 0.0
          %3306 = vmatprep.subr.mxu0 0.0
          %3307 = vmatpush2.msra.mxu0 0.0
          %3308 = vmatprep.subr.mxu0 0.0
          %3309 = vmatpush2.msra.mxu0 0.0
          %3310 = vmatprep.mubr.f32.mxu0 0.0
          %3311 = vmatmul.mubr.f32.gmra.mxu0 %v3244
          %v3312 = vpop.f32.mrf.mxu0
          %v3313 = vadd.f32 %v3131, %v3312
          %v3314 = vpop.f32.mrf.mxu0
          %3315 = vdwg.mxu0
          %3316 = vst [vmem:[%s406] sm:$0x3f] %v3240
          %3317 = vst [vmem:[%s406 + $0x8] sm:$0x3f] %v3313
        $region88: #{tpu_custom_call.1} parent=43 // pred_fallthru
          _
        %s3318 = smul.u32 2, %s26
        %p3319 = scmp.lt.s32.totalorder %s3318, 1
        %s3320 = scalar_select %p3319, %s3318, 1
        %s3321 = smul.addr %s3320, 8
        %s3322 = scalar_lea.vmem %s6, %s3321
        // Predicated region
        $region89: #{tpu_custom_call.1} parent=43 // pred_check
          %p3323 = pneg %p210
        $region90: #{tpu_custom_call.1} parent=43 // pred_check_branch
          %3325 = sbr.rel (%p3323) target = $region92
        $region91: #{tpu_custom_call.1} parent=43 // pred_region
          %s3326 = smul.u32 2, %s26
        $region92: #{tpu_custom_call.1} parent=43 // pred_fallthru
          _
        // Predicated region
        $region93: #{tpu_custom_call.1} parent=43 // pred_check
          %p3327 = pneg %p210
        $region94: #{tpu_custom_call.1} parent=43 // pred_check_branch
          %3329 = sbr.rel (%p3327) target = $region96
        $region95: #{tpu_custom_call.1} parent=43 // pred_region
          %s3330 = smul.u32 2, %s26
          %p3331 = scmp.lt.s32.totalorder %s3330, 1
          %s3332 = scalar_select %p3331, %s3330, 1
          %s3333 = smul.addr %s3332, 8
          %s3334 = scalar_lea.vmem %s6, %s3333
        $region96: #{tpu_custom_call.1} parent=43 // pred_fallthru
          _
      $region44: #{tpu_custom_call.1} parent=5 // pred_fallthru
        _
      %p3335 = scmp.le.s32.totalorder 2, %s17
      // Predicated region
      $region97: #{tpu_custom_call.1} parent=5 // pred_check
        %p3336 = pneg %p3335
      $region98: #{tpu_custom_call.1} parent=5 // pred_check_branch
        %3338 = sbr.rel (%p3336) target = $region100
      $region99: #{tpu_custom_call.1} parent=5 // pred_region
        %s3339 = ssub.s32 %s17, 2
      $region100: #{tpu_custom_call.1} parent=5 // pred_fallthru
        _
    $region6: #{tpu_custom_call.1} parent=1 // loop_footer
      %s21 = sadd.s32 1, %s17
    $region7: #{tpu_custom_call.1} parent=1 // loop_footer_branch
      %16 = sbr.rel target = $region3
    $region8: #{tpu_custom_call.1} parent=1 // loop_exit
      _
    %3340 = vsyncpa [#allocation6], 1
    %s3341 = scalar_lea.sflag [#allocation6], 1
    %3342 = vsyncpa %s3341, 1
    %3343 = vsyncpa [#allocation8], 1
    %3344 = vsyncpa [#allocation11], 1

</llo_original>
